<compile_context>
chip_gen: v7x
topology: tpu7x:2x2x1
jax: 0.10.0
libtpu: 0.0.40
codegen_flags: <defaults>
</compile_context>

<pallas_src>
import math

import jax
import jax.numpy as jnp
from jax import lax
from jax.experimental import pallas as pl
from jax.experimental.pallas import tpu as pltpu  # noqa: F401  (kept for TPU-specific tuning hooks)

# ----------------------------- small config ---------------------------------
B = 2              # batch
IN_CHANS = 4       # input channels
IMG = 16           # img_size (square)
PATCH = 8          # patch_size
STRIDE = 8         # stride_size (== patch -> non-overlapping)
EMBED = 32         # embed_dim
DEPTH = 2          # number of transformer blocks
HEADS = 4          # num_heads
MLP_RATIO = 4.0
LN_EPS = 1e-5      # torch.nn.LayerNorm default eps

NUM_X = (IMG - PATCH) // STRIDE + 1
NUM_Y = (IMG - PATCH) // STRIDE + 1
NUM_PATCHES = NUM_X * NUM_Y
N = NUM_PATCHES + 1                  # +1 for cls token (= 5)
N_PAD = ((N + 7) // 8) * 8           # pad sequence to a full sublane tile (= 8)
HIDDEN = int(EMBED * MLP_RATIO)
HEAD_DIM = EMBED // HEADS
SCALE = HEAD_DIM ** -0.5
PATCH_FEAT = IN_CHANS * PATCH * PATCH
BN_PAD = B * N_PAD


# ------------------------------- kernel --------------------------------------
def _layernorm(x, gamma, beta):
    mu = jnp.mean(x, axis=-1, keepdims=True)
    var = jnp.mean((x - mu) ** 2, axis=-1, keepdims=True)
    return (x - mu) * lax.rsqrt(var + LN_EPS) * gamma + beta


def fused_vit_kernel(patches_ref, w_patch_ref, base_ref,
                     ln1g_ref, ln1b_ref, wqkv_ref, wproj_ref, bproj_ref,
                     ln2g_ref, ln2b_ref, w1_ref, b1_ref, w2_ref, b2_ref,
                     norm_g_ref, norm_b_ref,
                     o_ref):
    # ---- patch projection + token assembly: one aligned matmul + add (no scatter) ----
    # base already contains: cls+pos[0] | pos[1:N]+conv_bias | zeros(pad)  per batch.
    x = jnp.dot(patches_ref[...], w_patch_ref[...],
                preferred_element_type=jnp.float32) + base_ref[...]      # (B*N_PAD, D) f32

    # key mask for padded rows (same for every block) — built once from a 2-D iota.
    key_mask = jnp.where(
        lax.broadcasted_iota(jnp.int32, (1, N_PAD), 1) < N,
        jnp.float32(0.0), jnp.float32(-1e30))                            # (1, N_PAD)

    inv_sqrt2 = 1.0 / math.sqrt(2.0)

    # ---- transformer blocks (DEPTH tiny -> unrolled; weights VMEM-resident) ----
    for d in range(DEPTH):
        # ----- attention branch -----
        xn = _layernorm(x, ln1g_ref[d], ln1b_ref[d])
        qkv = jnp.dot(xn.astype(jnp.bfloat16), wqkv_ref[d],
                      preferred_element_type=jnp.float32)                # (B*N_PAD, 3D)

        wproj_d = wproj_ref[d]                                           # (D, D) bf16
        attn = jnp.zeros((BN_PAD, EMBED), jnp.float32)
        for h in range(HEADS):                                           # value-level, no ref stores
            c0 = h * HEAD_DIM
            qh = qkv[:, c0:c0 + HEAD_DIM].reshape(B, N_PAD, HEAD_DIM)
            kh = qkv[:, EMBED + c0:EMBED + c0 + HEAD_DIM].reshape(B, N_PAD, HEAD_DIM)
            vh = qkv[:, 2 * EMBED + c0:2 * EMBED + c0 + HEAD_DIM].reshape(B, N_PAD, HEAD_DIM)

            # batched (over B) score / context matmuls; scale pre-folded into Wq.
            s = jnp.einsum('bqd,bkd->bqk',
                           qh.astype(jnp.bfloat16), kh.astype(jnp.bfloat16),
                           preferred_element_type=jnp.float32)           # (B, N_PAD, N_PAD)
            s = s + key_mask                                             # mask padded keys
            s = s - jnp.max(s, axis=-1, keepdims=True)
            p = jnp.exp(s)
            p = p * pl.reciprocal(jnp.sum(p, axis=-1, keepdims=True), approx=True)
            ctx = jnp.einsum('bqk,bkd->bqd',
                             p.astype(jnp.bfloat16), vh.astype(jnp.bfloat16),
                             preferred_element_type=jnp.float32)         # (B, N_PAD, hd)

            # per-head projection accumulated directly (== concat(heads) @ Wproj)
            attn = attn + jnp.dot(ctx.reshape(BN_PAD, HEAD_DIM).astype(jnp.bfloat16),
                                  wproj_d[c0:c0 + HEAD_DIM, :],
                                  preferred_element_type=jnp.float32)

        x = x + attn + bproj_ref[d]          # drop_path(0) / dropout(0) == identity

        # ----- MLP branch -----
        xn = _layernorm(x, ln2g_ref[d], ln2b_ref[d])
        h1 = jnp.dot(xn.astype(jnp.bfloat16), w1_ref[d],
                     preferred_element_type=jnp.float32) + b1_ref[d]
        h1 = 0.5 * h1 * (1.0 + lax.erf(h1 * inv_sqrt2))                  # exact GELU (f32)
        h2 = jnp.dot(h1.astype(jnp.bfloat16), w2_ref[d],
                     preferred_element_type=jnp.float32) + b2_ref[d]
        x = x + h2

    # ---- final LayerNorm, single aligned full-ref store ----
    o_ref[...] = _layernorm(x, norm_g_ref[...], norm_b_ref[...])


# ------------------------------ wrapper ---------------------------------------
def extract_patches(x):
    # stride == patch -> im2col is a pure reshape/transpose.
    # Flatten order per patch is (c, kh, kw), matching Conv2d weight flattening.
    bsz = x.shape[0]
    x = x.reshape(bsz, IN_CHANS, NUM_Y, PATCH, NUM_X, PATCH)
    x = x.transpose(0, 2, 4, 1, 3, 5)                     # (B, NY, NX, C, ph, pw)
    return x.reshape(bsz, NUM_PATCHES, PATCH_FEAT)


def transreid_forward(x, params):
    f32, bf16 = jnp.float32, jnp.bfloat16

    # ---- padded patch matrix: row 0 (cls) and rows N..N_PAD-1 are zeros per batch ----
    p3 = extract_patches(x)                                           # (B, P, F)
    patches_padded = jnp.concatenate(
        [jnp.zeros((B, 1, PATCH_FEAT), f32), p3,
         jnp.zeros((B, N_PAD - N, PATCH_FEAT), f32)], axis=1
    ).reshape(B * N_PAD, PATCH_FEAT).astype(bf16)

    # ---- "base" slab: cls+pos[0] | pos[1:N]+conv_bias | zeros(pad), tiled over batch ----
    pos = params["pos_embed"].reshape(N, EMBED)
    cls = params["cls_token"].reshape(1, EMBED)
    base_b = jnp.concatenate(
        [cls + pos[0:1],
         pos[1:N] + params["b_patch"].reshape(1, EMBED),
         jnp.zeros((N_PAD - N, EMBED), f32)], axis=0)                 # (N_PAD, D)
    base = jnp.tile(base_b, (B, 1))                                   # (B*N_PAD, D)

    blocks = params["blocks"]

    def st(name):
        return jnp.stack([blk[name] for blk in blocks], axis=0)

    # Fold attention scale into the Q columns of w_qkv (trace-time -> free in-kernel).
    scale_vec = jnp.concatenate([jnp.full((EMBED,), SCALE, f32),
                                 jnp.ones((2 * EMBED,), f32)])
    w_qkv = (st("w_qkv") * scale_vec[None, None, :]).astype(bf16)

    args = (
        patches_padded, params["w_patch"].astype(bf16), base,
        st("ln1_g"), st("ln1_b"), w_qkv,
        st("w_proj").astype(bf16), st("b_proj"),
        st("ln2_g"), st("ln2_b"),
        st("w_fc1").astype(bf16), st("b_fc1"),
        st("w_fc2").astype(bf16), st("b_fc2"),
        params["norm_g"], params["norm_b"],
    )

    # Advisory cost estimate (kernel is launch/DMA-overhead dominated at these dims).
    flops = 2 * BN_PAD * PATCH_FEAT * EMBED
    flops += DEPTH * 2 * BN_PAD * (3 * EMBED * EMBED + EMBED * EMBED + 2 * EMBED * HIDDEN)
    flops += DEPTH * 2 * B * HEADS * (2 * N_PAD * N_PAD * HEAD_DIM)
    transcendentals = DEPTH * (B * HEADS * N_PAD * N_PAD + BN_PAD * HIDDEN) \
        + (2 * DEPTH + 1) * BN_PAD
    bytes_accessed = sum(int(a.size) * a.dtype.itemsize for a in args) \
        + BN_PAD * EMBED * 4
    cost = pl.CostEstimate(flops=int(flops),
                           transcendentals=int(transcendentals),
                           bytes_accessed=int(bytes_accessed))

    out = pl.pallas_call(
        fused_vit_kernel,
        out_shape=jax.ShapeDtypeStruct((BN_PAD, EMBED), jnp.float32),
        cost_estimate=cost,
    )(*args)

    # drop the padded rows in plain JAX (layout plumbing, not compute)
    return out.reshape(B, N_PAD, EMBED)[:, :N, :]


# ------------------------------ parameters -----------------------------------
def init_params(key):
    # TODO(synk): trunc_normal_ truncation to [-2std, 2std] is approximated with a plain
    # normal (std=0.02); this only affects the synthetic init distribution, not semantics.
    keys = iter(jax.random.split(key, 8 + 12 * DEPTH))

    def nrm(shape, std=0.02):
        return std * jax.random.normal(next(keys), shape, dtype=jnp.float32)

    params = {}
    conv_std = math.sqrt(2.0 / (PATCH * PATCH * EMBED))
    params["w_patch"] = nrm((PATCH_FEAT, EMBED), conv_std)     # conv weight flattened (C*ph*pw, D)
    params["b_patch"] = jnp.zeros((1, EMBED), jnp.float32)
    params["cls_token"] = nrm((1, 1, EMBED))
    params["pos_embed"] = nrm((1, N, EMBED))

    blocks = []
    for _ in range(DEPTH):
        blocks.append({
            "ln1_g": jnp.ones((1, EMBED), jnp.float32),
            "ln1_b": jnp.zeros((1, EMBED), jnp.float32),
            "w_qkv": nrm((EMBED, 3 * EMBED)),                  # qkv_bias=False (TransReID default)
            "w_proj": nrm((EMBED, EMBED)),
            "b_proj": jnp.zeros((1, EMBED), jnp.float32),
            "ln2_g": jnp.ones((1, EMBED), jnp.float32),
            "ln2_b": jnp.zeros((1, EMBED), jnp.float32),
            "w_fc1": nrm((EMBED, HIDDEN)),
            "b_fc1": jnp.zeros((1, HIDDEN), jnp.float32),
            "w_fc2": nrm((HIDDEN, EMBED)),
            "b_fc2": jnp.zeros((1, EMBED), jnp.float32),
        })
    params["blocks"] = blocks
    params["norm_g"] = jnp.ones((1, EMBED), jnp.float32)
    params["norm_b"] = jnp.zeros((1, EMBED), jnp.float32)
    return params


# --------------------------------- main ---------------------------------------
if __name__ == "__main__":
    key = jax.random.PRNGKey(0)
    k_param, k_x = jax.random.split(key)
    params = init_params(k_param)
    x = jax.random.normal(k_x, (B, IN_CHANS, IMG, IMG), dtype=jnp.float32)  # NCHW like PyTorch

    out = jax.jit(transreid_forward)(x, params)
    out = jax.block_until_ready(out)

    assert out.shape == (B, N, EMBED), out.shape
    assert out.dtype == jnp.float32
    assert bool(jnp.all(jnp.isfinite(out)))
    print("KERNEL_OK")
</pallas_src>

<mosaic_0001>
module attributes {stable_mosaic.version = 11 : i64} {
  func.func @fused_vit_kernel(%arg0: memref<16x256xbf16, #tpu.memory_space<vmem>>, %arg1: memref<256x32xbf16, #tpu.memory_space<vmem>>, %arg2: memref<16x32xf32, #tpu.memory_space<vmem>>, %arg3: memref<2x1x32xf32, #tpu.memory_space<vmem>>, %arg4: memref<2x1x32xf32, #tpu.memory_space<vmem>>, %arg5: memref<2x32x96xbf16, #tpu.memory_space<vmem>>, %arg6: memref<2x32x32xbf16, #tpu.memory_space<vmem>>, %arg7: memref<2x1x32xf32, #tpu.memory_space<vmem>>, %arg8: memref<2x1x32xf32, #tpu.memory_space<vmem>>, %arg9: memref<2x1x32xf32, #tpu.memory_space<vmem>>, %arg10: memref<2x32x128xbf16, #tpu.memory_space<vmem>>, %arg11: memref<2x1x128xf32, #tpu.memory_space<vmem>>, %arg12: memref<2x128x32xbf16, #tpu.memory_space<vmem>>, %arg13: memref<2x1x32xf32, #tpu.memory_space<vmem>>, %arg14: memref<1x32xf32, #tpu.memory_space<vmem>>, %arg15: memref<1x32xf32, #tpu.memory_space<vmem>>, %arg16: memref<16x32xf32, #tpu.memory_space<vmem>>) attributes {dimension_semantics = [], scalar_prefetch = 0 : i64, scratch_operands = 0 : i64, tpu.core_type = #tpu.core_type<tc>} {
    %c0 = arith.constant 0 : index
    %c0_0 = arith.constant 0 : index
    %0 = vector.load %arg0[%c0, %c0_0] : memref<16x256xbf16, #tpu.memory_space<vmem>>, vector<16x256xbf16>
    %c0_1 = arith.constant 0 : index
    %c0_2 = arith.constant 0 : index
    %1 = vector.load %arg1[%c0_1, %c0_2] : memref<256x32xbf16, #tpu.memory_space<vmem>>, vector<256x32xbf16>
    %cst = arith.constant dense<0.000000e+00> : vector<16x32xf32>
    %2 = tpu.matmul %0, %1, %cst {dimension_numbers = #tpu.dot_dimension_numbers<[1], [0], [0], [1], [0, 0, 1, 1], [], []>} : vector<16x256xbf16>, vector<256x32xbf16>, vector<16x32xf32> -> vector<16x32xf32>
    %c0_3 = arith.constant 0 : index
    %c0_4 = arith.constant 0 : index
    %3 = vector.load %arg2[%c0_3, %c0_4] : memref<16x32xf32, #tpu.memory_space<vmem>>, vector<16x32xf32>
    %4 = arith.addf %2, %3 : vector<16x32xf32>
    %5 = tpu.iota {dimensions = array<i32: 1>} : vector<1x8xi32>
    %c5_i32 = arith.constant 5 : i32
    %6 = vector.broadcast %c5_i32 : i32 to vector<1x8xi32>
    %7 = arith.cmpi slt, %5, %6 : vector<1x8xi32>
    %cst_5 = arith.constant 0.000000e+00 : f32
    %cst_6 = arith.constant -1.000000e+30 : f32
    %8 = vector.broadcast %cst_5 : f32 to vector<1x8xf32>
    %9 = vector.broadcast %cst_6 : f32 to vector<1x8xf32>
    %10 = arith.select %7, %8, %9 : vector<1x8xi1>, vector<1x8xf32>
    %c0_7 = arith.constant 0 : index
    %c0_8 = arith.constant 0 : index
    %c0_9 = arith.constant 0 : index
    %11 = vector.load %arg3[%c0_7, %c0_8, %c0_9] : memref<2x1x32xf32, #tpu.memory_space<vmem>>, vector<1x1x32xf32>
    %12 = vector.shape_cast %11 : vector<1x1x32xf32> to vector<1x32xf32>
    %c0_10 = arith.constant 0 : index
    %c0_11 = arith.constant 0 : index
    %c0_12 = arith.constant 0 : index
    %13 = vector.load %arg4[%c0_10, %c0_11, %c0_12] : memref<2x1x32xf32, #tpu.memory_space<vmem>>, vector<1x1x32xf32>
    %14 = vector.shape_cast %13 : vector<1x1x32xf32> to vector<1x32xf32>
    %cst_13 = arith.constant dense<0.000000e+00> : vector<16xf32>
    %15 = vector.multi_reduction <add>, %4, %cst_13 [1] : vector<16x32xf32> to vector<16xf32>
    %16 = vector.shape_cast %15 : vector<16xf32> to vector<16x1xf32>
    %cst_14 = arith.constant 3.200000e+01 : f32
    %17 = vector.broadcast %cst_14 : f32 to vector<16x1xf32>
    %18 = arith.divf %16, %17 : vector<16x1xf32>
    %19 = vector.broadcast %18 : vector<16x1xf32> to vector<16x32xf32>
    %20 = arith.subf %4, %19 : vector<16x32xf32>
    %21 = arith.mulf %20, %20 : vector<16x32xf32>
    %cst_15 = arith.constant dense<0.000000e+00> : vector<16xf32>
    %22 = vector.multi_reduction <add>, %21, %cst_15 [1] : vector<16x32xf32> to vector<16xf32>
    %23 = vector.shape_cast %22 : vector<16xf32> to vector<16x1xf32>
    %cst_16 = arith.constant 3.200000e+01 : f32
    %24 = vector.broadcast %cst_16 : f32 to vector<16x1xf32>
    %25 = arith.divf %23, %24 : vector<16x1xf32>
    %26 = vector.broadcast %18 : vector<16x1xf32> to vector<16x32xf32>
    %27 = arith.subf %4, %26 : vector<16x32xf32>
    %cst_17 = arith.constant 9.99999974E-6 : f32
    %28 = vector.broadcast %cst_17 : f32 to vector<16x1xf32>
    %29 = arith.addf %25, %28 : vector<16x1xf32>
    %30 = math.rsqrt %29 : vector<16x1xf32>
    %31 = vector.broadcast %30 : vector<16x1xf32> to vector<16x32xf32>
    %32 = arith.mulf %27, %31 : vector<16x32xf32>
    %33 = vector.broadcast %12 : vector<1x32xf32> to vector<16x32xf32>
    %34 = arith.mulf %32, %33 : vector<16x32xf32>
    %35 = vector.broadcast %14 : vector<1x32xf32> to vector<16x32xf32>
    %36 = arith.addf %34, %35 : vector<16x32xf32>
    %37 = arith.truncf %36 : vector<16x32xf32> to vector<16x32xbf16>
    %c0_18 = arith.constant 0 : index
    %c0_19 = arith.constant 0 : index
    %c0_20 = arith.constant 0 : index
    %38 = vector.load %arg5[%c0_18, %c0_19, %c0_20] : memref<2x32x96xbf16, #tpu.memory_space<vmem>>, vector<1x32x96xbf16>
    %39 = vector.shape_cast %38 : vector<1x32x96xbf16> to vector<32x96xbf16>
    %cst_21 = arith.constant dense<0.000000e+00> : vector<16x96xf32>
    %40 = tpu.matmul %37, %39, %cst_21 {dimension_numbers = #tpu.dot_dimension_numbers<[1], [0], [0], [1], [0, 0, 1, 1], [], []>} : vector<16x32xbf16>, vector<32x96xbf16>, vector<16x96xf32> -> vector<16x96xf32>
    %c0_22 = arith.constant 0 : index
    %c0_23 = arith.constant 0 : index
    %c0_24 = arith.constant 0 : index
    %41 = vector.load %arg6[%c0_22, %c0_23, %c0_24] : memref<2x32x32xbf16, #tpu.memory_space<vmem>>, vector<1x32x32xbf16>
    %42 = vector.shape_cast %41 : vector<1x32x32xbf16> to vector<32x32xbf16>
    %cst_25 = arith.constant 0.000000e+00 : f32
    %43 = vector.broadcast %cst_25 : f32 to vector<16x32xf32>
    %44 = vector.extract_strided_slice %40 {offsets = [0, 0], sizes = [16, 8], strides = [1, 1]} : vector<16x96xf32> to vector<16x8xf32>
    %45 = vector.shape_cast %44 : vector<16x8xf32> to vector<2x8x8xf32>
    %46 = vector.extract_strided_slice %40 {offsets = [0, 32], sizes = [16, 8], strides = [1, 1]} : vector<16x96xf32> to vector<16x8xf32>
    %47 = vector.shape_cast %46 : vector<16x8xf32> to vector<2x8x8xf32>
    %48 = vector.extract_strided_slice %40 {offsets = [0, 64], sizes = [16, 8], strides = [1, 1]} : vector<16x96xf32> to vector<16x8xf32>
    %49 = vector.shape_cast %48 : vector<16x8xf32> to vector<2x8x8xf32>
    %50 = arith.truncf %45 : vector<2x8x8xf32> to vector<2x8x8xbf16>
    %51 = arith.truncf %47 : vector<2x8x8xf32> to vector<2x8x8xbf16>
    "tpu.trace_start"() <{level = 10 : i32, message = "bqd,bkd->bqk"}> : () -> ()
    %cst_26 = arith.constant dense<0.000000e+00> : vector<2x8x8xf32>
    %52 = tpu.matmul %50, %51, %cst_26 {dimension_numbers = #tpu.dot_dimension_numbers<[2], [2], [1], [1], [0, 0, 0, 1, 1, 1], [0], [0]>} : vector<2x8x8xbf16>, vector<2x8x8xbf16>, vector<2x8x8xf32> -> vector<2x8x8xf32>
    "tpu.trace_stop"() : () -> ()
    %53 = vector.shape_cast %10 : vector<1x8xf32> to vector<1x1x8xf32>
    %54 = vector.broadcast %53 : vector<1x1x8xf32> to vector<2x8x8xf32>
    %55 = arith.addf %52, %54 : vector<2x8x8xf32>
    %cst_27 = arith.constant dense<0xFF800000> : vector<2x8xf32>
    %56 = vector.multi_reduction <maximumf>, %55, %cst_27 [2] : vector<2x8x8xf32> to vector<2x8xf32>
    %57 = vector.shape_cast %56 : vector<2x8xf32> to vector<2x8x1xf32>
    %58 = vector.broadcast %57 : vector<2x8x1xf32> to vector<2x8x8xf32>
    %59 = arith.subf %55, %58 : vector<2x8x8xf32>
    %60 = math.exp %59 : vector<2x8x8xf32>
    %cst_28 = arith.constant dense<0.000000e+00> : vector<2x8xf32>
    %61 = vector.multi_reduction <add>, %60, %cst_28 [2] : vector<2x8x8xf32> to vector<2x8xf32>
    %62 = vector.shape_cast %61 : vector<2x8xf32> to vector<2x8x1xf32>
    %63 = tpu.reciprocal %62 {approx = true} : vector<2x8x1xf32> -> vector<2x8x1xf32>
    %64 = vector.broadcast %63 : vector<2x8x1xf32> to vector<2x8x8xf32>
    %65 = arith.mulf %60, %64 : vector<2x8x8xf32>
    %66 = arith.truncf %65 : vector<2x8x8xf32> to vector<2x8x8xbf16>
    %67 = arith.truncf %49 : vector<2x8x8xf32> to vector<2x8x8xbf16>
    "tpu.trace_start"() <{level = 10 : i32, message = "bqk,bkd->bqd"}> : () -> ()
    %cst_29 = arith.constant dense<0.000000e+00> : vector<2x8x8xf32>
    %68 = tpu.matmul %66, %67, %cst_29 {dimension_numbers = #tpu.dot_dimension_numbers<[2], [1], [1], [2], [0, 0, 0, 1, 1, 2], [0], [0]>} : vector<2x8x8xbf16>, vector<2x8x8xbf16>, vector<2x8x8xf32> -> vector<2x8x8xf32>
    "tpu.trace_stop"() : () -> ()
    %69 = vector.shape_cast %68 : vector<2x8x8xf32> to vector<16x8xf32>
    %70 = arith.truncf %69 : vector<16x8xf32> to vector<16x8xbf16>
    %71 = vector.extract_strided_slice %42 {offsets = [0, 0], sizes = [8, 32], strides = [1, 1]} : vector<32x32xbf16> to vector<8x32xbf16>
    %cst_30 = arith.constant dense<0.000000e+00> : vector<16x32xf32>
    %72 = tpu.matmul %70, %71, %cst_30 {dimension_numbers = #tpu.dot_dimension_numbers<[1], [0], [0], [1], [0, 0, 1, 1], [], []>} : vector<16x8xbf16>, vector<8x32xbf16>, vector<16x32xf32> -> vector<16x32xf32>
    %73 = arith.addf %43, %72 : vector<16x32xf32>
    %74 = vector.extract_strided_slice %40 {offsets = [0, 8], sizes = [16, 8], strides = [1, 1]} : vector<16x96xf32> to vector<16x8xf32>
    %75 = vector.shape_cast %74 : vector<16x8xf32> to vector<2x8x8xf32>
    %76 = vector.extract_strided_slice %40 {offsets = [0, 40], sizes = [16, 8], strides = [1, 1]} : vector<16x96xf32> to vector<16x8xf32>
    %77 = vector.shape_cast %76 : vector<16x8xf32> to vector<2x8x8xf32>
    %78 = vector.extract_strided_slice %40 {offsets = [0, 72], sizes = [16, 8], strides = [1, 1]} : vector<16x96xf32> to vector<16x8xf32>
    %79 = vector.shape_cast %78 : vector<16x8xf32> to vector<2x8x8xf32>
    %80 = arith.truncf %75 : vector<2x8x8xf32> to vector<2x8x8xbf16>
    %81 = arith.truncf %77 : vector<2x8x8xf32> to vector<2x8x8xbf16>
    "tpu.trace_start"() <{level = 10 : i32, message = "bqd,bkd->bqk"}> : () -> ()
    %cst_31 = arith.constant dense<0.000000e+00> : vector<2x8x8xf32>
    %82 = tpu.matmul %80, %81, %cst_31 {dimension_numbers = #tpu.dot_dimension_numbers<[2], [2], [1], [1], [0, 0, 0, 1, 1, 1], [0], [0]>} : vector<2x8x8xbf16>, vector<2x8x8xbf16>, vector<2x8x8xf32> -> vector<2x8x8xf32>
    "tpu.trace_stop"() : () -> ()
    %83 = vector.shape_cast %10 : vector<1x8xf32> to vector<1x1x8xf32>
    %84 = vector.broadcast %83 : vector<1x1x8xf32> to vector<2x8x8xf32>
    %85 = arith.addf %82, %84 : vector<2x8x8xf32>
    %cst_32 = arith.constant dense<0xFF800000> : vector<2x8xf32>
    %86 = vector.multi_reduction <maximumf>, %85, %cst_32 [2] : vector<2x8x8xf32> to vector<2x8xf32>
    %87 = vector.shape_cast %86 : vector<2x8xf32> to vector<2x8x1xf32>
    %88 = vector.broadcast %87 : vector<2x8x1xf32> to vector<2x8x8xf32>
    %89 = arith.subf %85, %88 : vector<2x8x8xf32>
    %90 = math.exp %89 : vector<2x8x8xf32>
    %cst_33 = arith.constant dense<0.000000e+00> : vector<2x8xf32>
    %91 = vector.multi_reduction <add>, %90, %cst_33 [2] : vector<2x8x8xf32> to vector<2x8xf32>
    %92 = vector.shape_cast %91 : vector<2x8xf32> to vector<2x8x1xf32>
    %93 = tpu.reciprocal %92 {approx = true} : vector<2x8x1xf32> -> vector<2x8x1xf32>
    %94 = vector.broadcast %93 : vector<2x8x1xf32> to vector<2x8x8xf32>
    %95 = arith.mulf %90, %94 : vector<2x8x8xf32>
    %96 = arith.truncf %95 : vector<2x8x8xf32> to vector<2x8x8xbf16>
    %97 = arith.truncf %79 : vector<2x8x8xf32> to vector<2x8x8xbf16>
    "tpu.trace_start"() <{level = 10 : i32, message = "bqk,bkd->bqd"}> : () -> ()
    %cst_34 = arith.constant dense<0.000000e+00> : vector<2x8x8xf32>
    %98 = tpu.matmul %96, %97, %cst_34 {dimension_numbers = #tpu.dot_dimension_numbers<[2], [1], [1], [2], [0, 0, 0, 1, 1, 2], [0], [0]>} : vector<2x8x8xbf16>, vector<2x8x8xbf16>, vector<2x8x8xf32> -> vector<2x8x8xf32>
    "tpu.trace_stop"() : () -> ()
    %99 = vector.shape_cast %98 : vector<2x8x8xf32> to vector<16x8xf32>
    %100 = arith.truncf %99 : vector<16x8xf32> to vector<16x8xbf16>
    %101 = vector.extract_strided_slice %42 {offsets = [8, 0], sizes = [8, 32], strides = [1, 1]} : vector<32x32xbf16> to vector<8x32xbf16>
    %cst_35 = arith.constant dense<0.000000e+00> : vector<16x32xf32>
    %102 = tpu.matmul %100, %101, %cst_35 {dimension_numbers = #tpu.dot_dimension_numbers<[1], [0], [0], [1], [0, 0, 1, 1], [], []>} : vector<16x8xbf16>, vector<8x32xbf16>, vector<16x32xf32> -> vector<16x32xf32>
    %103 = arith.addf %73, %102 : vector<16x32xf32>
    %104 = vector.extract_strided_slice %40 {offsets = [0, 16], sizes = [16, 8], strides = [1, 1]} : vector<16x96xf32> to vector<16x8xf32>
    %105 = vector.shape_cast %104 : vector<16x8xf32> to vector<2x8x8xf32>
    %106 = vector.extract_strided_slice %40 {offsets = [0, 48], sizes = [16, 8], strides = [1, 1]} : vector<16x96xf32> to vector<16x8xf32>
    %107 = vector.shape_cast %106 : vector<16x8xf32> to vector<2x8x8xf32>
    %108 = vector.extract_strided_slice %40 {offsets = [0, 80], sizes = [16, 8], strides = [1, 1]} : vector<16x96xf32> to vector<16x8xf32>
    %109 = vector.shape_cast %108 : vector<16x8xf32> to vector<2x8x8xf32>
    %110 = arith.truncf %105 : vector<2x8x8xf32> to vector<2x8x8xbf16>
    %111 = arith.truncf %107 : vector<2x8x8xf32> to vector<2x8x8xbf16>
    "tpu.trace_start"() <{level = 10 : i32, message = "bqd,bkd->bqk"}> : () -> ()
    %cst_36 = arith.constant dense<0.000000e+00> : vector<2x8x8xf32>
    %112 = tpu.matmul %110, %111, %cst_36 {dimension_numbers = #tpu.dot_dimension_numbers<[2], [2], [1], [1], [0, 0, 0, 1, 1, 1], [0], [0]>} : vector<2x8x8xbf16>, vector<2x8x8xbf16>, vector<2x8x8xf32> -> vector<2x8x8xf32>
    "tpu.trace_stop"() : () -> ()
    %113 = vector.shape_cast %10 : vector<1x8xf32> to vector<1x1x8xf32>
    %114 = vector.broadcast %113 : vector<1x1x8xf32> to vector<2x8x8xf32>
    %115 = arith.addf %112, %114 : vector<2x8x8xf32>
    %cst_37 = arith.constant dense<0xFF800000> : vector<2x8xf32>
    %116 = vector.multi_reduction <maximumf>, %115, %cst_37 [2] : vector<2x8x8xf32> to vector<2x8xf32>
    %117 = vector.shape_cast %116 : vector<2x8xf32> to vector<2x8x1xf32>
    %118 = vector.broadcast %117 : vector<2x8x1xf32> to vector<2x8x8xf32>
    %119 = arith.subf %115, %118 : vector<2x8x8xf32>
    %120 = math.exp %119 : vector<2x8x8xf32>
    %cst_38 = arith.constant dense<0.000000e+00> : vector<2x8xf32>
    %121 = vector.multi_reduction <add>, %120, %cst_38 [2] : vector<2x8x8xf32> to vector<2x8xf32>
    %122 = vector.shape_cast %121 : vector<2x8xf32> to vector<2x8x1xf32>
    %123 = tpu.reciprocal %122 {approx = true} : vector<2x8x1xf32> -> vector<2x8x1xf32>
    %124 = vector.broadcast %123 : vector<2x8x1xf32> to vector<2x8x8xf32>
    %125 = arith.mulf %120, %124 : vector<2x8x8xf32>
    %126 = arith.truncf %125 : vector<2x8x8xf32> to vector<2x8x8xbf16>
    %127 = arith.truncf %109 : vector<2x8x8xf32> to vector<2x8x8xbf16>
    "tpu.trace_start"() <{level = 10 : i32, message = "bqk,bkd->bqd"}> : () -> ()
    %cst_39 = arith.constant dense<0.000000e+00> : vector<2x8x8xf32>
    %128 = tpu.matmul %126, %127, %cst_39 {dimension_numbers = #tpu.dot_dimension_numbers<[2], [1], [1], [2], [0, 0, 0, 1, 1, 2], [0], [0]>} : vector<2x8x8xbf16>, vector<2x8x8xbf16>, vector<2x8x8xf32> -> vector<2x8x8xf32>
    "tpu.trace_stop"() : () -> ()
    %129 = vector.shape_cast %128 : vector<2x8x8xf32> to vector<16x8xf32>
    %130 = arith.truncf %129 : vector<16x8xf32> to vector<16x8xbf16>
    %131 = vector.extract_strided_slice %42 {offsets = [16, 0], sizes = [8, 32], strides = [1, 1]} : vector<32x32xbf16> to vector<8x32xbf16>
    %cst_40 = arith.constant dense<0.000000e+00> : vector<16x32xf32>
    %132 = tpu.matmul %130, %131, %cst_40 {dimension_numbers = #tpu.dot_dimension_numbers<[1], [0], [0], [1], [0, 0, 1, 1], [], []>} : vector<16x8xbf16>, vector<8x32xbf16>, vector<16x32xf32> -> vector<16x32xf32>
    %133 = arith.addf %103, %132 : vector<16x32xf32>
    %134 = vector.extract_strided_slice %40 {offsets = [0, 24], sizes = [16, 8], strides = [1, 1]} : vector<16x96xf32> to vector<16x8xf32>
    %135 = vector.shape_cast %134 : vector<16x8xf32> to vector<2x8x8xf32>
    %136 = vector.extract_strided_slice %40 {offsets = [0, 56], sizes = [16, 8], strides = [1, 1]} : vector<16x96xf32> to vector<16x8xf32>
    %137 = vector.shape_cast %136 : vector<16x8xf32> to vector<2x8x8xf32>
    %138 = vector.extract_strided_slice %40 {offsets = [0, 88], sizes = [16, 8], strides = [1, 1]} : vector<16x96xf32> to vector<16x8xf32>
    %139 = vector.shape_cast %138 : vector<16x8xf32> to vector<2x8x8xf32>
    %140 = arith.truncf %135 : vector<2x8x8xf32> to vector<2x8x8xbf16>
    %141 = arith.truncf %137 : vector<2x8x8xf32> to vector<2x8x8xbf16>
    "tpu.trace_start"() <{level = 10 : i32, message = "bqd,bkd->bqk"}> : () -> ()
    %cst_41 = arith.constant dense<0.000000e+00> : vector<2x8x8xf32>
    %142 = tpu.matmul %140, %141, %cst_41 {dimension_numbers = #tpu.dot_dimension_numbers<[2], [2], [1], [1], [0, 0, 0, 1, 1, 1], [0], [0]>} : vector<2x8x8xbf16>, vector<2x8x8xbf16>, vector<2x8x8xf32> -> vector<2x8x8xf32>
    "tpu.trace_stop"() : () -> ()
    %143 = vector.shape_cast %10 : vector<1x8xf32> to vector<1x1x8xf32>
    %144 = vector.broadcast %143 : vector<1x1x8xf32> to vector<2x8x8xf32>
    %145 = arith.addf %142, %144 : vector<2x8x8xf32>
    %cst_42 = arith.constant dense<0xFF800000> : vector<2x8xf32>
    %146 = vector.multi_reduction <maximumf>, %145, %cst_42 [2] : vector<2x8x8xf32> to vector<2x8xf32>
    %147 = vector.shape_cast %146 : vector<2x8xf32> to vector<2x8x1xf32>
    %148 = vector.broadcast %147 : vector<2x8x1xf32> to vector<2x8x8xf32>
    %149 = arith.subf %145, %148 : vector<2x8x8xf32>
    %150 = math.exp %149 : vector<2x8x8xf32>
    %cst_43 = arith.constant dense<0.000000e+00> : vector<2x8xf32>
    %151 = vector.multi_reduction <add>, %150, %cst_43 [2] : vector<2x8x8xf32> to vector<2x8xf32>
    %152 = vector.shape_cast %151 : vector<2x8xf32> to vector<2x8x1xf32>
    %153 = tpu.reciprocal %152 {approx = true} : vector<2x8x1xf32> -> vector<2x8x1xf32>
    %154 = vector.broadcast %153 : vector<2x8x1xf32> to vector<2x8x8xf32>
    %155 = arith.mulf %150, %154 : vector<2x8x8xf32>
    %156 = arith.truncf %155 : vector<2x8x8xf32> to vector<2x8x8xbf16>
    %157 = arith.truncf %139 : vector<2x8x8xf32> to vector<2x8x8xbf16>
    "tpu.trace_start"() <{level = 10 : i32, message = "bqk,bkd->bqd"}> : () -> ()
    %cst_44 = arith.constant dense<0.000000e+00> : vector<2x8x8xf32>
    %158 = tpu.matmul %156, %157, %cst_44 {dimension_numbers = #tpu.dot_dimension_numbers<[2], [1], [1], [2], [0, 0, 0, 1, 1, 2], [0], [0]>} : vector<2x8x8xbf16>, vector<2x8x8xbf16>, vector<2x8x8xf32> -> vector<2x8x8xf32>
    "tpu.trace_stop"() : () -> ()
    %159 = vector.shape_cast %158 : vector<2x8x8xf32> to vector<16x8xf32>
    %160 = arith.truncf %159 : vector<16x8xf32> to vector<16x8xbf16>
    %161 = vector.extract_strided_slice %42 {offsets = [24, 0], sizes = [8, 32], strides = [1, 1]} : vector<32x32xbf16> to vector<8x32xbf16>
    %cst_45 = arith.constant dense<0.000000e+00> : vector<16x32xf32>
    %162 = tpu.matmul %160, %161, %cst_45 {dimension_numbers = #tpu.dot_dimension_numbers<[1], [0], [0], [1], [0, 0, 1, 1], [], []>} : vector<16x8xbf16>, vector<8x32xbf16>, vector<16x32xf32> -> vector<16x32xf32>
    %163 = arith.addf %133, %162 : vector<16x32xf32>
    %164 = arith.addf %4, %163 : vector<16x32xf32>
    %c0_46 = arith.constant 0 : index
    %c0_47 = arith.constant 0 : index
    %c0_48 = arith.constant 0 : index
    %165 = vector.load %arg7[%c0_46, %c0_47, %c0_48] : memref<2x1x32xf32, #tpu.memory_space<vmem>>, vector<1x1x32xf32>
    %166 = vector.shape_cast %165 : vector<1x1x32xf32> to vector<1x32xf32>
    %167 = vector.broadcast %166 : vector<1x32xf32> to vector<16x32xf32>
    %168 = arith.addf %164, %167 : vector<16x32xf32>
    %c0_49 = arith.constant 0 : index
    %c0_50 = arith.constant 0 : index
    %c0_51 = arith.constant 0 : index
    %169 = vector.load %arg8[%c0_49, %c0_50, %c0_51] : memref<2x1x32xf32, #tpu.memory_space<vmem>>, vector<1x1x32xf32>
    %170 = vector.shape_cast %169 : vector<1x1x32xf32> to vector<1x32xf32>
    %c0_52 = arith.constant 0 : index
    %c0_53 = arith.constant 0 : index
    %c0_54 = arith.constant 0 : index
    %171 = vector.load %arg9[%c0_52, %c0_53, %c0_54] : memref<2x1x32xf32, #tpu.memory_space<vmem>>, vector<1x1x32xf32>
    %172 = vector.shape_cast %171 : vector<1x1x32xf32> to vector<1x32xf32>
    %cst_55 = arith.constant dense<0.000000e+00> : vector<16xf32>
    %173 = vector.multi_reduction <add>, %168, %cst_55 [1] : vector<16x32xf32> to vector<16xf32>
    %174 = vector.shape_cast %173 : vector<16xf32> to vector<16x1xf32>
    %cst_56 = arith.constant 3.200000e+01 : f32
    %175 = vector.broadcast %cst_56 : f32 to vector<16x1xf32>
    %176 = arith.divf %174, %175 : vector<16x1xf32>
    %177 = vector.broadcast %176 : vector<16x1xf32> to vector<16x32xf32>
    %178 = arith.subf %168, %177 : vector<16x32xf32>
    %179 = arith.mulf %178, %178 : vector<16x32xf32>
    %cst_57 = arith.constant dense<0.000000e+00> : vector<16xf32>
    %180 = vector.multi_reduction <add>, %179, %cst_57 [1] : vector<16x32xf32> to vector<16xf32>
    %181 = vector.shape_cast %180 : vector<16xf32> to vector<16x1xf32>
    %cst_58 = arith.constant 3.200000e+01 : f32
    %182 = vector.broadcast %cst_58 : f32 to vector<16x1xf32>
    %183 = arith.divf %181, %182 : vector<16x1xf32>
    %184 = vector.broadcast %176 : vector<16x1xf32> to vector<16x32xf32>
    %185 = arith.subf %168, %184 : vector<16x32xf32>
    %cst_59 = arith.constant 9.99999974E-6 : f32
    %186 = vector.broadcast %cst_59 : f32 to vector<16x1xf32>
    %187 = arith.addf %183, %186 : vector<16x1xf32>
    %188 = math.rsqrt %187 : vector<16x1xf32>
    %189 = vector.broadcast %188 : vector<16x1xf32> to vector<16x32xf32>
    %190 = arith.mulf %185, %189 : vector<16x32xf32>
    %191 = vector.broadcast %170 : vector<1x32xf32> to vector<16x32xf32>
    %192 = arith.mulf %190, %191 : vector<16x32xf32>
    %193 = vector.broadcast %172 : vector<1x32xf32> to vector<16x32xf32>
    %194 = arith.addf %192, %193 : vector<16x32xf32>
    %195 = arith.truncf %194 : vector<16x32xf32> to vector<16x32xbf16>
    %c0_60 = arith.constant 0 : index
    %c0_61 = arith.constant 0 : index
    %c0_62 = arith.constant 0 : index
    %196 = vector.load %arg10[%c0_60, %c0_61, %c0_62] : memref<2x32x128xbf16, #tpu.memory_space<vmem>>, vector<1x32x128xbf16>
    %197 = vector.shape_cast %196 : vector<1x32x128xbf16> to vector<32x128xbf16>
    %cst_63 = arith.constant dense<0.000000e+00> : vector<16x128xf32>
    %198 = tpu.matmul %195, %197, %cst_63 {dimension_numbers = #tpu.dot_dimension_numbers<[1], [0], [0], [1], [0, 0, 1, 1], [], []>} : vector<16x32xbf16>, vector<32x128xbf16>, vector<16x128xf32> -> vector<16x128xf32>
    %c0_64 = arith.constant 0 : index
    %c0_65 = arith.constant 0 : index
    %c0_66 = arith.constant 0 : index
    %199 = vector.load %arg11[%c0_64, %c0_65, %c0_66] : memref<2x1x128xf32, #tpu.memory_space<vmem>>, vector<1x1x128xf32>
    %200 = vector.shape_cast %199 : vector<1x1x128xf32> to vector<1x128xf32>
    %201 = vector.broadcast %200 : vector<1x128xf32> to vector<16x128xf32>
    %202 = arith.addf %198, %201 : vector<16x128xf32>
    %cst_67 = arith.constant 5.000000e-01 : f32
    %203 = vector.broadcast %cst_67 : f32 to vector<16x128xf32>
    %204 = arith.mulf %203, %202 : vector<16x128xf32>
    %cst_68 = arith.constant 0.707106769 : f32
    %205 = vector.broadcast %cst_68 : f32 to vector<16x128xf32>
    %206 = arith.mulf %202, %205 : vector<16x128xf32>
    %207 = math.erf %206 : vector<16x128xf32>
    %cst_69 = arith.constant 1.000000e+00 : f32
    %208 = vector.broadcast %cst_69 : f32 to vector<16x128xf32>
    %209 = arith.addf %208, %207 : vector<16x128xf32>
    %210 = arith.mulf %204, %209 : vector<16x128xf32>
    %211 = arith.truncf %210 : vector<16x128xf32> to vector<16x128xbf16>
    %c0_70 = arith.constant 0 : index
    %c0_71 = arith.constant 0 : index
    %c0_72 = arith.constant 0 : index
    %212 = vector.load %arg12[%c0_70, %c0_71, %c0_72] : memref<2x128x32xbf16, #tpu.memory_space<vmem>>, vector<1x128x32xbf16>
    %213 = vector.shape_cast %212 : vector<1x128x32xbf16> to vector<128x32xbf16>
    %cst_73 = arith.constant dense<0.000000e+00> : vector<16x32xf32>
    %214 = tpu.matmul %211, %213, %cst_73 {dimension_numbers = #tpu.dot_dimension_numbers<[1], [0], [0], [1], [0, 0, 1, 1], [], []>} : vector<16x128xbf16>, vector<128x32xbf16>, vector<16x32xf32> -> vector<16x32xf32>
    %c0_74 = arith.constant 0 : index
    %c0_75 = arith.constant 0 : index
    %c0_76 = arith.constant 0 : index
    %215 = vector.load %arg13[%c0_74, %c0_75, %c0_76] : memref<2x1x32xf32, #tpu.memory_space<vmem>>, vector<1x1x32xf32>
    %216 = vector.shape_cast %215 : vector<1x1x32xf32> to vector<1x32xf32>
    %217 = vector.broadcast %216 : vector<1x32xf32> to vector<16x32xf32>
    %218 = arith.addf %214, %217 : vector<16x32xf32>
    %219 = arith.addf %168, %218 : vector<16x32xf32>
    %c1 = arith.constant 1 : index
    %c0_77 = arith.constant 0 : index
    %c0_78 = arith.constant 0 : index
    %220 = vector.load %arg3[%c1, %c0_77, %c0_78] : memref<2x1x32xf32, #tpu.memory_space<vmem>>, vector<1x1x32xf32>
    %221 = vector.shape_cast %220 : vector<1x1x32xf32> to vector<1x32xf32>
    %c1_79 = arith.constant 1 : index
    %c0_80 = arith.constant 0 : index
    %c0_81 = arith.constant 0 : index
    %222 = vector.load %arg4[%c1_79, %c0_80, %c0_81] : memref<2x1x32xf32, #tpu.memory_space<vmem>>, vector<1x1x32xf32>
    %223 = vector.shape_cast %222 : vector<1x1x32xf32> to vector<1x32xf32>
    %cst_82 = arith.constant dense<0.000000e+00> : vector<16xf32>
    %224 = vector.multi_reduction <add>, %219, %cst_82 [1] : vector<16x32xf32> to vector<16xf32>
    %225 = vector.shape_cast %224 : vector<16xf32> to vector<16x1xf32>
    %cst_83 = arith.constant 3.200000e+01 : f32
    %226 = vector.broadcast %cst_83 : f32 to vector<16x1xf32>
    %227 = arith.divf %225, %226 : vector<16x1xf32>
    %228 = vector.broadcast %227 : vector<16x1xf32> to vector<16x32xf32>
    %229 = arith.subf %219, %228 : vector<16x32xf32>
    %230 = arith.mulf %229, %229 : vector<16x32xf32>
    %cst_84 = arith.constant dense<0.000000e+00> : vector<16xf32>
    %231 = vector.multi_reduction <add>, %230, %cst_84 [1] : vector<16x32xf32> to vector<16xf32>
    %232 = vector.shape_cast %231 : vector<16xf32> to vector<16x1xf32>
    %cst_85 = arith.constant 3.200000e+01 : f32
    %233 = vector.broadcast %cst_85 : f32 to vector<16x1xf32>
    %234 = arith.divf %232, %233 : vector<16x1xf32>
    %235 = vector.broadcast %227 : vector<16x1xf32> to vector<16x32xf32>
    %236 = arith.subf %219, %235 : vector<16x32xf32>
    %cst_86 = arith.constant 9.99999974E-6 : f32
    %237 = vector.broadcast %cst_86 : f32 to vector<16x1xf32>
    %238 = arith.addf %234, %237 : vector<16x1xf32>
    %239 = math.rsqrt %238 : vector<16x1xf32>
    %240 = vector.broadcast %239 : vector<16x1xf32> to vector<16x32xf32>
    %241 = arith.mulf %236, %240 : vector<16x32xf32>
    %242 = vector.broadcast %221 : vector<1x32xf32> to vector<16x32xf32>
    %243 = arith.mulf %241, %242 : vector<16x32xf32>
    %244 = vector.broadcast %223 : vector<1x32xf32> to vector<16x32xf32>
    %245 = arith.addf %243, %244 : vector<16x32xf32>
    %246 = arith.truncf %245 : vector<16x32xf32> to vector<16x32xbf16>
    %c1_87 = arith.constant 1 : index
    %c0_88 = arith.constant 0 : index
    %c0_89 = arith.constant 0 : index
    %247 = vector.load %arg5[%c1_87, %c0_88, %c0_89] : memref<2x32x96xbf16, #tpu.memory_space<vmem>>, vector<1x32x96xbf16>
    %248 = vector.shape_cast %247 : vector<1x32x96xbf16> to vector<32x96xbf16>
    %cst_90 = arith.constant dense<0.000000e+00> : vector<16x96xf32>
    %249 = tpu.matmul %246, %248, %cst_90 {dimension_numbers = #tpu.dot_dimension_numbers<[1], [0], [0], [1], [0, 0, 1, 1], [], []>} : vector<16x32xbf16>, vector<32x96xbf16>, vector<16x96xf32> -> vector<16x96xf32>
    %c1_91 = arith.constant 1 : index
    %c0_92 = arith.constant 0 : index
    %c0_93 = arith.constant 0 : index
    %250 = vector.load %arg6[%c1_91, %c0_92, %c0_93] : memref<2x32x32xbf16, #tpu.memory_space<vmem>>, vector<1x32x32xbf16>
    %251 = vector.shape_cast %250 : vector<1x32x32xbf16> to vector<32x32xbf16>
    %cst_94 = arith.constant 0.000000e+00 : f32
    %252 = vector.broadcast %cst_94 : f32 to vector<16x32xf32>
    %253 = vector.extract_strided_slice %249 {offsets = [0, 0], sizes = [16, 8], strides = [1, 1]} : vector<16x96xf32> to vector<16x8xf32>
    %254 = vector.shape_cast %253 : vector<16x8xf32> to vector<2x8x8xf32>
    %255 = vector.extract_strided_slice %249 {offsets = [0, 32], sizes = [16, 8], strides = [1, 1]} : vector<16x96xf32> to vector<16x8xf32>
    %256 = vector.shape_cast %255 : vector<16x8xf32> to vector<2x8x8xf32>
    %257 = vector.extract_strided_slice %249 {offsets = [0, 64], sizes = [16, 8], strides = [1, 1]} : vector<16x96xf32> to vector<16x8xf32>
    %258 = vector.shape_cast %257 : vector<16x8xf32> to vector<2x8x8xf32>
    %259 = arith.truncf %254 : vector<2x8x8xf32> to vector<2x8x8xbf16>
    %260 = arith.truncf %256 : vector<2x8x8xf32> to vector<2x8x8xbf16>
    "tpu.trace_start"() <{level = 10 : i32, message = "bqd,bkd->bqk"}> : () -> ()
    %cst_95 = arith.constant dense<0.000000e+00> : vector<2x8x8xf32>
    %261 = tpu.matmul %259, %260, %cst_95 {dimension_numbers = #tpu.dot_dimension_numbers<[2], [2], [1], [1], [0, 0, 0, 1, 1, 1], [0], [0]>} : vector<2x8x8xbf16>, vector<2x8x8xbf16>, vector<2x8x8xf32> -> vector<2x8x8xf32>
    "tpu.trace_stop"() : () -> ()
    %262 = vector.shape_cast %10 : vector<1x8xf32> to vector<1x1x8xf32>
    %263 = vector.broadcast %262 : vector<1x1x8xf32> to vector<2x8x8xf32>
    %264 = arith.addf %261, %263 : vector<2x8x8xf32>
    %cst_96 = arith.constant dense<0xFF800000> : vector<2x8xf32>
    %265 = vector.multi_reduction <maximumf>, %264, %cst_96 [2] : vector<2x8x8xf32> to vector<2x8xf32>
    %266 = vector.shape_cast %265 : vector<2x8xf32> to vector<2x8x1xf32>
    %267 = vector.broadcast %266 : vector<2x8x1xf32> to vector<2x8x8xf32>
    %268 = arith.subf %264, %267 : vector<2x8x8xf32>
    %269 = math.exp %268 : vector<2x8x8xf32>
    %cst_97 = arith.constant dense<0.000000e+00> : vector<2x8xf32>
    %270 = vector.multi_reduction <add>, %269, %cst_97 [2] : vector<2x8x8xf32> to vector<2x8xf32>
    %271 = vector.shape_cast %270 : vector<2x8xf32> to vector<2x8x1xf32>
    %272 = tpu.reciprocal %271 {approx = true} : vector<2x8x1xf32> -> vector<2x8x1xf32>
    %273 = vector.broadcast %272 : vector<2x8x1xf32> to vector<2x8x8xf32>
    %274 = arith.mulf %269, %273 : vector<2x8x8xf32>
    %275 = arith.truncf %274 : vector<2x8x8xf32> to vector<2x8x8xbf16>
    %276 = arith.truncf %258 : vector<2x8x8xf32> to vector<2x8x8xbf16>
    "tpu.trace_start"() <{level = 10 : i32, message = "bqk,bkd->bqd"}> : () -> ()
    %cst_98 = arith.constant dense<0.000000e+00> : vector<2x8x8xf32>
    %277 = tpu.matmul %275, %276, %cst_98 {dimension_numbers = #tpu.dot_dimension_numbers<[2], [1], [1], [2], [0, 0, 0, 1, 1, 2], [0], [0]>} : vector<2x8x8xbf16>, vector<2x8x8xbf16>, vector<2x8x8xf32> -> vector<2x8x8xf32>
    "tpu.trace_stop"() : () -> ()
    %278 = vector.shape_cast %277 : vector<2x8x8xf32> to vector<16x8xf32>
    %279 = arith.truncf %278 : vector<16x8xf32> to vector<16x8xbf16>
    %280 = vector.extract_strided_slice %251 {offsets = [0, 0], sizes = [8, 32], strides = [1, 1]} : vector<32x32xbf16> to vector<8x32xbf16>
    %cst_99 = arith.constant dense<0.000000e+00> : vector<16x32xf32>
    %281 = tpu.matmul %279, %280, %cst_99 {dimension_numbers = #tpu.dot_dimension_numbers<[1], [0], [0], [1], [0, 0, 1, 1], [], []>} : vector<16x8xbf16>, vector<8x32xbf16>, vector<16x32xf32> -> vector<16x32xf32>
    %282 = arith.addf %252, %281 : vector<16x32xf32>
    %283 = vector.extract_strided_slice %249 {offsets = [0, 8], sizes = [16, 8], strides = [1, 1]} : vector<16x96xf32> to vector<16x8xf32>
    %284 = vector.shape_cast %283 : vector<16x8xf32> to vector<2x8x8xf32>
    %285 = vector.extract_strided_slice %249 {offsets = [0, 40], sizes = [16, 8], strides = [1, 1]} : vector<16x96xf32> to vector<16x8xf32>
    %286 = vector.shape_cast %285 : vector<16x8xf32> to vector<2x8x8xf32>
    %287 = vector.extract_strided_slice %249 {offsets = [0, 72], sizes = [16, 8], strides = [1, 1]} : vector<16x96xf32> to vector<16x8xf32>
    %288 = vector.shape_cast %287 : vector<16x8xf32> to vector<2x8x8xf32>
    %289 = arith.truncf %284 : vector<2x8x8xf32> to vector<2x8x8xbf16>
    %290 = arith.truncf %286 : vector<2x8x8xf32> to vector<2x8x8xbf16>
    "tpu.trace_start"() <{level = 10 : i32, message = "bqd,bkd->bqk"}> : () -> ()
    %cst_100 = arith.constant dense<0.000000e+00> : vector<2x8x8xf32>
    %291 = tpu.matmul %289, %290, %cst_100 {dimension_numbers = #tpu.dot_dimension_numbers<[2], [2], [1], [1], [0, 0, 0, 1, 1, 1], [0], [0]>} : vector<2x8x8xbf16>, vector<2x8x8xbf16>, vector<2x8x8xf32> -> vector<2x8x8xf32>
    "tpu.trace_stop"() : () -> ()
    %292 = vector.shape_cast %10 : vector<1x8xf32> to vector<1x1x8xf32>
    %293 = vector.broadcast %292 : vector<1x1x8xf32> to vector<2x8x8xf32>
    %294 = arith.addf %291, %293 : vector<2x8x8xf32>
    %cst_101 = arith.constant dense<0xFF800000> : vector<2x8xf32>
    %295 = vector.multi_reduction <maximumf>, %294, %cst_101 [2] : vector<2x8x8xf32> to vector<2x8xf32>
    %296 = vector.shape_cast %295 : vector<2x8xf32> to vector<2x8x1xf32>
    %297 = vector.broadcast %296 : vector<2x8x1xf32> to vector<2x8x8xf32>
    %298 = arith.subf %294, %297 : vector<2x8x8xf32>
    %299 = math.exp %298 : vector<2x8x8xf32>
    %cst_102 = arith.constant dense<0.000000e+00> : vector<2x8xf32>
    %300 = vector.multi_reduction <add>, %299, %cst_102 [2] : vector<2x8x8xf32> to vector<2x8xf32>
    %301 = vector.shape_cast %300 : vector<2x8xf32> to vector<2x8x1xf32>
    %302 = tpu.reciprocal %301 {approx = true} : vector<2x8x1xf32> -> vector<2x8x1xf32>
    %303 = vector.broadcast %302 : vector<2x8x1xf32> to vector<2x8x8xf32>
    %304 = arith.mulf %299, %303 : vector<2x8x8xf32>
    %305 = arith.truncf %304 : vector<2x8x8xf32> to vector<2x8x8xbf16>
    %306 = arith.truncf %288 : vector<2x8x8xf32> to vector<2x8x8xbf16>
    "tpu.trace_start"() <{level = 10 : i32, message = "bqk,bkd->bqd"}> : () -> ()
    %cst_103 = arith.constant dense<0.000000e+00> : vector<2x8x8xf32>
    %307 = tpu.matmul %305, %306, %cst_103 {dimension_numbers = #tpu.dot_dimension_numbers<[2], [1], [1], [2], [0, 0, 0, 1, 1, 2], [0], [0]>} : vector<2x8x8xbf16>, vector<2x8x8xbf16>, vector<2x8x8xf32> -> vector<2x8x8xf32>
    "tpu.trace_stop"() : () -> ()
    %308 = vector.shape_cast %307 : vector<2x8x8xf32> to vector<16x8xf32>
    %309 = arith.truncf %308 : vector<16x8xf32> to vector<16x8xbf16>
    %310 = vector.extract_strided_slice %251 {offsets = [8, 0], sizes = [8, 32], strides = [1, 1]} : vector<32x32xbf16> to vector<8x32xbf16>
    %cst_104 = arith.constant dense<0.000000e+00> : vector<16x32xf32>
    %311 = tpu.matmul %309, %310, %cst_104 {dimension_numbers = #tpu.dot_dimension_numbers<[1], [0], [0], [1], [0, 0, 1, 1], [], []>} : vector<16x8xbf16>, vector<8x32xbf16>, vector<16x32xf32> -> vector<16x32xf32>
    %312 = arith.addf %282, %311 : vector<16x32xf32>
    %313 = vector.extract_strided_slice %249 {offsets = [0, 16], sizes = [16, 8], strides = [1, 1]} : vector<16x96xf32> to vector<16x8xf32>
    %314 = vector.shape_cast %313 : vector<16x8xf32> to vector<2x8x8xf32>
    %315 = vector.extract_strided_slice %249 {offsets = [0, 48], sizes = [16, 8], strides = [1, 1]} : vector<16x96xf32> to vector<16x8xf32>
    %316 = vector.shape_cast %315 : vector<16x8xf32> to vector<2x8x8xf32>
    %317 = vector.extract_strided_slice %249 {offsets = [0, 80], sizes = [16, 8], strides = [1, 1]} : vector<16x96xf32> to vector<16x8xf32>
    %318 = vector.shape_cast %317 : vector<16x8xf32> to vector<2x8x8xf32>
    %319 = arith.truncf %314 : vector<2x8x8xf32> to vector<2x8x8xbf16>
    %320 = arith.truncf %316 : vector<2x8x8xf32> to vector<2x8x8xbf16>
    "tpu.trace_start"() <{level = 10 : i32, message = "bqd,bkd->bqk"}> : () -> ()
    %cst_105 = arith.constant dense<0.000000e+00> : vector<2x8x8xf32>
    %321 = tpu.matmul %319, %320, %cst_105 {dimension_numbers = #tpu.dot_dimension_numbers<[2], [2], [1], [1], [0, 0, 0, 1, 1, 1], [0], [0]>} : vector<2x8x8xbf16>, vector<2x8x8xbf16>, vector<2x8x8xf32> -> vector<2x8x8xf32>
    "tpu.trace_stop"() : () -> ()
    %322 = vector.shape_cast %10 : vector<1x8xf32> to vector<1x1x8xf32>
    %323 = vector.broadcast %322 : vector<1x1x8xf32> to vector<2x8x8xf32>
    %324 = arith.addf %321, %323 : vector<2x8x8xf32>
    %cst_106 = arith.constant dense<0xFF800000> : vector<2x8xf32>
    %325 = vector.multi_reduction <maximumf>, %324, %cst_106 [2] : vector<2x8x8xf32> to vector<2x8xf32>
    %326 = vector.shape_cast %325 : vector<2x8xf32> to vector<2x8x1xf32>
    %327 = vector.broadcast %326 : vector<2x8x1xf32> to vector<2x8x8xf32>
    %328 = arith.subf %324, %327 : vector<2x8x8xf32>
    %329 = math.exp %328 : vector<2x8x8xf32>
    %cst_107 = arith.constant dense<0.000000e+00> : vector<2x8xf32>
    %330 = vector.multi_reduction <add>, %329, %cst_107 [2] : vector<2x8x8xf32> to vector<2x8xf32>
    %331 = vector.shape_cast %330 : vector<2x8xf32> to vector<2x8x1xf32>
    %332 = tpu.reciprocal %331 {approx = true} : vector<2x8x1xf32> -> vector<2x8x1xf32>
    %333 = vector.broadcast %332 : vector<2x8x1xf32> to vector<2x8x8xf32>
    %334 = arith.mulf %329, %333 : vector<2x8x8xf32>
    %335 = arith.truncf %334 : vector<2x8x8xf32> to vector<2x8x8xbf16>
    %336 = arith.truncf %318 : vector<2x8x8xf32> to vector<2x8x8xbf16>
    "tpu.trace_start"() <{level = 10 : i32, message = "bqk,bkd->bqd"}> : () -> ()
    %cst_108 = arith.constant dense<0.000000e+00> : vector<2x8x8xf32>
    %337 = tpu.matmul %335, %336, %cst_108 {dimension_numbers = #tpu.dot_dimension_numbers<[2], [1], [1], [2], [0, 0, 0, 1, 1, 2], [0], [0]>} : vector<2x8x8xbf16>, vector<2x8x8xbf16>, vector<2x8x8xf32> -> vector<2x8x8xf32>
    "tpu.trace_stop"() : () -> ()
    %338 = vector.shape_cast %337 : vector<2x8x8xf32> to vector<16x8xf32>
    %339 = arith.truncf %338 : vector<16x8xf32> to vector<16x8xbf16>
    %340 = vector.extract_strided_slice %251 {offsets = [16, 0], sizes = [8, 32], strides = [1, 1]} : vector<32x32xbf16> to vector<8x32xbf16>
    %cst_109 = arith.constant dense<0.000000e+00> : vector<16x32xf32>
    %341 = tpu.matmul %339, %340, %cst_109 {dimension_numbers = #tpu.dot_dimension_numbers<[1], [0], [0], [1], [0, 0, 1, 1], [], []>} : vector<16x8xbf16>, vector<8x32xbf16>, vector<16x32xf32> -> vector<16x32xf32>
    %342 = arith.addf %312, %341 : vector<16x32xf32>
    %343 = vector.extract_strided_slice %249 {offsets = [0, 24], sizes = [16, 8], strides = [1, 1]} : vector<16x96xf32> to vector<16x8xf32>
    %344 = vector.shape_cast %343 : vector<16x8xf32> to vector<2x8x8xf32>
    %345 = vector.extract_strided_slice %249 {offsets = [0, 56], sizes = [16, 8], strides = [1, 1]} : vector<16x96xf32> to vector<16x8xf32>
    %346 = vector.shape_cast %345 : vector<16x8xf32> to vector<2x8x8xf32>
    %347 = vector.extract_strided_slice %249 {offsets = [0, 88], sizes = [16, 8], strides = [1, 1]} : vector<16x96xf32> to vector<16x8xf32>
    %348 = vector.shape_cast %347 : vector<16x8xf32> to vector<2x8x8xf32>
    %349 = arith.truncf %344 : vector<2x8x8xf32> to vector<2x8x8xbf16>
    %350 = arith.truncf %346 : vector<2x8x8xf32> to vector<2x8x8xbf16>
    "tpu.trace_start"() <{level = 10 : i32, message = "bqd,bkd->bqk"}> : () -> ()
    %cst_110 = arith.constant dense<0.000000e+00> : vector<2x8x8xf32>
    %351 = tpu.matmul %349, %350, %cst_110 {dimension_numbers = #tpu.dot_dimension_numbers<[2], [2], [1], [1], [0, 0, 0, 1, 1, 1], [0], [0]>} : vector<2x8x8xbf16>, vector<2x8x8xbf16>, vector<2x8x8xf32> -> vector<2x8x8xf32>
    "tpu.trace_stop"() : () -> ()
    %352 = vector.shape_cast %10 : vector<1x8xf32> to vector<1x1x8xf32>
    %353 = vector.broadcast %352 : vector<1x1x8xf32> to vector<2x8x8xf32>
    %354 = arith.addf %351, %353 : vector<2x8x8xf32>
    %cst_111 = arith.constant dense<0xFF800000> : vector<2x8xf32>
    %355 = vector.multi_reduction <maximumf>, %354, %cst_111 [2] : vector<2x8x8xf32> to vector<2x8xf32>
    %356 = vector.shape_cast %355 : vector<2x8xf32> to vector<2x8x1xf32>
    %357 = vector.broadcast %356 : vector<2x8x1xf32> to vector<2x8x8xf32>
    %358 = arith.subf %354, %357 : vector<2x8x8xf32>
    %359 = math.exp %358 : vector<2x8x8xf32>
    %cst_112 = arith.constant dense<0.000000e+00> : vector<2x8xf32>
    %360 = vector.multi_reduction <add>, %359, %cst_112 [2] : vector<2x8x8xf32> to vector<2x8xf32>
    %361 = vector.shape_cast %360 : vector<2x8xf32> to vector<2x8x1xf32>
    %362 = tpu.reciprocal %361 {approx = true} : vector<2x8x1xf32> -> vector<2x8x1xf32>
    %363 = vector.broadcast %362 : vector<2x8x1xf32> to vector<2x8x8xf32>
    %364 = arith.mulf %359, %363 : vector<2x8x8xf32>
    %365 = arith.truncf %364 : vector<2x8x8xf32> to vector<2x8x8xbf16>
    %366 = arith.truncf %348 : vector<2x8x8xf32> to vector<2x8x8xbf16>
    "tpu.trace_start"() <{level = 10 : i32, message = "bqk,bkd->bqd"}> : () -> ()
    %cst_113 = arith.constant dense<0.000000e+00> : vector<2x8x8xf32>
    %367 = tpu.matmul %365, %366, %cst_113 {dimension_numbers = #tpu.dot_dimension_numbers<[2], [1], [1], [2], [0, 0, 0, 1, 1, 2], [0], [0]>} : vector<2x8x8xbf16>, vector<2x8x8xbf16>, vector<2x8x8xf32> -> vector<2x8x8xf32>
    "tpu.trace_stop"() : () -> ()
    %368 = vector.shape_cast %367 : vector<2x8x8xf32> to vector<16x8xf32>
    %369 = arith.truncf %368 : vector<16x8xf32> to vector<16x8xbf16>
    %370 = vector.extract_strided_slice %251 {offsets = [24, 0], sizes = [8, 32], strides = [1, 1]} : vector<32x32xbf16> to vector<8x32xbf16>
    %cst_114 = arith.constant dense<0.000000e+00> : vector<16x32xf32>
    %371 = tpu.matmul %369, %370, %cst_114 {dimension_numbers = #tpu.dot_dimension_numbers<[1], [0], [0], [1], [0, 0, 1, 1], [], []>} : vector<16x8xbf16>, vector<8x32xbf16>, vector<16x32xf32> -> vector<16x32xf32>
    %372 = arith.addf %342, %371 : vector<16x32xf32>
    %373 = arith.addf %219, %372 : vector<16x32xf32>
    %c1_115 = arith.constant 1 : index
    %c0_116 = arith.constant 0 : index
    %c0_117 = arith.constant 0 : index
    %374 = vector.load %arg7[%c1_115, %c0_116, %c0_117] : memref<2x1x32xf32, #tpu.memory_space<vmem>>, vector<1x1x32xf32>
    %375 = vector.shape_cast %374 : vector<1x1x32xf32> to vector<1x32xf32>
    %376 = vector.broadcast %375 : vector<1x32xf32> to vector<16x32xf32>
    %377 = arith.addf %373, %376 : vector<16x32xf32>
    %c1_118 = arith.constant 1 : index
    %c0_119 = arith.constant 0 : index
    %c0_120 = arith.constant 0 : index
    %378 = vector.load %arg8[%c1_118, %c0_119, %c0_120] : memref<2x1x32xf32, #tpu.memory_space<vmem>>, vector<1x1x32xf32>
    %379 = vector.shape_cast %378 : vector<1x1x32xf32> to vector<1x32xf32>
    %c1_121 = arith.constant 1 : index
    %c0_122 = arith.constant 0 : index
    %c0_123 = arith.constant 0 : index
    %380 = vector.load %arg9[%c1_121, %c0_122, %c0_123] : memref<2x1x32xf32, #tpu.memory_space<vmem>>, vector<1x1x32xf32>
    %381 = vector.shape_cast %380 : vector<1x1x32xf32> to vector<1x32xf32>
    %cst_124 = arith.constant dense<0.000000e+00> : vector<16xf32>
    %382 = vector.multi_reduction <add>, %377, %cst_124 [1] : vector<16x32xf32> to vector<16xf32>
    %383 = vector.shape_cast %382 : vector<16xf32> to vector<16x1xf32>
    %cst_125 = arith.constant 3.200000e+01 : f32
    %384 = vector.broadcast %cst_125 : f32 to vector<16x1xf32>
    %385 = arith.divf %383, %384 : vector<16x1xf32>
    %386 = vector.broadcast %385 : vector<16x1xf32> to vector<16x32xf32>
    %387 = arith.subf %377, %386 : vector<16x32xf32>
    %388 = arith.mulf %387, %387 : vector<16x32xf32>
    %cst_126 = arith.constant dense<0.000000e+00> : vector<16xf32>
    %389 = vector.multi_reduction <add>, %388, %cst_126 [1] : vector<16x32xf32> to vector<16xf32>
    %390 = vector.shape_cast %389 : vector<16xf32> to vector<16x1xf32>
    %cst_127 = arith.constant 3.200000e+01 : f32
    %391 = vector.broadcast %cst_127 : f32 to vector<16x1xf32>
    %392 = arith.divf %390, %391 : vector<16x1xf32>
    %393 = vector.broadcast %385 : vector<16x1xf32> to vector<16x32xf32>
    %394 = arith.subf %377, %393 : vector<16x32xf32>
    %cst_128 = arith.constant 9.99999974E-6 : f32
    %395 = vector.broadcast %cst_128 : f32 to vector<16x1xf32>
    %396 = arith.addf %392, %395 : vector<16x1xf32>
    %397 = math.rsqrt %396 : vector<16x1xf32>
    %398 = vector.broadcast %397 : vector<16x1xf32> to vector<16x32xf32>
    %399 = arith.mulf %394, %398 : vector<16x32xf32>
    %400 = vector.broadcast %379 : vector<1x32xf32> to vector<16x32xf32>
    %401 = arith.mulf %399, %400 : vector<16x32xf32>
    %402 = vector.broadcast %381 : vector<1x32xf32> to vector<16x32xf32>
    %403 = arith.addf %401, %402 : vector<16x32xf32>
    %404 = arith.truncf %403 : vector<16x32xf32> to vector<16x32xbf16>
    %c1_129 = arith.constant 1 : index
    %c0_130 = arith.constant 0 : index
    %c0_131 = arith.constant 0 : index
    %405 = vector.load %arg10[%c1_129, %c0_130, %c0_131] : memref<2x32x128xbf16, #tpu.memory_space<vmem>>, vector<1x32x128xbf16>
    %406 = vector.shape_cast %405 : vector<1x32x128xbf16> to vector<32x128xbf16>
    %cst_132 = arith.constant dense<0.000000e+00> : vector<16x128xf32>
    %407 = tpu.matmul %404, %406, %cst_132 {dimension_numbers = #tpu.dot_dimension_numbers<[1], [0], [0], [1], [0, 0, 1, 1], [], []>} : vector<16x32xbf16>, vector<32x128xbf16>, vector<16x128xf32> -> vector<16x128xf32>
    %c1_133 = arith.constant 1 : index
    %c0_134 = arith.constant 0 : index
    %c0_135 = arith.constant 0 : index
    %408 = vector.load %arg11[%c1_133, %c0_134, %c0_135] : memref<2x1x128xf32, #tpu.memory_space<vmem>>, vector<1x1x128xf32>
    %409 = vector.shape_cast %408 : vector<1x1x128xf32> to vector<1x128xf32>
    %410 = vector.broadcast %409 : vector<1x128xf32> to vector<16x128xf32>
    %411 = arith.addf %407, %410 : vector<16x128xf32>
    %cst_136 = arith.constant 5.000000e-01 : f32
    %412 = vector.broadcast %cst_136 : f32 to vector<16x128xf32>
    %413 = arith.mulf %412, %411 : vector<16x128xf32>
    %cst_137 = arith.constant 0.707106769 : f32
    %414 = vector.broadcast %cst_137 : f32 to vector<16x128xf32>
    %415 = arith.mulf %411, %414 : vector<16x128xf32>
    %416 = math.erf %415 : vector<16x128xf32>
    %cst_138 = arith.constant 1.000000e+00 : f32
    %417 = vector.broadcast %cst_138 : f32 to vector<16x128xf32>
    %418 = arith.addf %417, %416 : vector<16x128xf32>
    %419 = arith.mulf %413, %418 : vector<16x128xf32>
    %420 = arith.truncf %419 : vector<16x128xf32> to vector<16x128xbf16>
    %c1_139 = arith.constant 1 : index
    %c0_140 = arith.constant 0 : index
    %c0_141 = arith.constant 0 : index
    %421 = vector.load %arg12[%c1_139, %c0_140, %c0_141] : memref<2x128x32xbf16, #tpu.memory_space<vmem>>, vector<1x128x32xbf16>
    %422 = vector.shape_cast %421 : vector<1x128x32xbf16> to vector<128x32xbf16>
    %cst_142 = arith.constant dense<0.000000e+00> : vector<16x32xf32>
    %423 = tpu.matmul %420, %422, %cst_142 {dimension_numbers = #tpu.dot_dimension_numbers<[1], [0], [0], [1], [0, 0, 1, 1], [], []>} : vector<16x128xbf16>, vector<128x32xbf16>, vector<16x32xf32> -> vector<16x32xf32>
    %c1_143 = arith.constant 1 : index
    %c0_144 = arith.constant 0 : index
    %c0_145 = arith.constant 0 : index
    %424 = vector.load %arg13[%c1_143, %c0_144, %c0_145] : memref<2x1x32xf32, #tpu.memory_space<vmem>>, vector<1x1x32xf32>
    %425 = vector.shape_cast %424 : vector<1x1x32xf32> to vector<1x32xf32>
    %426 = vector.broadcast %425 : vector<1x32xf32> to vector<16x32xf32>
    %427 = arith.addf %423, %426 : vector<16x32xf32>
    %428 = arith.addf %377, %427 : vector<16x32xf32>
    %c0_146 = arith.constant 0 : index
    %c0_147 = arith.constant 0 : index
    %429 = vector.load %arg14[%c0_146, %c0_147] : memref<1x32xf32, #tpu.memory_space<vmem>>, vector<1x32xf32>
    %c0_148 = arith.constant 0 : index
    %c0_149 = arith.constant 0 : index
    %430 = vector.load %arg15[%c0_148, %c0_149] : memref<1x32xf32, #tpu.memory_space<vmem>>, vector<1x32xf32>
    %cst_150 = arith.constant dense<0.000000e+00> : vector<16xf32>
    %431 = vector.multi_reduction <add>, %428, %cst_150 [1] : vector<16x32xf32> to vector<16xf32>
    %432 = vector.shape_cast %431 : vector<16xf32> to vector<16x1xf32>
    %cst_151 = arith.constant 3.200000e+01 : f32
    %433 = vector.broadcast %cst_151 : f32 to vector<16x1xf32>
    %434 = arith.divf %432, %433 : vector<16x1xf32>
    %435 = vector.broadcast %434 : vector<16x1xf32> to vector<16x32xf32>
    %436 = arith.subf %428, %435 : vector<16x32xf32>
    %437 = arith.mulf %436, %436 : vector<16x32xf32>
    %cst_152 = arith.constant dense<0.000000e+00> : vector<16xf32>
    %438 = vector.multi_reduction <add>, %437, %cst_152 [1] : vector<16x32xf32> to vector<16xf32>
    %439 = vector.shape_cast %438 : vector<16xf32> to vector<16x1xf32>
    %cst_153 = arith.constant 3.200000e+01 : f32
    %440 = vector.broadcast %cst_153 : f32 to vector<16x1xf32>
    %441 = arith.divf %439, %440 : vector<16x1xf32>
    %442 = vector.broadcast %434 : vector<16x1xf32> to vector<16x32xf32>
    %443 = arith.subf %428, %442 : vector<16x32xf32>
    %cst_154 = arith.constant 9.99999974E-6 : f32
    %444 = vector.broadcast %cst_154 : f32 to vector<16x1xf32>
    %445 = arith.addf %441, %444 : vector<16x1xf32>
    %446 = math.rsqrt %445 : vector<16x1xf32>
    %447 = vector.broadcast %446 : vector<16x1xf32> to vector<16x32xf32>
    %448 = arith.mulf %443, %447 : vector<16x32xf32>
    %449 = vector.broadcast %429 : vector<1x32xf32> to vector<16x32xf32>
    %450 = arith.mulf %448, %449 : vector<16x32xf32>
    %451 = vector.broadcast %430 : vector<1x32xf32> to vector<16x32xf32>
    %452 = arith.addf %450, %451 : vector<16x32xf32>
    %c0_155 = arith.constant 0 : index
    %c0_156 = arith.constant 0 : index
    %453 = vector.load %arg16[%c0_155, %c0_156] : memref<16x32xf32, #tpu.memory_space<vmem>>, vector<16x32xf32>
    tpu.vector_store %arg16[%c0_155, %c0_156], %452 {strides = array<i32>} : memref<16x32xf32, #tpu.memory_space<vmem>>, vector<16x32xf32>,
    return
  }
}

</mosaic_0001>

<llo_original>
// kernel: transreid_forward.1
$region0: #{transreid_forward.1}
  #allocation0 [shape = 'u32[]', space=smem, size = 0x4, offset = 0x4, fixed_abs, tag = 'smem constant byte address 0x4 - core index']
  #allocation1 [shape = 'u32[144,128]{1,0:T(1,128)}', space=vmem, size = 0x12000, scoped, tag = 'internal scratch']
  %s0 = inlined_call_operand.vmem [shape: bf16[16,256], index: 0, kind: input, shape index: {}]
  %s1 = inlined_call_operand.vmem [shape: bf16[256,32], index: 1, kind: input, shape index: {}]
  %s2 = inlined_call_operand.vmem [shape: f32[16,32], index: 2, kind: input, shape index: {}]
  %s3 = inlined_call_operand.vmem [shape: f32[2,1,32], index: 3, kind: input, shape index: {}]
  %s4 = inlined_call_operand.vmem [shape: f32[2,1,32], index: 4, kind: input, shape index: {}]
  %s5 = inlined_call_operand.vmem [shape: bf16[2,32,96], index: 5, kind: input, shape index: {}]
  %s6 = inlined_call_operand.vmem [shape: bf16[2,32,32], index: 6, kind: input, shape index: {}]
  %s7 = inlined_call_operand.vmem [shape: f32[2,1,32], index: 7, kind: input, shape index: {}]
  %s8 = inlined_call_operand.vmem [shape: f32[2,1,32], index: 8, kind: input, shape index: {}]
  %s9 = inlined_call_operand.vmem [shape: f32[2,1,32], index: 9, kind: input, shape index: {}]
  %s10 = inlined_call_operand.vmem [shape: bf16[2,32,128], index: 10, kind: input, shape index: {}]
  %s11 = inlined_call_operand.vmem [shape: f32[2,1,128], index: 11, kind: input, shape index: {}]
  %s12 = inlined_call_operand.vmem [shape: bf16[2,128,32], index: 12, kind: input, shape index: {}]
  %s13 = inlined_call_operand.vmem [shape: f32[2,1,32], index: 13, kind: input, shape index: {}]
  %s14 = inlined_call_operand.vmem [shape: f32[1,32], index: 14, kind: input, shape index: {}]
  %s15 = inlined_call_operand.vmem [shape: f32[1,32], index: 15, kind: input, shape index: {}]
  %s16 = inlined_call_operand.vmem [shape: f32[16,32], index: 16, kind: output, shape index: {}]
  %s17 = sld [smem:[#allocation0]]
  $region74: #{transreid_forward.1} parent=0
    _
  %s19 = ssub.s32 1, %s17
  %s20 = scalar_select 0, %s19, %s17
  // Predicated region
  $region2: #{transreid_forward.1} parent=0 // pred_check
    _
  $region3: #{transreid_forward.1} parent=0 // pred_check_branch
    %22 = sbr.rel (0) target = $region5
  $region4: #{transreid_forward.1} parent=0 // pred_region
    _
  $region5: #{transreid_forward.1} parent=0 // pred_fallthru
    _
  // Predicated region
  $region6: #{transreid_forward.1} parent=0 // pred_check
    _
  $region7: #{transreid_forward.1} parent=0 // pred_check_branch
    %24 = sbr.rel (0) target = $region9
  $region8: #{transreid_forward.1} parent=0 // pred_region
    _
  $region9: #{transreid_forward.1} parent=0 // pred_fallthru
    _
  // Predicated region
  $region10: #{transreid_forward.1} parent=0 // pred_check
    _
  $region11: #{transreid_forward.1} parent=0 // pred_check_branch
    %26 = sbr.rel (0) target = $region13
  $region12: #{transreid_forward.1} parent=0 // pred_region
    _
  $region13: #{transreid_forward.1} parent=0 // pred_fallthru
    _
  // Predicated region
  $region14: #{transreid_forward.1} parent=0 // pred_check
    _
  $region15: #{transreid_forward.1} parent=0 // pred_check_branch
    %28 = sbr.rel (0) target = $region17
  $region16: #{transreid_forward.1} parent=0 // pred_region
    _
  $region17: #{transreid_forward.1} parent=0 // pred_fallthru
    _
  // Predicated region
  $region18: #{transreid_forward.1} parent=0 // pred_check
    _
  $region19: #{transreid_forward.1} parent=0 // pred_check_branch
    %30 = sbr.rel (0) target = $region21
  $region20: #{transreid_forward.1} parent=0 // pred_region
    _
  $region21: #{transreid_forward.1} parent=0 // pred_fallthru
    _
  // Predicated region
  $region22: #{transreid_forward.1} parent=0 // pred_check
    _
  $region23: #{transreid_forward.1} parent=0 // pred_check_branch
    %32 = sbr.rel (0) target = $region25
  $region24: #{transreid_forward.1} parent=0 // pred_region
    _
  $region25: #{transreid_forward.1} parent=0 // pred_fallthru
    _
  // Predicated region
  $region26: #{transreid_forward.1} parent=0 // pred_check
    _
  $region27: #{transreid_forward.1} parent=0 // pred_check_branch
    %34 = sbr.rel (0) target = $region29
  $region28: #{transreid_forward.1} parent=0 // pred_region
    _
  $region29: #{transreid_forward.1} parent=0 // pred_fallthru
    _
  // Predicated region
  $region30: #{transreid_forward.1} parent=0 // pred_check
    _
  $region31: #{transreid_forward.1} parent=0 // pred_check_branch
    %36 = sbr.rel (0) target = $region33
  $region32: #{transreid_forward.1} parent=0 // pred_region
    _
  $region33: #{transreid_forward.1} parent=0 // pred_fallthru
    _
  // Predicated region
  $region34: #{transreid_forward.1} parent=0 // pred_check
    _
  $region35: #{transreid_forward.1} parent=0 // pred_check_branch
    %38 = sbr.rel (0) target = $region37
  $region36: #{transreid_forward.1} parent=0 // pred_region
    _
  $region37: #{transreid_forward.1} parent=0 // pred_fallthru
    _
  // Predicated region
  $region38: #{transreid_forward.1} parent=0 // pred_check
    _
  $region39: #{transreid_forward.1} parent=0 // pred_check_branch
    %40 = sbr.rel (0) target = $region41
  $region40: #{transreid_forward.1} parent=0 // pred_region
    _
  $region41: #{transreid_forward.1} parent=0 // pred_fallthru
    _
  // Predicated region
  $region42: #{transreid_forward.1} parent=0 // pred_check
    _
  $region43: #{transreid_forward.1} parent=0 // pred_check_branch
    %42 = sbr.rel (0) target = $region45
  $region44: #{transreid_forward.1} parent=0 // pred_region
    _
  $region45: #{transreid_forward.1} parent=0 // pred_fallthru
    _
  // Predicated region
  $region46: #{transreid_forward.1} parent=0 // pred_check
    _
  $region47: #{transreid_forward.1} parent=0 // pred_check_branch
    %44 = sbr.rel (0) target = $region49
  $region48: #{transreid_forward.1} parent=0 // pred_region
    _
  $region49: #{transreid_forward.1} parent=0 // pred_fallthru
    _
  // Predicated region
  $region50: #{transreid_forward.1} parent=0 // pred_check
    _
  $region51: #{transreid_forward.1} parent=0 // pred_check_branch
    %46 = sbr.rel (0) target = $region53
  $region52: #{transreid_forward.1} parent=0 // pred_region
    _
  $region53: #{transreid_forward.1} parent=0 // pred_fallthru
    _
  // Predicated region
  $region54: #{transreid_forward.1} parent=0 // pred_check
    _
  $region55: #{transreid_forward.1} parent=0 // pred_check_branch
    %48 = sbr.rel (0) target = $region57
  $region56: #{transreid_forward.1} parent=0 // pred_region
    _
  $region57: #{transreid_forward.1} parent=0 // pred_fallthru
    _
  // Predicated region
  $region58: #{transreid_forward.1} parent=0 // pred_check
    _
  $region59: #{transreid_forward.1} parent=0 // pred_check_branch
    %50 = sbr.rel (0) target = $region61
  $region60: #{transreid_forward.1} parent=0 // pred_region
    _
  $region61: #{transreid_forward.1} parent=0 // pred_fallthru
    _
  // Predicated region
  $region62: #{transreid_forward.1} parent=0 // pred_check
    _
  $region63: #{transreid_forward.1} parent=0 // pred_check_branch
    %52 = sbr.rel (0) target = $region65
  $region64: #{transreid_forward.1} parent=0 // pred_region
    _
  $region65: #{transreid_forward.1} parent=0 // pred_fallthru
    _
  %v54 = vld [vmem:[%s0] sm:$0xff]
  %v55 = vld [vmem:[%s0 + $0x8] sm:$0xff]
  %v56 = vld [vmem:[%s1] sm:$0xf]
  %v57 = vld [vmem:[%s1 + $0x4] sm:$0xf]
  %v58 = vld [vmem:[%s1 + $0x8] sm:$0xf]
  %v59 = vld [vmem:[%s1 + $0xc] sm:$0xf]
  %v60 = vld [vmem:[%s1 + $0x10] sm:$0xf]
  %v61 = vld [vmem:[%s1 + $0x14] sm:$0xf]
  %v62 = vld [vmem:[%s1 + $0x18] sm:$0xf]
  %v63 = vld [vmem:[%s1 + $0x1c] sm:$0xf]
  %v64 = vld [vmem:[%s1 + $0x20] sm:$0xf]
  %v65 = vld [vmem:[%s1 + $0x24] sm:$0xf]
  %v66 = vld [vmem:[%s1 + $0x28] sm:$0xf]
  %v67 = vld [vmem:[%s1 + $0x2c] sm:$0xf]
  %v68 = vld [vmem:[%s1 + $0x30] sm:$0xf]
  %v69 = vld [vmem:[%s1 + $0x34] sm:$0xf]
  %v70 = vld [vmem:[%s1 + $0x38] sm:$0xf]
  %v71 = vld [vmem:[%s1 + $0x3c] sm:$0xf]
  %v72 = vld [vmem:[%s1 + $0x40] sm:$0xf]
  %v73 = vld [vmem:[%s1 + $0x44] sm:$0xf]
  %v74 = vld [vmem:[%s1 + $0x48] sm:$0xf]
  %v75 = vld [vmem:[%s1 + $0x4c] sm:$0xf]
  %v76 = vld [vmem:[%s1 + $0x50] sm:$0xf]
  %v77 = vld [vmem:[%s1 + $0x54] sm:$0xf]
  %v78 = vld [vmem:[%s1 + $0x58] sm:$0xf]
  %v79 = vld [vmem:[%s1 + $0x5c] sm:$0xf]
  %v80 = vld [vmem:[%s1 + $0x60] sm:$0xf]
  %v81 = vld [vmem:[%s1 + $0x64] sm:$0xf]
  %v82 = vld [vmem:[%s1 + $0x68] sm:$0xf]
  %v83 = vld [vmem:[%s1 + $0x6c] sm:$0xf]
  %v84 = vld [vmem:[%s1 + $0x70] sm:$0xf]
  %v85 = vld [vmem:[%s1 + $0x74] sm:$0xf]
  %v86 = vld [vmem:[%s1 + $0x78] sm:$0xf]
  %v87 = vld [vmem:[%s1 + $0x7c] sm:$0xf]
  %v88 = vld [vmem:[%s2] sm:$0xff]
  %v89 = vld [vmem:[%s2 + $0x8] sm:$0xff]
  %v92 = vunpack.c.l.b16 %v54
  %v93 = vunpack.c.h.b16 %v54
  %v94 = vunpack.c.l.b16 %v55
  %v95 = vunpack.c.h.b16 %v55
  %v96 = vpack.c.b16 %v94, %v92
  %v97 = vpack.c.b16 %v95, %v93
  %v132 = vunpack.c.l.b16 %v56
  %v133 = vunpack.c.l.b16 %v57
  %v134 = vunpack.c.l.b16 %v58
  %v135 = vunpack.c.l.b16 %v59
  %v136 = vunpack.c.l.b16 %v60
  %v137 = vunpack.c.l.b16 %v61
  %v138 = vunpack.c.l.b16 %v62
  %v139 = vunpack.c.l.b16 %v63
  %v140 = vunpack.c.l.b16 %v64
  %v141 = vunpack.c.l.b16 %v65
  %v142 = vunpack.c.l.b16 %v66
  %v143 = vunpack.c.l.b16 %v67
  %v144 = vunpack.c.l.b16 %v68
  %v145 = vunpack.c.l.b16 %v69
  %v146 = vunpack.c.l.b16 %v70
  %v147 = vunpack.c.l.b16 %v71
  %v148 = vunpack.c.l.b16 %v72
  %v149 = vunpack.c.l.b16 %v73
  %v150 = vunpack.c.l.b16 %v74
  %v151 = vunpack.c.l.b16 %v75
  %v152 = vunpack.c.l.b16 %v76
  %v153 = vunpack.c.l.b16 %v77
  %v154 = vunpack.c.l.b16 %v78
  %v155 = vunpack.c.l.b16 %v79
  %v156 = vunpack.c.l.b16 %v80
  %v157 = vunpack.c.l.b16 %v81
  %v158 = vunpack.c.l.b16 %v82
  %v159 = vunpack.c.l.b16 %v83
  %v160 = vunpack.c.l.b16 %v84
  %v161 = vunpack.c.l.b16 %v85
  %v162 = vunpack.c.l.b16 %v86
  %v163 = vunpack.c.l.b16 %v87
  %v164 = vpack.c.b16 %v133, %v132
  %v165 = vpack.c.b16 %v135, %v134
  %v166 = vpack.c.b16 %v137, %v136
  %v167 = vpack.c.b16 %v139, %v138
  %v168 = vpack.c.b16 %v141, %v140
  %v169 = vpack.c.b16 %v143, %v142
  %v170 = vpack.c.b16 %v145, %v144
  %v171 = vpack.c.b16 %v147, %v146
  %v172 = vpack.c.b16 %v149, %v148
  %v173 = vpack.c.b16 %v151, %v150
  %v174 = vpack.c.b16 %v153, %v152
  %v175 = vpack.c.b16 %v155, %v154
  %v176 = vpack.c.b16 %v157, %v156
  %v177 = vpack.c.b16 %v159, %v158
  %v178 = vpack.c.b16 %v161, %v160
  %v179 = vpack.c.b16 %v163, %v162
  %196 = vmatprep.subr.bf16.mxu0 0
  %197 = vmatpush1.bf16.msra.mxu0 %v164
  %198 = vmatprep.subr.bf16.mxu0 0
  %199 = vmatpush1.bf16.msra.mxu0 %v165
  %200 = vmatprep.subr.bf16.mxu0 0
  %201 = vmatpush1.bf16.msra.mxu0 %v166
  %202 = vmatprep.subr.bf16.mxu0 0
  %203 = vmatpush1.bf16.msra.mxu0 %v167
  %204 = vmatprep.subr.bf16.mxu0 0
  %205 = vmatpush1.bf16.msra.mxu0 %v168
  %206 = vmatprep.subr.bf16.mxu0 0
  %207 = vmatpush1.bf16.msra.mxu0 %v169
  %208 = vmatprep.subr.bf16.mxu0 0
  %209 = vmatpush1.bf16.msra.mxu0 %v170
  %210 = vmatprep.subr.bf16.mxu0 0
  %211 = vmatpush1.bf16.msra.mxu0 %v171
  %212 = vmatprep.subr.bf16.mxu0 0
  %213 = vmatpush1.bf16.msra.mxu0 %v172
  %214 = vmatprep.subr.bf16.mxu0 0
  %215 = vmatpush1.bf16.msra.mxu0 %v173
  %216 = vmatprep.subr.bf16.mxu0 0
  %217 = vmatpush1.bf16.msra.mxu0 %v174
  %218 = vmatprep.subr.bf16.mxu0 0
  %219 = vmatpush1.bf16.msra.mxu0 %v175
  %220 = vmatprep.subr.bf16.mxu0 0
  %221 = vmatpush1.bf16.msra.mxu0 %v176
  %222 = vmatprep.subr.bf16.mxu0 0
  %223 = vmatpush1.bf16.msra.mxu0 %v177
  %224 = vmatprep.subr.bf16.mxu0 0
  %225 = vmatpush1.bf16.msra.mxu0 %v178
  %226 = vmatprep.subr.bf16.mxu0 0
  %227 = vmatpush1.bf16.msra.mxu0 %v179
  %228 = vmatprep.mubr.bf16.mxu0 %v97
  %229 = vmatmul.mubr.bf16.gmra.mrb[0].mxu0 %v96
  %v230 = vpop.f32.mrb[0].mxu0
  %v231 = vadd.f32 %v88, %v230
  %v232 = vpop.f32.mrb[0].mxu0
  %v233 = vpop.f32.mrb[0].mxu0
  %v234 = vadd.f32 %v89, %v233
  %v235 = vpop.f32.mrb[0].mxu0
  %236 = vdwg.mxu0
  %v237 = vlaneseq
  %v238 = vand.u32 %v237, 127
  %vm239 = vcmp.lt.s32.totalorder %v238, 5
  %v240 = vsel %vm239, 0.0, -1e+30
  %v241 = vld [vmem:[%s3] sm:$0x1]
  %v242 = vld [vmem:[%s4] sm:$0x1]
  %vm243 = vcmask 261120
  %v244 = vsel %vm243, %v231, 0.0
  %245 = vadd.xlane.f32.xlu0 %v244
  %v246 = vpop.xlane.xlu0 %245
  %v247 = vsel %vm243, %v234, 0.0
  %248 = vadd.xlane.f32.xlu0 %v247
  %v249 = vpop.xlane.xlu0 %248
  %v250 = vrcp.pop 32.0
  %v251 = vmul.f32 %v246, %v250
  %v252 = vmul.f32 %v249, %v250
  %v253 = vsub.f32 %v231, %v251
  %v254 = vsub.f32 %v234, %v252
  %v255 = vmul.f32 %v253, %v253
  %v256 = vmul.f32 %v254, %v254
  %v257 = vsel %vm243, %v255, 0.0
  %258 = vadd.xlane.f32.xlu0 %v257
  %v259 = vpop.xlane.xlu0 %258
  %v260 = vsel %vm243, %v256, 0.0
  %261 = vadd.xlane.f32.xlu0 %v260
  %v262 = vpop.xlane.xlu0 %261
  %v263 = vmul.f32 %v259, %v250
  %v264 = vmul.f32 %v262, %v250
  %v265 = vadd.f32 %v263, 1e-05
  %v266 = vadd.f32 %v264, 1e-05
  %v267 = vrsqrt.pop %v265
  %v268 = vrsqrt.pop %v266
  %v269 = vmul.f32 %v253, %v267
  %v270 = vmul.f32 %v254, %v268
  %v272 = vlaneseq
  %v273 = vshrl.u32 %v272, 7
  %v274 = vsub.s32 0, %v273
  %v275 = vrot.slane %v241, %v274
  %v277 = vmul.f32 %v269, %v275
  %v278 = vmul.f32 %v270, %v275
  %v280 = vlaneseq
  %v281 = vshrl.u32 %v280, 7
  %v282 = vsub.s32 0, %v281
  %v283 = vrot.slane %v242, %v282
  %v285 = vadd.f32 %v277, %v283
  %v286 = vadd.f32 %v278, %v283
  %v287 = vpack.c.bf16 %v286, %v285
  %v288 = vld [vmem:[%s5] sm:$0xf]
  %v289 = vld [vmem:[%s5 + $0x4] sm:$0xf]
  %v290 = vld [vmem:[%s5 + $0x8] sm:$0xf]
  %v291 = vld [vmem:[%s5 + $0xc] sm:$0xf]
  %v296 = vunpack.c.l.b16 %v288
  %v297 = vunpack.c.l.b16 %v289
  %v298 = vunpack.c.l.b16 %v290
  %v299 = vunpack.c.l.b16 %v291
  %v300 = vpack.c.b16 %v297, %v296
  %v301 = vpack.c.b16 %v299, %v298
  %v305 = vsel %vm243, %v287, 0
  %307 = vmatprep.subr.bf16.mxu0 0
  %308 = vmatpush1.bf16.msra.mxu0 %v300
  %309 = vmatprep.subr.bf16.mxu0 0
  %310 = vmatpush1.bf16.msra.mxu0 %v301
  %311 = vmatprep.subr.bf16.mxu0 0
  %312 = vmatpush1.bf16.msra.mxu0 0
  %313 = vmatprep.subr.bf16.mxu0 0
  %314 = vmatpush1.bf16.msra.mxu0 0
  %315 = vmatprep.subr.bf16.mxu0 0
  %316 = vmatpush1.bf16.msra.mxu0 0
  %317 = vmatprep.subr.bf16.mxu0 0
  %318 = vmatpush1.bf16.msra.mxu0 0
  %319 = vmatprep.subr.bf16.mxu0 0
  %320 = vmatpush1.bf16.msra.mxu0 0
  %321 = vmatprep.subr.bf16.mxu0 0
  %322 = vmatpush1.bf16.msra.mxu0 0
  %323 = vmatprep.subr.bf16.mxu0 0
  %324 = vmatpush1.bf16.msra.mxu0 0
  %325 = vmatprep.subr.bf16.mxu0 0
  %326 = vmatpush1.bf16.msra.mxu0 0
  %327 = vmatprep.subr.bf16.mxu0 0
  %328 = vmatpush1.bf16.msra.mxu0 0
  %329 = vmatprep.subr.bf16.mxu0 0
  %330 = vmatpush1.bf16.msra.mxu0 0
  %331 = vmatprep.subr.bf16.mxu0 0
  %332 = vmatpush1.bf16.msra.mxu0 0
  %333 = vmatprep.subr.bf16.mxu0 0
  %334 = vmatpush1.bf16.msra.mxu0 0
  %335 = vmatprep.subr.bf16.mxu0 0
  %336 = vmatpush1.bf16.msra.mxu0 0
  %337 = vmatprep.subr.bf16.mxu0 0
  %338 = vmatpush1.bf16.msra.mxu0 0
  %339 = vmatprep.mubr.bf16.mxu0 0
  %340 = vmatmul.mubr.bf16.gmra.mrb[0].mxu0 %v305
  %v341 = vpop.f32.mrb[0].mxu0
  %v342 = vadd.f32 0.0, %v341
  %v343 = vpop.f32.mrb[0].mxu0
  %v344 = vpop.f32.mrb[0].mxu0
  %v345 = vadd.f32 0.0, %v344
  %v346 = vpop.f32.mrb[0].mxu0
  %347 = vdwg.mxu0
  %v348 = vld [vmem:[%s6] sm:$0xf]
  %v349 = vld [vmem:[%s6 + $0x4] sm:$0xf]
  %v350 = vld [vmem:[%s6 + $0x8] sm:$0xf]
  %v351 = vld [vmem:[%s6 + $0xc] sm:$0xf]
  %v352 = vpack.c.bf16 %v342, %v342
  %v353 = vpack.c.bf16 %v345, %v345
  %355 = vrot.lane.b32.xlu0 %v352, 96
  %v356 = vpop.permute.xlu0 %355
  %vm357 = vcmask 64512
  %v359 = vsel %vm357, %v352, 0
  %v362 = vsel %vm357, %v356, 0
  %364 = vmatprep.subr.bf16.mxu0 0
  %365 = vmatpush1.bf16.xpose.msra.mxu0 %v362
  %366 = vmatprep.subr.bf16.mxu0 0
  %367 = vmatpush1.bf16.xpose.msra.mxu0 0
  %368 = vmatprep.subr.bf16.mxu0 0
  %369 = vmatpush1.bf16.xpose.msra.mxu0 0
  %370 = vmatprep.subr.bf16.mxu0 0
  %371 = vmatpush1.bf16.xpose.msra.mxu0 0
  %372 = vmatprep.subr.bf16.mxu0 0
  %373 = vmatpush1.bf16.xpose.msra.mxu0 0
  %374 = vmatprep.subr.bf16.mxu0 0
  %375 = vmatpush1.bf16.xpose.msra.mxu0 0
  %376 = vmatprep.subr.bf16.mxu0 0
  %377 = vmatpush1.bf16.xpose.msra.mxu0 0
  %378 = vmatprep.subr.bf16.mxu0 0
  %379 = vmatpush1.bf16.xpose.msra.mxu0 0
  %380 = vmatprep.subr.bf16.mxu0 0
  %381 = vmatpush1.bf16.xpose.msra.mxu0 0
  %382 = vmatprep.subr.bf16.mxu0 0
  %383 = vmatpush1.bf16.xpose.msra.mxu0 0
  %384 = vmatprep.subr.bf16.mxu0 0
  %385 = vmatpush1.bf16.xpose.msra.mxu0 0
  %386 = vmatprep.subr.bf16.mxu0 0
  %387 = vmatpush1.bf16.xpose.msra.mxu0 0
  %388 = vmatprep.subr.bf16.mxu0 0
  %389 = vmatpush1.bf16.xpose.msra.mxu0 0
  %390 = vmatprep.subr.bf16.mxu0 0
  %391 = vmatpush1.bf16.xpose.msra.mxu0 0
  %392 = vmatprep.subr.bf16.mxu0 0
  %393 = vmatpush1.bf16.xpose.msra.mxu0 0
  %394 = vmatprep.subr.bf16.mxu0 0
  %395 = vmatpush1.bf16.xpose.msra.mxu0 0
  %396 = vmatprep.mubr.bf16.mxu0 0
  %397 = vmatmul.mubr.bf16.gmra.mrb[0].mxu0 %v359
  %v398 = vpop.f32.mrb[0].mxu0
  %v399 = vadd.f32 %v240, %v398
  %v400 = vpop.f32.mrb[0].mxu0
  %v401 = vpop.f32.mrb[0].mxu0
  %v402 = vpop.f32.mrb[0].mxu0
  %403 = vdwg.mxu0
  %405 = vrot.lane.b32.xlu0 %v353, 96
  %v406 = vpop.permute.xlu0 %405
  %v408 = vsel %vm357, %v353, 0
  %v411 = vsel %vm357, %v406, 0
  %413 = vmatprep.subr.bf16.mxu0 0
  %414 = vmatpush1.bf16.xpose.msra.mxu0 %v411
  %415 = vmatprep.subr.bf16.mxu0 0
  %416 = vmatpush1.bf16.xpose.msra.mxu0 0
  %417 = vmatprep.subr.bf16.mxu0 0
  %418 = vmatpush1.bf16.xpose.msra.mxu0 0
  %419 = vmatprep.subr.bf16.mxu0 0
  %420 = vmatpush1.bf16.xpose.msra.mxu0 0
  %421 = vmatprep.subr.bf16.mxu0 0
  %422 = vmatpush1.bf16.xpose.msra.mxu0 0
  %423 = vmatprep.subr.bf16.mxu0 0
  %424 = vmatpush1.bf16.xpose.msra.mxu0 0
  %425 = vmatprep.subr.bf16.mxu0 0
  %426 = vmatpush1.bf16.xpose.msra.mxu0 0
  %427 = vmatprep.subr.bf16.mxu0 0
  %428 = vmatpush1.bf16.xpose.msra.mxu0 0
  %429 = vmatprep.subr.bf16.mxu0 0
  %430 = vmatpush1.bf16.xpose.msra.mxu0 0
  %431 = vmatprep.subr.bf16.mxu0 0
  %432 = vmatpush1.bf16.xpose.msra.mxu0 0
  %433 = vmatprep.subr.bf16.mxu0 0
  %434 = vmatpush1.bf16.xpose.msra.mxu0 0
  %435 = vmatprep.subr.bf16.mxu0 0
  %436 = vmatpush1.bf16.xpose.msra.mxu0 0
  %437 = vmatprep.subr.bf16.mxu0 0
  %438 = vmatpush1.bf16.xpose.msra.mxu0 0
  %439 = vmatprep.subr.bf16.mxu0 0
  %440 = vmatpush1.bf16.xpose.msra.mxu0 0
  %441 = vmatprep.subr.bf16.mxu0 0
  %442 = vmatpush1.bf16.xpose.msra.mxu0 0
  %443 = vmatprep.subr.bf16.mxu0 0
  %444 = vmatpush1.bf16.xpose.msra.mxu0 0
  %445 = vmatprep.mubr.bf16.mxu0 0
  %446 = vmatmul.mubr.bf16.gmra.mrb[0].mxu0 %v408
  %v447 = vpop.f32.mrb[0].mxu0
  %v448 = vadd.f32 %v240, %v447
  %v449 = vpop.f32.mrb[0].mxu0
  %v450 = vpop.f32.mrb[0].mxu0
  %v451 = vpop.f32.mrb[0].mxu0
  %452 = vdwg.mxu0
  %v453 = vsel %vm357, %v399, -inf
  %454 = vmax.xlane.f32.xlu0 %v453
  %v455 = vpop.xlane.xlu0 %454
  %v456 = vsel %vm357, %v448, -inf
  %457 = vmax.xlane.f32.xlu0 %v456
  %v458 = vpop.xlane.xlu0 %457
  %v459 = vsub.f32 %v399, %v455
  %v460 = vsub.f32 %v448, %v458
  %v461 = vmul.f32 %v459, 1.442695
  %v462 = vpow.pop %v461
  %v463 = vmul.f32 %v460, 1.442695
  %v464 = vpow.pop %v463
  %v465 = vsel %vm357, %v462, 0.0
  %466 = vadd.xlane.f32.xlu0 %v465
  %v467 = vpop.xlane.xlu0 %466
  %v468 = vsel %vm357, %v464, 0.0
  %469 = vadd.xlane.f32.xlu0 %v468
  %v470 = vpop.xlane.xlu0 %469
  %v471 = vrcp.pop %v467
  %v472 = vrcp.pop %v470
  %v473 = vmul.f32 %v462, %v471
  %v474 = vmul.f32 %v464, %v472
  %v475 = vpack.c.bf16 %v473, %v473
  %v476 = vpack.c.bf16 %v474, %v474
  %477 = vrot.lane.b32.xlu0 %v352, 64
  %v478 = vpop.permute.xlu0 %477
  %v480 = vsel %vm357, %v475, 0
  %vm482 = vcmask 1043456
  %v484 = vsel %vm482, %v478, 0
  %486 = vmatprep.subr.bf16.mxu0 0
  %487 = vmatpush1.bf16.msra.mxu0 %v484
  %488 = vmatprep.subr.bf16.mxu0 0
  %489 = vmatpush1.bf16.msra.mxu0 0
  %490 = vmatprep.subr.bf16.mxu0 0
  %491 = vmatpush1.bf16.msra.mxu0 0
  %492 = vmatprep.subr.bf16.mxu0 0
  %493 = vmatpush1.bf16.msra.mxu0 0
  %494 = vmatprep.subr.bf16.mxu0 0
  %495 = vmatpush1.bf16.msra.mxu0 0
  %496 = vmatprep.subr.bf16.mxu0 0
  %497 = vmatpush1.bf16.msra.mxu0 0
  %498 = vmatprep.subr.bf16.mxu0 0
  %499 = vmatpush1.bf16.msra.mxu0 0
  %500 = vmatprep.subr.bf16.mxu0 0
  %501 = vmatpush1.bf16.msra.mxu0 0
  %502 = vmatprep.subr.bf16.mxu0 0
  %503 = vmatpush1.bf16.msra.mxu0 0
  %504 = vmatprep.subr.bf16.mxu0 0
  %505 = vmatpush1.bf16.msra.mxu0 0
  %506 = vmatprep.subr.bf16.mxu0 0
  %507 = vmatpush1.bf16.msra.mxu0 0
  %508 = vmatprep.subr.bf16.mxu0 0
  %509 = vmatpush1.bf16.msra.mxu0 0
  %510 = vmatprep.subr.bf16.mxu0 0
  %511 = vmatpush1.bf16.msra.mxu0 0
  %512 = vmatprep.subr.bf16.mxu0 0
  %513 = vmatpush1.bf16.msra.mxu0 0
  %514 = vmatprep.subr.bf16.mxu0 0
  %515 = vmatpush1.bf16.msra.mxu0 0
  %516 = vmatprep.subr.bf16.mxu0 0
  %517 = vmatpush1.bf16.msra.mxu0 0
  %518 = vmatprep.mubr.bf16.mxu0 0
  %519 = vmatmul.mubr.bf16.gmra.mrb[0].mxu0 %v480
  %v520 = vpop.f32.mrb[0].mxu0
  %v521 = vadd.f32 0.0, %v520
  %v522 = vpop.f32.mrb[0].mxu0
  %v523 = vpop.f32.mrb[0].mxu0
  %v524 = vpop.f32.mrb[0].mxu0
  %525 = vdwg.mxu0
  %526 = vrot.lane.b32.xlu0 %v353, 64
  %v527 = vpop.permute.xlu0 %526
  %v529 = vsel %vm357, %v476, 0
  %v532 = vsel %vm482, %v527, 0
  %534 = vmatprep.subr.bf16.mxu0 0
  %535 = vmatpush1.bf16.msra.mxu0 %v532
  %536 = vmatprep.subr.bf16.mxu0 0
  %537 = vmatpush1.bf16.msra.mxu0 0
  %538 = vmatprep.subr.bf16.mxu0 0
  %539 = vmatpush1.bf16.msra.mxu0 0
  %540 = vmatprep.subr.bf16.mxu0 0
  %541 = vmatpush1.bf16.msra.mxu0 0
  %542 = vmatprep.subr.bf16.mxu0 0
  %543 = vmatpush1.bf16.msra.mxu0 0
  %544 = vmatprep.subr.bf16.mxu0 0
  %545 = vmatpush1.bf16.msra.mxu0 0
  %546 = vmatprep.subr.bf16.mxu0 0
  %547 = vmatpush1.bf16.msra.mxu0 0
  %548 = vmatprep.subr.bf16.mxu0 0
  %549 = vmatpush1.bf16.msra.mxu0 0
  %550 = vmatprep.subr.bf16.mxu0 0
  %551 = vmatpush1.bf16.msra.mxu0 0
  %552 = vmatprep.subr.bf16.mxu0 0
  %553 = vmatpush1.bf16.msra.mxu0 0
  %554 = vmatprep.subr.bf16.mxu0 0
  %555 = vmatpush1.bf16.msra.mxu0 0
  %556 = vmatprep.subr.bf16.mxu0 0
  %557 = vmatpush1.bf16.msra.mxu0 0
  %558 = vmatprep.subr.bf16.mxu0 0
  %559 = vmatpush1.bf16.msra.mxu0 0
  %560 = vmatprep.subr.bf16.mxu0 0
  %561 = vmatpush1.bf16.msra.mxu0 0
  %562 = vmatprep.subr.bf16.mxu0 0
  %563 = vmatpush1.bf16.msra.mxu0 0
  %564 = vmatprep.subr.bf16.mxu0 0
  %565 = vmatpush1.bf16.msra.mxu0 0
  %566 = vmatprep.mubr.bf16.mxu0 0
  %567 = vmatmul.mubr.bf16.gmra.mrb[0].mxu0 %v529
  %v568 = vpop.f32.mrb[0].mxu0
  %v569 = vadd.f32 0.0, %v568
  %v570 = vpop.f32.mrb[0].mxu0
  %v571 = vpop.f32.mrb[0].mxu0
  %v572 = vpop.f32.mrb[0].mxu0
  %573 = vdwg.mxu0
  %v574 = vpack.c.bf16 %v569, %v521
  %575 = vrot.lane.b32.xlu0 %v352, 120
  %v576 = vpop.permute.xlu0 %575
  %577 = vrot.lane.b32.xlu0 %v352, 88
  %v578 = vpop.permute.xlu0 %577
  %v580 = vsel %vm357, %v576, 0
  %v583 = vsel %vm357, %v578, 0
  %585 = vmatprep.subr.bf16.mxu0 0
  %586 = vmatpush1.bf16.xpose.msra.mxu0 %v583
  %587 = vmatprep.subr.bf16.mxu0 0
  %588 = vmatpush1.bf16.xpose.msra.mxu0 0
  %589 = vmatprep.subr.bf16.mxu0 0
  %590 = vmatpush1.bf16.xpose.msra.mxu0 0
  %591 = vmatprep.subr.bf16.mxu0 0
  %592 = vmatpush1.bf16.xpose.msra.mxu0 0
  %593 = vmatprep.subr.bf16.mxu0 0
  %594 = vmatpush1.bf16.xpose.msra.mxu0 0
  %595 = vmatprep.subr.bf16.mxu0 0
  %596 = vmatpush1.bf16.xpose.msra.mxu0 0
  %597 = vmatprep.subr.bf16.mxu0 0
  %598 = vmatpush1.bf16.xpose.msra.mxu0 0
  %599 = vmatprep.subr.bf16.mxu0 0
  %600 = vmatpush1.bf16.xpose.msra.mxu0 0
  %601 = vmatprep.subr.bf16.mxu0 0
  %602 = vmatpush1.bf16.xpose.msra.mxu0 0
  %603 = vmatprep.subr.bf16.mxu0 0
  %604 = vmatpush1.bf16.xpose.msra.mxu0 0
  %605 = vmatprep.subr.bf16.mxu0 0
  %606 = vmatpush1.bf16.xpose.msra.mxu0 0
  %607 = vmatprep.subr.bf16.mxu0 0
  %608 = vmatpush1.bf16.xpose.msra.mxu0 0
  %609 = vmatprep.subr.bf16.mxu0 0
  %610 = vmatpush1.bf16.xpose.msra.mxu0 0
  %611 = vmatprep.subr.bf16.mxu0 0
  %612 = vmatpush1.bf16.xpose.msra.mxu0 0
  %613 = vmatprep.subr.bf16.mxu0 0
  %614 = vmatpush1.bf16.xpose.msra.mxu0 0
  %615 = vmatprep.subr.bf16.mxu0 0
  %616 = vmatpush1.bf16.xpose.msra.mxu0 0
  %617 = vmatprep.mubr.bf16.mxu0 0
  %618 = vmatmul.mubr.bf16.gmra.mrb[0].mxu0 %v580
  %v619 = vpop.f32.mrb[0].mxu0
  %v620 = vadd.f32 %v240, %v619
  %v621 = vpop.f32.mrb[0].mxu0
  %v622 = vpop.f32.mrb[0].mxu0
  %v623 = vpop.f32.mrb[0].mxu0
  %624 = vdwg.mxu0
  %625 = vrot.lane.b32.xlu0 %v353, 120
  %v626 = vpop.permute.xlu0 %625
  %627 = vrot.lane.b32.xlu0 %v353, 88
  %v628 = vpop.permute.xlu0 %627
  %v630 = vsel %vm357, %v626, 0
  %v633 = vsel %vm357, %v628, 0
  %635 = vmatprep.subr.bf16.mxu0 0
  %636 = vmatpush1.bf16.xpose.msra.mxu0 %v633
  %637 = vmatprep.subr.bf16.mxu0 0
  %638 = vmatpush1.bf16.xpose.msra.mxu0 0
  %639 = vmatprep.subr.bf16.mxu0 0
  %640 = vmatpush1.bf16.xpose.msra.mxu0 0
  %641 = vmatprep.subr.bf16.mxu0 0
  %642 = vmatpush1.bf16.xpose.msra.mxu0 0
  %643 = vmatprep.subr.bf16.mxu0 0
  %644 = vmatpush1.bf16.xpose.msra.mxu0 0
  %645 = vmatprep.subr.bf16.mxu0 0
  %646 = vmatpush1.bf16.xpose.msra.mxu0 0
  %647 = vmatprep.subr.bf16.mxu0 0
  %648 = vmatpush1.bf16.xpose.msra.mxu0 0
  %649 = vmatprep.subr.bf16.mxu0 0
  %650 = vmatpush1.bf16.xpose.msra.mxu0 0
  %651 = vmatprep.subr.bf16.mxu0 0
  %652 = vmatpush1.bf16.xpose.msra.mxu0 0
  %653 = vmatprep.subr.bf16.mxu0 0
  %654 = vmatpush1.bf16.xpose.msra.mxu0 0
  %655 = vmatprep.subr.bf16.mxu0 0
  %656 = vmatpush1.bf16.xpose.msra.mxu0 0
  %657 = vmatprep.subr.bf16.mxu0 0
  %658 = vmatpush1.bf16.xpose.msra.mxu0 0
  %659 = vmatprep.subr.bf16.mxu0 0
  %660 = vmatpush1.bf16.xpose.msra.mxu0 0
  %661 = vmatprep.subr.bf16.mxu0 0
  %662 = vmatpush1.bf16.xpose.msra.mxu0 0
  %663 = vmatprep.subr.bf16.mxu0 0
  %664 = vmatpush1.bf16.xpose.msra.mxu0 0
  %665 = vmatprep.subr.bf16.mxu0 0
  %666 = vmatpush1.bf16.xpose.msra.mxu0 0
  %667 = vmatprep.mubr.bf16.mxu0 0
  %668 = vmatmul.mubr.bf16.gmra.mrb[0].mxu0 %v630
  %v669 = vpop.f32.mrb[0].mxu0
  %v670 = vadd.f32 %v240, %v669
  %v671 = vpop.f32.mrb[0].mxu0
  %v672 = vpop.f32.mrb[0].mxu0
  %v673 = vpop.f32.mrb[0].mxu0
  %674 = vdwg.mxu0
  %v675 = vsel %vm357, %v620, -inf
  %676 = vmax.xlane.f32.xlu0 %v675
  %v677 = vpop.xlane.xlu0 %676
  %v678 = vsel %vm357, %v670, -inf
  %679 = vmax.xlane.f32.xlu0 %v678
  %v680 = vpop.xlane.xlu0 %679
  %v681 = vsub.f32 %v620, %v677
  %v682 = vsub.f32 %v670, %v680
  %v683 = vmul.f32 %v681, 1.442695
  %v684 = vpow.pop %v683
  %v685 = vmul.f32 %v682, 1.442695
  %v686 = vpow.pop %v685
  %v687 = vsel %vm357, %v684, 0.0
  %688 = vadd.xlane.f32.xlu0 %v687
  %v689 = vpop.xlane.xlu0 %688
  %v690 = vsel %vm357, %v686, 0.0
  %691 = vadd.xlane.f32.xlu0 %v690
  %v692 = vpop.xlane.xlu0 %691
  %v693 = vrcp.pop %v689
  %v694 = vrcp.pop %v692
  %v695 = vmul.f32 %v684, %v693
  %v696 = vmul.f32 %v686, %v694
  %v697 = vpack.c.bf16 %v695, %v695
  %v698 = vpack.c.bf16 %v696, %v696
  %699 = vrot.lane.b32.xlu0 %v352, 56
  %v700 = vpop.permute.xlu0 %699
  %v702 = vsel %vm357, %v697, 0
  %v705 = vsel %vm482, %v700, 0
  %707 = vmatprep.subr.bf16.mxu0 0
  %708 = vmatpush1.bf16.msra.mxu0 %v705
  %709 = vmatprep.subr.bf16.mxu0 0
  %710 = vmatpush1.bf16.msra.mxu0 0
  %711 = vmatprep.subr.bf16.mxu0 0
  %712 = vmatpush1.bf16.msra.mxu0 0
  %713 = vmatprep.subr.bf16.mxu0 0
  %714 = vmatpush1.bf16.msra.mxu0 0
  %715 = vmatprep.subr.bf16.mxu0 0
  %716 = vmatpush1.bf16.msra.mxu0 0
  %717 = vmatprep.subr.bf16.mxu0 0
  %718 = vmatpush1.bf16.msra.mxu0 0
  %719 = vmatprep.subr.bf16.mxu0 0
  %720 = vmatpush1.bf16.msra.mxu0 0
  %721 = vmatprep.subr.bf16.mxu0 0
  %722 = vmatpush1.bf16.msra.mxu0 0
  %723 = vmatprep.subr.bf16.mxu0 0
  %724 = vmatpush1.bf16.msra.mxu0 0
  %725 = vmatprep.subr.bf16.mxu0 0
  %726 = vmatpush1.bf16.msra.mxu0 0
  %727 = vmatprep.subr.bf16.mxu0 0
  %728 = vmatpush1.bf16.msra.mxu0 0
  %729 = vmatprep.subr.bf16.mxu0 0
  %730 = vmatpush1.bf16.msra.mxu0 0
  %731 = vmatprep.subr.bf16.mxu0 0
  %732 = vmatpush1.bf16.msra.mxu0 0
  %733 = vmatprep.subr.bf16.mxu0 0
  %734 = vmatpush1.bf16.msra.mxu0 0
  %735 = vmatprep.subr.bf16.mxu0 0
  %736 = vmatpush1.bf16.msra.mxu0 0
  %737 = vmatprep.subr.bf16.mxu0 0
  %738 = vmatpush1.bf16.msra.mxu0 0
  %739 = vmatprep.mubr.bf16.mxu0 0
  %740 = vmatmul.mubr.bf16.gmra.mrb[0].mxu0 %v702
  %v741 = vpop.f32.mrb[0].mxu0
  %v742 = vadd.f32 0.0, %v741
  %v743 = vpop.f32.mrb[0].mxu0
  %v744 = vpop.f32.mrb[0].mxu0
  %v745 = vpop.f32.mrb[0].mxu0
  %746 = vdwg.mxu0
  %747 = vrot.lane.b32.xlu0 %v353, 56
  %v748 = vpop.permute.xlu0 %747
  %v750 = vsel %vm357, %v698, 0
  %v753 = vsel %vm482, %v748, 0
  %755 = vmatprep.subr.bf16.mxu0 0
  %756 = vmatpush1.bf16.msra.mxu0 %v753
  %757 = vmatprep.subr.bf16.mxu0 0
  %758 = vmatpush1.bf16.msra.mxu0 0
  %759 = vmatprep.subr.bf16.mxu0 0
  %760 = vmatpush1.bf16.msra.mxu0 0
  %761 = vmatprep.subr.bf16.mxu0 0
  %762 = vmatpush1.bf16.msra.mxu0 0
  %763 = vmatprep.subr.bf16.mxu0 0
  %764 = vmatpush1.bf16.msra.mxu0 0
  %765 = vmatprep.subr.bf16.mxu0 0
  %766 = vmatpush1.bf16.msra.mxu0 0
  %767 = vmatprep.subr.bf16.mxu0 0
  %768 = vmatpush1.bf16.msra.mxu0 0
  %769 = vmatprep.subr.bf16.mxu0 0
  %770 = vmatpush1.bf16.msra.mxu0 0
  %771 = vmatprep.subr.bf16.mxu0 0
  %772 = vmatpush1.bf16.msra.mxu0 0
  %773 = vmatprep.subr.bf16.mxu0 0
  %774 = vmatpush1.bf16.msra.mxu0 0
  %775 = vmatprep.subr.bf16.mxu0 0
  %776 = vmatpush1.bf16.msra.mxu0 0
  %777 = vmatprep.subr.bf16.mxu0 0
  %778 = vmatpush1.bf16.msra.mxu0 0
  %779 = vmatprep.subr.bf16.mxu0 0
  %780 = vmatpush1.bf16.msra.mxu0 0
  %781 = vmatprep.subr.bf16.mxu0 0
  %782 = vmatpush1.bf16.msra.mxu0 0
  %783 = vmatprep.subr.bf16.mxu0 0
  %784 = vmatpush1.bf16.msra.mxu0 0
  %785 = vmatprep.subr.bf16.mxu0 0
  %786 = vmatpush1.bf16.msra.mxu0 0
  %787 = vmatprep.mubr.bf16.mxu0 0
  %788 = vmatmul.mubr.bf16.gmra.mrb[0].mxu0 %v750
  %v789 = vpop.f32.mrb[0].mxu0
  %v790 = vadd.f32 0.0, %v789
  %v791 = vpop.f32.mrb[0].mxu0
  %v792 = vpop.f32.mrb[0].mxu0
  %v793 = vpop.f32.mrb[0].mxu0
  %794 = vdwg.mxu0
  %v795 = vpack.c.bf16 %v790, %v742
  %v797 = vsel %vm357, %v795, 0
  %v800 = vsel %vm482, %v349, 0
  %802 = vmatprep.subr.bf16.mxu0 0
  %803 = vmatpush1.bf16.msra.mxu0 %v800
  %804 = vmatprep.subr.bf16.mxu0 0
  %805 = vmatpush1.bf16.msra.mxu0 0
  %806 = vmatprep.subr.bf16.mxu0 0
  %807 = vmatpush1.bf16.msra.mxu0 0
  %808 = vmatprep.subr.bf16.mxu0 0
  %809 = vmatpush1.bf16.msra.mxu0 0
  %810 = vmatprep.subr.bf16.mxu0 0
  %811 = vmatpush1.bf16.msra.mxu0 0
  %812 = vmatprep.subr.bf16.mxu0 0
  %813 = vmatpush1.bf16.msra.mxu0 0
  %814 = vmatprep.subr.bf16.mxu0 0
  %815 = vmatpush1.bf16.msra.mxu0 0
  %816 = vmatprep.subr.bf16.mxu0 0
  %817 = vmatpush1.bf16.msra.mxu0 0
  %818 = vmatprep.subr.bf16.mxu0 0
  %819 = vmatpush1.bf16.msra.mxu0 0
  %820 = vmatprep.subr.bf16.mxu0 0
  %821 = vmatpush1.bf16.msra.mxu0 0
  %822 = vmatprep.subr.bf16.mxu0 0
  %823 = vmatpush1.bf16.msra.mxu0 0
  %824 = vmatprep.subr.bf16.mxu0 0
  %825 = vmatpush1.bf16.msra.mxu0 0
  %826 = vmatprep.subr.bf16.mxu0 0
  %827 = vmatpush1.bf16.msra.mxu0 0
  %828 = vmatprep.subr.bf16.mxu0 0
  %829 = vmatpush1.bf16.msra.mxu0 0
  %830 = vmatprep.subr.bf16.mxu0 0
  %831 = vmatpush1.bf16.msra.mxu0 0
  %832 = vmatprep.subr.bf16.mxu0 0
  %833 = vmatpush1.bf16.msra.mxu0 0
  %834 = vmatprep.mubr.bf16.mxu0 0
  %835 = vmatmul.mubr.bf16.gmra.mrb[0].mxu0 %v797
  %v836 = vpop.f32.mrb[0].mxu0
  %v837 = vadd.f32 0.0, %v836
  %v838 = vpop.f32.mrb[0].mxu0
  %v839 = vpop.f32.mrb[0].mxu0
  %v840 = vadd.f32 0.0, %v839
  %v841 = vpop.f32.mrb[0].mxu0
  %842 = vdwg.mxu0
  %v844 = vsel %vm357, %v574, 0
  %v847 = vsel %vm482, %v348, 0
  %849 = vmatprep.subr.bf16.mxu0 0
  %850 = vmatpush1.bf16.msra.mxu0 %v847
  %851 = vmatprep.subr.bf16.mxu0 0
  %852 = vmatpush1.bf16.msra.mxu0 0
  %853 = vmatprep.subr.bf16.mxu0 0
  %854 = vmatpush1.bf16.msra.mxu0 0
  %855 = vmatprep.subr.bf16.mxu0 0
  %856 = vmatpush1.bf16.msra.mxu0 0
  %857 = vmatprep.subr.bf16.mxu0 0
  %858 = vmatpush1.bf16.msra.mxu0 0
  %859 = vmatprep.subr.bf16.mxu0 0
  %860 = vmatpush1.bf16.msra.mxu0 0
  %861 = vmatprep.subr.bf16.mxu0 0
  %862 = vmatpush1.bf16.msra.mxu0 0
  %863 = vmatprep.subr.bf16.mxu0 0
  %864 = vmatpush1.bf16.msra.mxu0 0
  %865 = vmatprep.subr.bf16.mxu0 0
  %866 = vmatpush1.bf16.msra.mxu0 0
  %867 = vmatprep.subr.bf16.mxu0 0
  %868 = vmatpush1.bf16.msra.mxu0 0
  %869 = vmatprep.subr.bf16.mxu0 0
  %870 = vmatpush1.bf16.msra.mxu0 0
  %871 = vmatprep.subr.bf16.mxu0 0
  %872 = vmatpush1.bf16.msra.mxu0 0
  %873 = vmatprep.subr.bf16.mxu0 0
  %874 = vmatpush1.bf16.msra.mxu0 0
  %875 = vmatprep.subr.bf16.mxu0 0
  %876 = vmatpush1.bf16.msra.mxu0 0
  %877 = vmatprep.subr.bf16.mxu0 0
  %878 = vmatpush1.bf16.msra.mxu0 0
  %879 = vmatprep.subr.bf16.mxu0 0
  %880 = vmatpush1.bf16.msra.mxu0 0
  %881 = vmatprep.mubr.bf16.mxu0 0
  %882 = vmatmul.mubr.bf16.gmra.mrb[0].mxu0 %v844
  %v883 = vpop.f32.mrb[0].mxu0
  %v884 = vadd.f32 %v837, %v883
  %v885 = vpop.f32.mrb[0].mxu0
  %v886 = vpop.f32.mrb[0].mxu0
  %v887 = vadd.f32 %v840, %v886
  %v888 = vpop.f32.mrb[0].mxu0
  %889 = vdwg.mxu0
  %890 = vrot.lane.b32.xlu0 %v352, 112
  %v891 = vpop.permute.xlu0 %890
  %892 = vrot.lane.b32.xlu0 %v352, 80
  %v893 = vpop.permute.xlu0 %892
  %v895 = vsel %vm357, %v891, 0
  %v898 = vsel %vm357, %v893, 0
  %900 = vmatprep.subr.bf16.mxu0 0
  %901 = vmatpush1.bf16.xpose.msra.mxu0 %v898
  %902 = vmatprep.subr.bf16.mxu0 0
  %903 = vmatpush1.bf16.xpose.msra.mxu0 0
  %904 = vmatprep.subr.bf16.mxu0 0
  %905 = vmatpush1.bf16.xpose.msra.mxu0 0
  %906 = vmatprep.subr.bf16.mxu0 0
  %907 = vmatpush1.bf16.xpose.msra.mxu0 0
  %908 = vmatprep.subr.bf16.mxu0 0
  %909 = vmatpush1.bf16.xpose.msra.mxu0 0
  %910 = vmatprep.subr.bf16.mxu0 0
  %911 = vmatpush1.bf16.xpose.msra.mxu0 0
  %912 = vmatprep.subr.bf16.mxu0 0
  %913 = vmatpush1.bf16.xpose.msra.mxu0 0
  %914 = vmatprep.subr.bf16.mxu0 0
  %915 = vmatpush1.bf16.xpose.msra.mxu0 0
  %916 = vmatprep.subr.bf16.mxu0 0
  %917 = vmatpush1.bf16.xpose.msra.mxu0 0
  %918 = vmatprep.subr.bf16.mxu0 0
  %919 = vmatpush1.bf16.xpose.msra.mxu0 0
  %920 = vmatprep.subr.bf16.mxu0 0
  %921 = vmatpush1.bf16.xpose.msra.mxu0 0
  %922 = vmatprep.subr.bf16.mxu0 0
  %923 = vmatpush1.bf16.xpose.msra.mxu0 0
  %924 = vmatprep.subr.bf16.mxu0 0
  %925 = vmatpush1.bf16.xpose.msra.mxu0 0
  %926 = vmatprep.subr.bf16.mxu0 0
  %927 = vmatpush1.bf16.xpose.msra.mxu0 0
  %928 = vmatprep.subr.bf16.mxu0 0
  %929 = vmatpush1.bf16.xpose.msra.mxu0 0
  %930 = vmatprep.subr.bf16.mxu0 0
  %931 = vmatpush1.bf16.xpose.msra.mxu0 0
  %932 = vmatprep.mubr.bf16.mxu0 0
  %933 = vmatmul.mubr.bf16.gmra.mrb[0].mxu0 %v895
  %v934 = vpop.f32.mrb[0].mxu0
  %v935 = vadd.f32 %v240, %v934
  %v936 = vpop.f32.mrb[0].mxu0
  %v937 = vpop.f32.mrb[0].mxu0
  %v938 = vpop.f32.mrb[0].mxu0
  %939 = vdwg.mxu0
  %940 = vrot.lane.b32.xlu0 %v353, 112
  %v941 = vpop.permute.xlu0 %940
  %942 = vrot.lane.b32.xlu0 %v353, 80
  %v943 = vpop.permute.xlu0 %942
  %v945 = vsel %vm357, %v941, 0
  %v948 = vsel %vm357, %v943, 0
  %950 = vmatprep.subr.bf16.mxu0 0
  %951 = vmatpush1.bf16.xpose.msra.mxu0 %v948
  %952 = vmatprep.subr.bf16.mxu0 0
  %953 = vmatpush1.bf16.xpose.msra.mxu0 0
  %954 = vmatprep.subr.bf16.mxu0 0
  %955 = vmatpush1.bf16.xpose.msra.mxu0 0
  %956 = vmatprep.subr.bf16.mxu0 0
  %957 = vmatpush1.bf16.xpose.msra.mxu0 0
  %958 = vmatprep.subr.bf16.mxu0 0
  %959 = vmatpush1.bf16.xpose.msra.mxu0 0
  %960 = vmatprep.subr.bf16.mxu0 0
  %961 = vmatpush1.bf16.xpose.msra.mxu0 0
  %962 = vmatprep.subr.bf16.mxu0 0
  %963 = vmatpush1.bf16.xpose.msra.mxu0 0
  %964 = vmatprep.subr.bf16.mxu0 0
  %965 = vmatpush1.bf16.xpose.msra.mxu0 0
  %966 = vmatprep.subr.bf16.mxu0 0
  %967 = vmatpush1.bf16.xpose.msra.mxu0 0
  %968 = vmatprep.subr.bf16.mxu0 0
  %969 = vmatpush1.bf16.xpose.msra.mxu0 0
  %970 = vmatprep.subr.bf16.mxu0 0
  %971 = vmatpush1.bf16.xpose.msra.mxu0 0
  %972 = vmatprep.subr.bf16.mxu0 0
  %973 = vmatpush1.bf16.xpose.msra.mxu0 0
  %974 = vmatprep.subr.bf16.mxu0 0
  %975 = vmatpush1.bf16.xpose.msra.mxu0 0
  %976 = vmatprep.subr.bf16.mxu0 0
  %977 = vmatpush1.bf16.xpose.msra.mxu0 0
  %978 = vmatprep.subr.bf16.mxu0 0
  %979 = vmatpush1.bf16.xpose.msra.mxu0 0
  %980 = vmatprep.subr.bf16.mxu0 0
  %981 = vmatpush1.bf16.xpose.msra.mxu0 0
  %982 = vmatprep.mubr.bf16.mxu0 0
  %983 = vmatmul.mubr.bf16.gmra.mrb[0].mxu0 %v945
  %v984 = vpop.f32.mrb[0].mxu0
  %v985 = vadd.f32 %v240, %v984
  %v986 = vpop.f32.mrb[0].mxu0
  %v987 = vpop.f32.mrb[0].mxu0
  %v988 = vpop.f32.mrb[0].mxu0
  %989 = vdwg.mxu0
  %v990 = vsel %vm357, %v935, -inf
  %991 = vmax.xlane.f32.xlu0 %v990
  %v992 = vpop.xlane.xlu0 %991
  %v993 = vsel %vm357, %v985, -inf
  %994 = vmax.xlane.f32.xlu0 %v993
  %v995 = vpop.xlane.xlu0 %994
  %v996 = vsub.f32 %v935, %v992
  %v997 = vsub.f32 %v985, %v995
  %v998 = vmul.f32 %v996, 1.442695
  %v999 = vpow.pop %v998
  %v1000 = vmul.f32 %v997, 1.442695
  %v1001 = vpow.pop %v1000
  %v1002 = vsel %vm357, %v999, 0.0
  %1003 = vadd.xlane.f32.xlu0 %v1002
  %v1004 = vpop.xlane.xlu0 %1003
  %v1005 = vsel %vm357, %v1001, 0.0
  %1006 = vadd.xlane.f32.xlu0 %v1005
  %v1007 = vpop.xlane.xlu0 %1006
  %v1008 = vrcp.pop %v1004
  %v1009 = vrcp.pop %v1007
  %v1010 = vmul.f32 %v999, %v1008
  %v1011 = vmul.f32 %v1001, %v1009
  %v1012 = vpack.c.bf16 %v1010, %v1010
  %v1013 = vpack.c.bf16 %v1011, %v1011
  %1014 = vrot.lane.b32.xlu0 %v352, 48
  %v1015 = vpop.permute.xlu0 %1014
  %v1017 = vsel %vm357, %v1012, 0
  %v1020 = vsel %vm482, %v1015, 0
  %1022 = vmatprep.subr.bf16.mxu0 0
  %1023 = vmatpush1.bf16.msra.mxu0 %v1020
  %1024 = vmatprep.subr.bf16.mxu0 0
  %1025 = vmatpush1.bf16.msra.mxu0 0
  %1026 = vmatprep.subr.bf16.mxu0 0
  %1027 = vmatpush1.bf16.msra.mxu0 0
  %1028 = vmatprep.subr.bf16.mxu0 0
  %1029 = vmatpush1.bf16.msra.mxu0 0
  %1030 = vmatprep.subr.bf16.mxu0 0
  %1031 = vmatpush1.bf16.msra.mxu0 0
  %1032 = vmatprep.subr.bf16.mxu0 0
  %1033 = vmatpush1.bf16.msra.mxu0 0
  %1034 = vmatprep.subr.bf16.mxu0 0
  %1035 = vmatpush1.bf16.msra.mxu0 0
  %1036 = vmatprep.subr.bf16.mxu0 0
  %1037 = vmatpush1.bf16.msra.mxu0 0
  %1038 = vmatprep.subr.bf16.mxu0 0
  %1039 = vmatpush1.bf16.msra.mxu0 0
  %1040 = vmatprep.subr.bf16.mxu0 0
  %1041 = vmatpush1.bf16.msra.mxu0 0
  %1042 = vmatprep.subr.bf16.mxu0 0
  %1043 = vmatpush1.bf16.msra.mxu0 0
  %1044 = vmatprep.subr.bf16.mxu0 0
  %1045 = vmatpush1.bf16.msra.mxu0 0
  %1046 = vmatprep.subr.bf16.mxu0 0
  %1047 = vmatpush1.bf16.msra.mxu0 0
  %1048 = vmatprep.subr.bf16.mxu0 0
  %1049 = vmatpush1.bf16.msra.mxu0 0
  %1050 = vmatprep.subr.bf16.mxu0 0
  %1051 = vmatpush1.bf16.msra.mxu0 0
  %1052 = vmatprep.subr.bf16.mxu0 0
  %1053 = vmatpush1.bf16.msra.mxu0 0
  %1054 = vmatprep.mubr.bf16.mxu0 0
  %1055 = vmatmul.mubr.bf16.gmra.mrb[0].mxu0 %v1017
  %v1056 = vpop.f32.mrb[0].mxu0
  %v1057 = vadd.f32 0.0, %v1056
  %v1058 = vpop.f32.mrb[0].mxu0
  %v1059 = vpop.f32.mrb[0].mxu0
  %v1060 = vpop.f32.mrb[0].mxu0
  %1061 = vdwg.mxu0
  %1062 = vrot.lane.b32.xlu0 %v353, 48
  %v1063 = vpop.permute.xlu0 %1062
  %v1065 = vsel %vm357, %v1013, 0
  %v1068 = vsel %vm482, %v1063, 0
  %1070 = vmatprep.subr.bf16.mxu0 0
  %1071 = vmatpush1.bf16.msra.mxu0 %v1068
  %1072 = vmatprep.subr.bf16.mxu0 0
  %1073 = vmatpush1.bf16.msra.mxu0 0
  %1074 = vmatprep.subr.bf16.mxu0 0
  %1075 = vmatpush1.bf16.msra.mxu0 0
  %1076 = vmatprep.subr.bf16.mxu0 0
  %1077 = vmatpush1.bf16.msra.mxu0 0
  %1078 = vmatprep.subr.bf16.mxu0 0
  %1079 = vmatpush1.bf16.msra.mxu0 0
  %1080 = vmatprep.subr.bf16.mxu0 0
  %1081 = vmatpush1.bf16.msra.mxu0 0
  %1082 = vmatprep.subr.bf16.mxu0 0
  %1083 = vmatpush1.bf16.msra.mxu0 0
  %1084 = vmatprep.subr.bf16.mxu0 0
  %1085 = vmatpush1.bf16.msra.mxu0 0
  %1086 = vmatprep.subr.bf16.mxu0 0
  %1087 = vmatpush1.bf16.msra.mxu0 0
  %1088 = vmatprep.subr.bf16.mxu0 0
  %1089 = vmatpush1.bf16.msra.mxu0 0
  %1090 = vmatprep.subr.bf16.mxu0 0
  %1091 = vmatpush1.bf16.msra.mxu0 0
  %1092 = vmatprep.subr.bf16.mxu0 0
  %1093 = vmatpush1.bf16.msra.mxu0 0
  %1094 = vmatprep.subr.bf16.mxu0 0
  %1095 = vmatpush1.bf16.msra.mxu0 0
  %1096 = vmatprep.subr.bf16.mxu0 0
  %1097 = vmatpush1.bf16.msra.mxu0 0
  %1098 = vmatprep.subr.bf16.mxu0 0
  %1099 = vmatpush1.bf16.msra.mxu0 0
  %1100 = vmatprep.subr.bf16.mxu0 0
  %1101 = vmatpush1.bf16.msra.mxu0 0
  %1102 = vmatprep.mubr.bf16.mxu0 0
  %1103 = vmatmul.mubr.bf16.gmra.mrb[0].mxu0 %v1065
  %v1104 = vpop.f32.mrb[0].mxu0
  %v1105 = vadd.f32 0.0, %v1104
  %v1106 = vpop.f32.mrb[0].mxu0
  %v1107 = vpop.f32.mrb[0].mxu0
  %v1108 = vpop.f32.mrb[0].mxu0
  %1109 = vdwg.mxu0
  %v1110 = vpack.c.bf16 %v1105, %v1057
  %v1112 = vsel %vm357, %v1110, 0
  %v1115 = vsel %vm482, %v350, 0
  %1117 = vmatprep.subr.bf16.mxu0 0
  %1118 = vmatpush1.bf16.msra.mxu0 %v1115
  %1119 = vmatprep.subr.bf16.mxu0 0
  %1120 = vmatpush1.bf16.msra.mxu0 0
  %1121 = vmatprep.subr.bf16.mxu0 0
  %1122 = vmatpush1.bf16.msra.mxu0 0
  %1123 = vmatprep.subr.bf16.mxu0 0
  %1124 = vmatpush1.bf16.msra.mxu0 0
  %1125 = vmatprep.subr.bf16.mxu0 0
  %1126 = vmatpush1.bf16.msra.mxu0 0
  %1127 = vmatprep.subr.bf16.mxu0 0
  %1128 = vmatpush1.bf16.msra.mxu0 0
  %1129 = vmatprep.subr.bf16.mxu0 0
  %1130 = vmatpush1.bf16.msra.mxu0 0
  %1131 = vmatprep.subr.bf16.mxu0 0
  %1132 = vmatpush1.bf16.msra.mxu0 0
  %1133 = vmatprep.subr.bf16.mxu0 0
  %1134 = vmatpush1.bf16.msra.mxu0 0
  %1135 = vmatprep.subr.bf16.mxu0 0
  %1136 = vmatpush1.bf16.msra.mxu0 0
  %1137 = vmatprep.subr.bf16.mxu0 0
  %1138 = vmatpush1.bf16.msra.mxu0 0
  %1139 = vmatprep.subr.bf16.mxu0 0
  %1140 = vmatpush1.bf16.msra.mxu0 0
  %1141 = vmatprep.subr.bf16.mxu0 0
  %1142 = vmatpush1.bf16.msra.mxu0 0
  %1143 = vmatprep.subr.bf16.mxu0 0
  %1144 = vmatpush1.bf16.msra.mxu0 0
  %1145 = vmatprep.subr.bf16.mxu0 0
  %1146 = vmatpush1.bf16.msra.mxu0 0
  %1147 = vmatprep.subr.bf16.mxu0 0
  %1148 = vmatpush1.bf16.msra.mxu0 0
  %1149 = vmatprep.mubr.bf16.mxu0 0
  %1150 = vmatmul.mubr.bf16.gmra.mrb[0].mxu0 %v1112
  %v1151 = vpop.f32.mrb[0].mxu0
  %v1152 = vadd.f32 0.0, %v1151
  %v1153 = vpop.f32.mrb[0].mxu0
  %v1154 = vpop.f32.mrb[0].mxu0
  %v1155 = vadd.f32 0.0, %v1154
  %v1156 = vpop.f32.mrb[0].mxu0
  %1157 = vdwg.mxu0
  %v1158 = vadd.f32 %v884, %v1152
  %v1159 = vadd.f32 %v887, %v1155
  %1160 = vrot.lane.b32.xlu0 %v352, 104
  %v1161 = vpop.permute.xlu0 %1160
  %1162 = vrot.lane.b32.xlu0 %v352, 72
  %v1163 = vpop.permute.xlu0 %1162
  %v1165 = vsel %vm357, %v1161, 0
  %v1168 = vsel %vm357, %v1163, 0
  %1170 = vmatprep.subr.bf16.mxu0 0
  %1171 = vmatpush1.bf16.xpose.msra.mxu0 %v1168
  %1172 = vmatprep.subr.bf16.mxu0 0
  %1173 = vmatpush1.bf16.xpose.msra.mxu0 0
  %1174 = vmatprep.subr.bf16.mxu0 0
  %1175 = vmatpush1.bf16.xpose.msra.mxu0 0
  %1176 = vmatprep.subr.bf16.mxu0 0
  %1177 = vmatpush1.bf16.xpose.msra.mxu0 0
  %1178 = vmatprep.subr.bf16.mxu0 0
  %1179 = vmatpush1.bf16.xpose.msra.mxu0 0
  %1180 = vmatprep.subr.bf16.mxu0 0
  %1181 = vmatpush1.bf16.xpose.msra.mxu0 0
  %1182 = vmatprep.subr.bf16.mxu0 0
  %1183 = vmatpush1.bf16.xpose.msra.mxu0 0
  %1184 = vmatprep.subr.bf16.mxu0 0
  %1185 = vmatpush1.bf16.xpose.msra.mxu0 0
  %1186 = vmatprep.subr.bf16.mxu0 0
  %1187 = vmatpush1.bf16.xpose.msra.mxu0 0
  %1188 = vmatprep.subr.bf16.mxu0 0
  %1189 = vmatpush1.bf16.xpose.msra.mxu0 0
  %1190 = vmatprep.subr.bf16.mxu0 0
  %1191 = vmatpush1.bf16.xpose.msra.mxu0 0
  %1192 = vmatprep.subr.bf16.mxu0 0
  %1193 = vmatpush1.bf16.xpose.msra.mxu0 0
  %1194 = vmatprep.subr.bf16.mxu0 0
  %1195 = vmatpush1.bf16.xpose.msra.mxu0 0
  %1196 = vmatprep.subr.bf16.mxu0 0
  %1197 = vmatpush1.bf16.xpose.msra.mxu0 0
  %1198 = vmatprep.subr.bf16.mxu0 0
  %1199 = vmatpush1.bf16.xpose.msra.mxu0 0
  %1200 = vmatprep.subr.bf16.mxu0 0
  %1201 = vmatpush1.bf16.xpose.msra.mxu0 0
  %1202 = vmatprep.mubr.bf16.mxu0 0
  %1203 = vmatmul.mubr.bf16.gmra.mrb[0].mxu0 %v1165
  %v1204 = vpop.f32.mrb[0].mxu0
  %v1205 = vadd.f32 %v240, %v1204
  %v1206 = vpop.f32.mrb[0].mxu0
  %v1207 = vpop.f32.mrb[0].mxu0
  %v1208 = vpop.f32.mrb[0].mxu0
  %1209 = vdwg.mxu0
  %1210 = vrot.lane.b32.xlu0 %v353, 104
  %v1211 = vpop.permute.xlu0 %1210
  %1212 = vrot.lane.b32.xlu0 %v353, 72
  %v1213 = vpop.permute.xlu0 %1212
  %v1215 = vsel %vm357, %v1211, 0
  %v1218 = vsel %vm357, %v1213, 0
  %1220 = vmatprep.subr.bf16.mxu0 0
  %1221 = vmatpush1.bf16.xpose.msra.mxu0 %v1218
  %1222 = vmatprep.subr.bf16.mxu0 0
  %1223 = vmatpush1.bf16.xpose.msra.mxu0 0
  %1224 = vmatprep.subr.bf16.mxu0 0
  %1225 = vmatpush1.bf16.xpose.msra.mxu0 0
  %1226 = vmatprep.subr.bf16.mxu0 0
  %1227 = vmatpush1.bf16.xpose.msra.mxu0 0
  %1228 = vmatprep.subr.bf16.mxu0 0
  %1229 = vmatpush1.bf16.xpose.msra.mxu0 0
  %1230 = vmatprep.subr.bf16.mxu0 0
  %1231 = vmatpush1.bf16.xpose.msra.mxu0 0
  %1232 = vmatprep.subr.bf16.mxu0 0
  %1233 = vmatpush1.bf16.xpose.msra.mxu0 0
  %1234 = vmatprep.subr.bf16.mxu0 0
  %1235 = vmatpush1.bf16.xpose.msra.mxu0 0
  %1236 = vmatprep.subr.bf16.mxu0 0
  %1237 = vmatpush1.bf16.xpose.msra.mxu0 0
  %1238 = vmatprep.subr.bf16.mxu0 0
  %1239 = vmatpush1.bf16.xpose.msra.mxu0 0
  %1240 = vmatprep.subr.bf16.mxu0 0
  %1241 = vmatpush1.bf16.xpose.msra.mxu0 0
  %1242 = vmatprep.subr.bf16.mxu0 0
  %1243 = vmatpush1.bf16.xpose.msra.mxu0 0
  %1244 = vmatprep.subr.bf16.mxu0 0
  %1245 = vmatpush1.bf16.xpose.msra.mxu0 0
  %1246 = vmatprep.subr.bf16.mxu0 0
  %1247 = vmatpush1.bf16.xpose.msra.mxu0 0
  %1248 = vmatprep.subr.bf16.mxu0 0
  %1249 = vmatpush1.bf16.xpose.msra.mxu0 0
  %1250 = vmatprep.subr.bf16.mxu0 0
  %1251 = vmatpush1.bf16.xpose.msra.mxu0 0
  %1252 = vmatprep.mubr.bf16.mxu0 0
  %1253 = vmatmul.mubr.bf16.gmra.mrb[0].mxu0 %v1215
  %v1254 = vpop.f32.mrb[0].mxu0
  %v1255 = vadd.f32 %v240, %v1254
  %v1256 = vpop.f32.mrb[0].mxu0
  %v1257 = vpop.f32.mrb[0].mxu0
  %v1258 = vpop.f32.mrb[0].mxu0
  %1259 = vdwg.mxu0
  %v1260 = vsel %vm357, %v1205, -inf
  %1261 = vmax.xlane.f32.xlu0 %v1260
  %v1262 = vpop.xlane.xlu0 %1261
  %v1263 = vsel %vm357, %v1255, -inf
  %1264 = vmax.xlane.f32.xlu0 %v1263
  %v1265 = vpop.xlane.xlu0 %1264
  %v1266 = vsub.f32 %v1205, %v1262
  %v1267 = vsub.f32 %v1255, %v1265
  %v1268 = vmul.f32 %v1266, 1.442695
  %v1269 = vpow.pop %v1268
  %v1270 = vmul.f32 %v1267, 1.442695
  %v1271 = vpow.pop %v1270
  %v1272 = vsel %vm357, %v1269, 0.0
  %1273 = vadd.xlane.f32.xlu0 %v1272
  %v1274 = vpop.xlane.xlu0 %1273
  %v1275 = vsel %vm357, %v1271, 0.0
  %1276 = vadd.xlane.f32.xlu0 %v1275
  %v1277 = vpop.xlane.xlu0 %1276
  %v1278 = vrcp.pop %v1274
  %v1279 = vrcp.pop %v1277
  %v1280 = vmul.f32 %v1269, %v1278
  %v1281 = vmul.f32 %v1271, %v1279
  %v1282 = vpack.c.bf16 %v1280, %v1280
  %v1283 = vpack.c.bf16 %v1281, %v1281
  %1284 = vrot.lane.b32.xlu0 %v352, 40
  %v1285 = vpop.permute.xlu0 %1284
  %v1287 = vsel %vm357, %v1282, 0
  %v1290 = vsel %vm482, %v1285, 0
  %1292 = vmatprep.subr.bf16.mxu0 0
  %1293 = vmatpush1.bf16.msra.mxu0 %v1290
  %1294 = vmatprep.subr.bf16.mxu0 0
  %1295 = vmatpush1.bf16.msra.mxu0 0
  %1296 = vmatprep.subr.bf16.mxu0 0
  %1297 = vmatpush1.bf16.msra.mxu0 0
  %1298 = vmatprep.subr.bf16.mxu0 0
  %1299 = vmatpush1.bf16.msra.mxu0 0
  %1300 = vmatprep.subr.bf16.mxu0 0
  %1301 = vmatpush1.bf16.msra.mxu0 0
  %1302 = vmatprep.subr.bf16.mxu0 0
  %1303 = vmatpush1.bf16.msra.mxu0 0
  %1304 = vmatprep.subr.bf16.mxu0 0
  %1305 = vmatpush1.bf16.msra.mxu0 0
  %1306 = vmatprep.subr.bf16.mxu0 0
  %1307 = vmatpush1.bf16.msra.mxu0 0
  %1308 = vmatprep.subr.bf16.mxu0 0
  %1309 = vmatpush1.bf16.msra.mxu0 0
  %1310 = vmatprep.subr.bf16.mxu0 0
  %1311 = vmatpush1.bf16.msra.mxu0 0
  %1312 = vmatprep.subr.bf16.mxu0 0
  %1313 = vmatpush1.bf16.msra.mxu0 0
  %1314 = vmatprep.subr.bf16.mxu0 0
  %1315 = vmatpush1.bf16.msra.mxu0 0
  %1316 = vmatprep.subr.bf16.mxu0 0
  %1317 = vmatpush1.bf16.msra.mxu0 0
  %1318 = vmatprep.subr.bf16.mxu0 0
  %1319 = vmatpush1.bf16.msra.mxu0 0
  %1320 = vmatprep.subr.bf16.mxu0 0
  %1321 = vmatpush1.bf16.msra.mxu0 0
  %1322 = vmatprep.subr.bf16.mxu0 0
  %1323 = vmatpush1.bf16.msra.mxu0 0
  %1324 = vmatprep.mubr.bf16.mxu0 0
  %1325 = vmatmul.mubr.bf16.gmra.mrb[0].mxu0 %v1287
  %v1326 = vpop.f32.mrb[0].mxu0
  %v1327 = vadd.f32 0.0, %v1326
  %v1328 = vpop.f32.mrb[0].mxu0
  %v1329 = vpop.f32.mrb[0].mxu0
  %v1330 = vpop.f32.mrb[0].mxu0
  %1331 = vdwg.mxu0
  %1332 = vrot.lane.b32.xlu0 %v353, 40
  %v1333 = vpop.permute.xlu0 %1332
  %v1335 = vsel %vm357, %v1283, 0
  %v1338 = vsel %vm482, %v1333, 0
  %1340 = vmatprep.subr.bf16.mxu0 0
  %1341 = vmatpush1.bf16.msra.mxu0 %v1338
  %1342 = vmatprep.subr.bf16.mxu0 0
  %1343 = vmatpush1.bf16.msra.mxu0 0
  %1344 = vmatprep.subr.bf16.mxu0 0
  %1345 = vmatpush1.bf16.msra.mxu0 0
  %1346 = vmatprep.subr.bf16.mxu0 0
  %1347 = vmatpush1.bf16.msra.mxu0 0
  %1348 = vmatprep.subr.bf16.mxu0 0
  %1349 = vmatpush1.bf16.msra.mxu0 0
  %1350 = vmatprep.subr.bf16.mxu0 0
  %1351 = vmatpush1.bf16.msra.mxu0 0
  %1352 = vmatprep.subr.bf16.mxu0 0
  %1353 = vmatpush1.bf16.msra.mxu0 0
  %1354 = vmatprep.subr.bf16.mxu0 0
  %1355 = vmatpush1.bf16.msra.mxu0 0
  %1356 = vmatprep.subr.bf16.mxu0 0
  %1357 = vmatpush1.bf16.msra.mxu0 0
  %1358 = vmatprep.subr.bf16.mxu0 0
  %1359 = vmatpush1.bf16.msra.mxu0 0
  %1360 = vmatprep.subr.bf16.mxu0 0
  %1361 = vmatpush1.bf16.msra.mxu0 0
  %1362 = vmatprep.subr.bf16.mxu0 0
  %1363 = vmatpush1.bf16.msra.mxu0 0
  %1364 = vmatprep.subr.bf16.mxu0 0
  %1365 = vmatpush1.bf16.msra.mxu0 0
  %1366 = vmatprep.subr.bf16.mxu0 0
  %1367 = vmatpush1.bf16.msra.mxu0 0
  %1368 = vmatprep.subr.bf16.mxu0 0
  %1369 = vmatpush1.bf16.msra.mxu0 0
  %1370 = vmatprep.subr.bf16.mxu0 0
  %1371 = vmatpush1.bf16.msra.mxu0 0
  %1372 = vmatprep.mubr.bf16.mxu0 0
  %1373 = vmatmul.mubr.bf16.gmra.mrb[0].mxu0 %v1335
  %v1374 = vpop.f32.mrb[0].mxu0
  %v1375 = vadd.f32 0.0, %v1374
  %v1376 = vpop.f32.mrb[0].mxu0
  %v1377 = vpop.f32.mrb[0].mxu0
  %v1378 = vpop.f32.mrb[0].mxu0
  %1379 = vdwg.mxu0
  %v1380 = vpack.c.bf16 %v1375, %v1327
  %v1382 = vsel %vm357, %v1380, 0
  %v1385 = vsel %vm482, %v351, 0
  %1387 = vmatprep.subr.bf16.mxu0 0
  %1388 = vmatpush1.bf16.msra.mxu0 %v1385
  %1389 = vmatprep.subr.bf16.mxu0 0
  %1390 = vmatpush1.bf16.msra.mxu0 0
  %1391 = vmatprep.subr.bf16.mxu0 0
  %1392 = vmatpush1.bf16.msra.mxu0 0
  %1393 = vmatprep.subr.bf16.mxu0 0
  %1394 = vmatpush1.bf16.msra.mxu0 0
  %1395 = vmatprep.subr.bf16.mxu0 0
  %1396 = vmatpush1.bf16.msra.mxu0 0
  %1397 = vmatprep.subr.bf16.mxu0 0
  %1398 = vmatpush1.bf16.msra.mxu0 0
  %1399 = vmatprep.subr.bf16.mxu0 0
  %1400 = vmatpush1.bf16.msra.mxu0 0
  %1401 = vmatprep.subr.bf16.mxu0 0
  %1402 = vmatpush1.bf16.msra.mxu0 0
  %1403 = vmatprep.subr.bf16.mxu0 0
  %1404 = vmatpush1.bf16.msra.mxu0 0
  %1405 = vmatprep.subr.bf16.mxu0 0
  %1406 = vmatpush1.bf16.msra.mxu0 0
  %1407 = vmatprep.subr.bf16.mxu0 0
  %1408 = vmatpush1.bf16.msra.mxu0 0
  %1409 = vmatprep.subr.bf16.mxu0 0
  %1410 = vmatpush1.bf16.msra.mxu0 0
  %1411 = vmatprep.subr.bf16.mxu0 0
  %1412 = vmatpush1.bf16.msra.mxu0 0
  %1413 = vmatprep.subr.bf16.mxu0 0
  %1414 = vmatpush1.bf16.msra.mxu0 0
  %1415 = vmatprep.subr.bf16.mxu0 0
  %1416 = vmatpush1.bf16.msra.mxu0 0
  %1417 = vmatprep.subr.bf16.mxu0 0
  %1418 = vmatpush1.bf16.msra.mxu0 0
  %1419 = vmatprep.mubr.bf16.mxu0 0
  %1420 = vmatmul.mubr.bf16.gmra.mrb[0].mxu0 %v1382
  %v1421 = vpop.f32.mrb[0].mxu0
  %v1422 = vadd.f32 0.0, %v1421
  %v1423 = vpop.f32.mrb[0].mxu0
  %v1424 = vpop.f32.mrb[0].mxu0
  %v1425 = vadd.f32 0.0, %v1424
  %v1426 = vpop.f32.mrb[0].mxu0
  %1427 = vdwg.mxu0
  %v1428 = vadd.f32 %v1158, %v1422
  %v1429 = vadd.f32 %v1159, %v1425
  %v1430 = vadd.f32 %v231, %v1428
  %v1431 = vadd.f32 %v234, %v1429
  %v1432 = vld [vmem:[%s7] sm:$0x1]
  %v1434 = vlaneseq
  %v1435 = vshrl.u32 %v1434, 7
  %v1436 = vsub.s32 0, %v1435
  %v1437 = vrot.slane %v1432, %v1436
  %v1439 = vadd.f32 %v1430, %v1437
  %v1440 = vadd.f32 %v1431, %v1437
  %v1441 = vld [vmem:[%s8] sm:$0x1]
  %v1442 = vld [vmem:[%s9] sm:$0x1]
  %v1443 = vsel %vm243, %v1439, 0.0
  %1444 = vadd.xlane.f32.xlu0 %v1443
  %v1445 = vpop.xlane.xlu0 %1444
  %v1446 = vsel %vm243, %v1440, 0.0
  %1447 = vadd.xlane.f32.xlu0 %v1446
  %v1448 = vpop.xlane.xlu0 %1447
  %v1449 = vmul.f32 %v1445, %v250
  %v1450 = vmul.f32 %v1448, %v250
  %v1451 = vsub.f32 %v1439, %v1449
  %v1452 = vsub.f32 %v1440, %v1450
  %v1453 = vmul.f32 %v1451, %v1451
  %v1454 = vmul.f32 %v1452, %v1452
  %v1455 = vsel %vm243, %v1453, 0.0
  %1456 = vadd.xlane.f32.xlu0 %v1455
  %v1457 = vpop.xlane.xlu0 %1456
  %v1458 = vsel %vm243, %v1454, 0.0
  %1459 = vadd.xlane.f32.xlu0 %v1458
  %v1460 = vpop.xlane.xlu0 %1459
  %v1461 = vmul.f32 %v1457, %v250
  %v1462 = vmul.f32 %v1460, %v250
  %v1463 = vadd.f32 %v1461, 1e-05
  %v1464 = vadd.f32 %v1462, 1e-05
  %v1465 = vrsqrt.pop %v1463
  %v1466 = vrsqrt.pop %v1464
  %v1467 = vmul.f32 %v1451, %v1465
  %v1468 = vmul.f32 %v1452, %v1466
  %v1470 = vlaneseq
  %v1471 = vshrl.u32 %v1470, 7
  %v1472 = vsub.s32 0, %v1471
  %v1473 = vrot.slane %v1441, %v1472
  %v1475 = vmul.f32 %v1467, %v1473
  %v1476 = vmul.f32 %v1468, %v1473
  %v1478 = vlaneseq
  %v1479 = vshrl.u32 %v1478, 7
  %v1480 = vsub.s32 0, %v1479
  %v1481 = vrot.slane %v1442, %v1480
  %v1483 = vadd.f32 %v1475, %v1481
  %v1484 = vadd.f32 %v1476, %v1481
  %v1485 = vpack.c.bf16 %v1484, %v1483
  %v1486 = vld [vmem:[%s10] sm:$0xf]
  %v1487 = vld [vmem:[%s10 + $0x4] sm:$0xf]
  %v1488 = vld [vmem:[%s10 + $0x8] sm:$0xf]
  %v1489 = vld [vmem:[%s10 + $0xc] sm:$0xf]
  %v1490 = vld [vmem:[%s11] sm:$0x1]
  %v1492 = vlaneseq
  %v1493 = vshrl.u32 %v1492, 7
  %v1494 = vsub.s32 0, %v1493
  %v1495 = vrot.slane %v1490, %v1494
  %v1501 = vunpack.c.l.b16 %v1486
  %v1502 = vunpack.c.l.b16 %v1487
  %v1503 = vunpack.c.l.b16 %v1488
  %v1504 = vunpack.c.l.b16 %v1489
  %v1505 = vpack.c.b16 %v1502, %v1501
  %v1506 = vpack.c.b16 %v1504, %v1503
  %v1510 = vsel %vm243, %v1485, 0
  %1512 = vmatprep.subr.bf16.mxu0 0
  %1513 = vmatpush1.bf16.msra.mxu0 %v1505
  %1514 = vmatprep.subr.bf16.mxu0 0
  %1515 = vmatpush1.bf16.msra.mxu0 %v1506
  %1516 = vmatprep.subr.bf16.mxu0 0
  %1517 = vmatpush1.bf16.msra.mxu0 0
  %1518 = vmatprep.subr.bf16.mxu0 0
  %1519 = vmatpush1.bf16.msra.mxu0 0
  %1520 = vmatprep.subr.bf16.mxu0 0
  %1521 = vmatpush1.bf16.msra.mxu0 0
  %1522 = vmatprep.subr.bf16.mxu0 0
  %1523 = vmatpush1.bf16.msra.mxu0 0
  %1524 = vmatprep.subr.bf16.mxu0 0
  %1525 = vmatpush1.bf16.msra.mxu0 0
  %1526 = vmatprep.subr.bf16.mxu0 0
  %1527 = vmatpush1.bf16.msra.mxu0 0
  %1528 = vmatprep.subr.bf16.mxu0 0
  %1529 = vmatpush1.bf16.msra.mxu0 0
  %1530 = vmatprep.subr.bf16.mxu0 0
  %1531 = vmatpush1.bf16.msra.mxu0 0
  %1532 = vmatprep.subr.bf16.mxu0 0
  %1533 = vmatpush1.bf16.msra.mxu0 0
  %1534 = vmatprep.subr.bf16.mxu0 0
  %1535 = vmatpush1.bf16.msra.mxu0 0
  %1536 = vmatprep.subr.bf16.mxu0 0
  %1537 = vmatpush1.bf16.msra.mxu0 0
  %1538 = vmatprep.subr.bf16.mxu0 0
  %1539 = vmatpush1.bf16.msra.mxu0 0
  %1540 = vmatprep.subr.bf16.mxu0 0
  %1541 = vmatpush1.bf16.msra.mxu0 0
  %1542 = vmatprep.subr.bf16.mxu0 0
  %1543 = vmatpush1.bf16.msra.mxu0 0
  %1544 = vmatprep.mubr.bf16.mxu0 0
  %1545 = vmatmul.mubr.bf16.gmra.mrb[0].mxu0 %v1510
  %v1546 = vpop.f32.mrb[0].mxu0
  %v1547 = vadd.f32 %v1495, %v1546
  %v1548 = vpop.f32.mrb[0].mxu0
  %v1549 = vpop.f32.mrb[0].mxu0
  %v1550 = vadd.f32 %v1495, %v1549
  %v1551 = vpop.f32.mrb[0].mxu0
  %1552 = vdwg.mxu0
  %v1553 = vmul.f32 %v1547, 0.5
  %v1554 = vmul.f32 %v1550, 0.5
  %v1555 = vmul.f32 %v1547, 0.70710677
  %v1556 = vmul.f32 %v1550, 0.70710677
  %v1557 = verf.f32.pop %v1555
  %v1558 = verf.f32.pop %v1556
  %v1559 = vadd.f32 %v1557, 1.0
  %v1560 = vadd.f32 %v1558, 1.0
  %v1561 = vmul.f32 %v1553, %v1559
  %v1562 = vmul.f32 %v1554, %v1560
  %v1563 = vpack.c.bf16 %v1562, %v1561
  %v1564 = vld [vmem:[%s12] sm:$0xf]
  %v1565 = vld [vmem:[%s12 + $0x4] sm:$0xf]
  %v1566 = vld [vmem:[%s12 + $0x8] sm:$0xf]
  %v1567 = vld [vmem:[%s12 + $0xc] sm:$0xf]
  %v1568 = vld [vmem:[%s12 + $0x10] sm:$0xf]
  %v1569 = vld [vmem:[%s12 + $0x14] sm:$0xf]
  %v1570 = vld [vmem:[%s12 + $0x18] sm:$0xf]
  %v1571 = vld [vmem:[%s12 + $0x1c] sm:$0xf]
  %v1572 = vld [vmem:[%s12 + $0x20] sm:$0xf]
  %v1573 = vld [vmem:[%s12 + $0x24] sm:$0xf]
  %v1574 = vld [vmem:[%s12 + $0x28] sm:$0xf]
  %v1575 = vld [vmem:[%s12 + $0x2c] sm:$0xf]
  %v1576 = vld [vmem:[%s12 + $0x30] sm:$0xf]
  %v1577 = vld [vmem:[%s12 + $0x34] sm:$0xf]
  %v1578 = vld [vmem:[%s12 + $0x38] sm:$0xf]
  %v1579 = vld [vmem:[%s12 + $0x3c] sm:$0xf]
  %v1580 = vld [vmem:[%s13] sm:$0x1]
  %v1582 = vlaneseq
  %v1583 = vshrl.u32 %v1582, 7
  %v1584 = vsub.s32 0, %v1583
  %v1585 = vrot.slane %v1580, %v1584
  %v1603 = vunpack.c.l.b16 %v1564
  %v1604 = vunpack.c.l.b16 %v1565
  %v1605 = vunpack.c.l.b16 %v1566
  %v1606 = vunpack.c.l.b16 %v1567
  %v1607 = vunpack.c.l.b16 %v1568
  %v1608 = vunpack.c.l.b16 %v1569
  %v1609 = vunpack.c.l.b16 %v1570
  %v1610 = vunpack.c.l.b16 %v1571
  %v1611 = vunpack.c.l.b16 %v1572
  %v1612 = vunpack.c.l.b16 %v1573
  %v1613 = vunpack.c.l.b16 %v1574
  %v1614 = vunpack.c.l.b16 %v1575
  %v1615 = vunpack.c.l.b16 %v1576
  %v1616 = vunpack.c.l.b16 %v1577
  %v1617 = vunpack.c.l.b16 %v1578
  %v1618 = vunpack.c.l.b16 %v1579
  %v1619 = vpack.c.b16 %v1604, %v1603
  %v1620 = vpack.c.b16 %v1606, %v1605
  %v1621 = vpack.c.b16 %v1608, %v1607
  %v1622 = vpack.c.b16 %v1610, %v1609
  %v1623 = vpack.c.b16 %v1612, %v1611
  %v1624 = vpack.c.b16 %v1614, %v1613
  %v1625 = vpack.c.b16 %v1616, %v1615
  %v1626 = vpack.c.b16 %v1618, %v1617
  %1635 = vmatprep.subr.bf16.mxu0 0
  %1636 = vmatpush1.bf16.msra.mxu0 %v1619
  %1637 = vmatprep.subr.bf16.mxu0 0
  %1638 = vmatpush1.bf16.msra.mxu0 %v1620
  %1639 = vmatprep.subr.bf16.mxu0 0
  %1640 = vmatpush1.bf16.msra.mxu0 %v1621
  %1641 = vmatprep.subr.bf16.mxu0 0
  %1642 = vmatpush1.bf16.msra.mxu0 %v1622
  %1643 = vmatprep.subr.bf16.mxu0 0
  %1644 = vmatpush1.bf16.msra.mxu0 %v1623
  %1645 = vmatprep.subr.bf16.mxu0 0
  %1646 = vmatpush1.bf16.msra.mxu0 %v1624
  %1647 = vmatprep.subr.bf16.mxu0 0
  %1648 = vmatpush1.bf16.msra.mxu0 %v1625
  %1649 = vmatprep.subr.bf16.mxu0 0
  %1650 = vmatpush1.bf16.msra.mxu0 %v1626
  %1651 = vmatprep.subr.bf16.mxu0 0
  %1652 = vmatpush1.bf16.msra.mxu0 0
  %1653 = vmatprep.subr.bf16.mxu0 0
  %1654 = vmatpush1.bf16.msra.mxu0 0
  %1655 = vmatprep.subr.bf16.mxu0 0
  %1656 = vmatpush1.bf16.msra.mxu0 0
  %1657 = vmatprep.subr.bf16.mxu0 0
  %1658 = vmatpush1.bf16.msra.mxu0 0
  %1659 = vmatprep.subr.bf16.mxu0 0
  %1660 = vmatpush1.bf16.msra.mxu0 0
  %1661 = vmatprep.subr.bf16.mxu0 0
  %1662 = vmatpush1.bf16.msra.mxu0 0
  %1663 = vmatprep.subr.bf16.mxu0 0
  %1664 = vmatpush1.bf16.msra.mxu0 0
  %1665 = vmatprep.subr.bf16.mxu0 0
  %1666 = vmatpush1.bf16.msra.mxu0 0
  %1667 = vmatprep.mubr.bf16.mxu0 0
  %1668 = vmatmul.mubr.bf16.gmra.mrb[0].mxu0 %v1563
  %v1669 = vpop.f32.mrb[0].mxu0
  %v1670 = vadd.f32 %v1585, %v1669
  %v1671 = vpop.f32.mrb[0].mxu0
  %v1672 = vpop.f32.mrb[0].mxu0
  %v1673 = vadd.f32 %v1585, %v1672
  %v1674 = vpop.f32.mrb[0].mxu0
  %1675 = vdwg.mxu0
  %v1676 = vadd.f32 %v1439, %v1670
  %v1677 = vadd.f32 %v1440, %v1673
  %s1678 = scalar_lea.vmem %s3, 1
  %v1679 = vld [vmem:[%s1678] sm:$0x1]
  %s1680 = scalar_lea.vmem %s4, 1
  %v1681 = vld [vmem:[%s1680] sm:$0x1]
  %v1682 = vsel %vm243, %v1676, 0.0
  %1683 = vadd.xlane.f32.xlu0 %v1682
  %v1684 = vpop.xlane.xlu0 %1683
  %v1685 = vsel %vm243, %v1677, 0.0
  %1686 = vadd.xlane.f32.xlu0 %v1685
  %v1687 = vpop.xlane.xlu0 %1686
  %v1688 = vmul.f32 %v1684, %v250
  %v1689 = vmul.f32 %v1687, %v250
  %v1690 = vsub.f32 %v1676, %v1688
  %v1691 = vsub.f32 %v1677, %v1689
  %v1692 = vmul.f32 %v1690, %v1690
  %v1693 = vmul.f32 %v1691, %v1691
  %v1694 = vsel %vm243, %v1692, 0.0
  %1695 = vadd.xlane.f32.xlu0 %v1694
  %v1696 = vpop.xlane.xlu0 %1695
  %v1697 = vsel %vm243, %v1693, 0.0
  %1698 = vadd.xlane.f32.xlu0 %v1697
  %v1699 = vpop.xlane.xlu0 %1698
  %v1700 = vmul.f32 %v1696, %v250
  %v1701 = vmul.f32 %v1699, %v250
  %v1702 = vadd.f32 %v1700, 1e-05
  %v1703 = vadd.f32 %v1701, 1e-05
  %v1704 = vrsqrt.pop %v1702
  %v1705 = vrsqrt.pop %v1703
  %v1706 = vmul.f32 %v1690, %v1704
  %v1707 = vmul.f32 %v1691, %v1705
  %v1709 = vlaneseq
  %v1710 = vshrl.u32 %v1709, 7
  %v1711 = vsub.s32 0, %v1710
  %v1712 = vrot.slane %v1679, %v1711
  %v1714 = vmul.f32 %v1706, %v1712
  %v1715 = vmul.f32 %v1707, %v1712
  %v1717 = vlaneseq
  %v1718 = vshrl.u32 %v1717, 7
  %v1719 = vsub.s32 0, %v1718
  %v1720 = vrot.slane %v1681, %v1719
  %v1722 = vadd.f32 %v1714, %v1720
  %v1723 = vadd.f32 %v1715, %v1720
  %v1724 = vpack.c.bf16 %v1723, %v1722
  %s1725 = scalar_lea.vmem %s5, 16
  %v1726 = vld [vmem:[%s1725] sm:$0xf]
  %v1727 = vld [vmem:[%s1725 + $0x4] sm:$0xf]
  %v1728 = vld [vmem:[%s1725 + $0x8] sm:$0xf]
  %v1729 = vld [vmem:[%s1725 + $0xc] sm:$0xf]
  %v1734 = vunpack.c.l.b16 %v1726
  %v1735 = vunpack.c.l.b16 %v1727
  %v1736 = vunpack.c.l.b16 %v1728
  %v1737 = vunpack.c.l.b16 %v1729
  %v1738 = vpack.c.b16 %v1735, %v1734
  %v1739 = vpack.c.b16 %v1737, %v1736
  %v1743 = vsel %vm243, %v1724, 0
  %1745 = vmatprep.subr.bf16.mxu0 0
  %1746 = vmatpush1.bf16.msra.mxu0 %v1738
  %1747 = vmatprep.subr.bf16.mxu0 0
  %1748 = vmatpush1.bf16.msra.mxu0 %v1739
  %1749 = vmatprep.subr.bf16.mxu0 0
  %1750 = vmatpush1.bf16.msra.mxu0 0
  %1751 = vmatprep.subr.bf16.mxu0 0
  %1752 = vmatpush1.bf16.msra.mxu0 0
  %1753 = vmatprep.subr.bf16.mxu0 0
  %1754 = vmatpush1.bf16.msra.mxu0 0
  %1755 = vmatprep.subr.bf16.mxu0 0
  %1756 = vmatpush1.bf16.msra.mxu0 0
  %1757 = vmatprep.subr.bf16.mxu0 0
  %1758 = vmatpush1.bf16.msra.mxu0 0
  %1759 = vmatprep.subr.bf16.mxu0 0
  %1760 = vmatpush1.bf16.msra.mxu0 0
  %1761 = vmatprep.subr.bf16.mxu0 0
  %1762 = vmatpush1.bf16.msra.mxu0 0
  %1763 = vmatprep.subr.bf16.mxu0 0
  %1764 = vmatpush1.bf16.msra.mxu0 0
  %1765 = vmatprep.subr.bf16.mxu0 0
  %1766 = vmatpush1.bf16.msra.mxu0 0
  %1767 = vmatprep.subr.bf16.mxu0 0
  %1768 = vmatpush1.bf16.msra.mxu0 0
  %1769 = vmatprep.subr.bf16.mxu0 0
  %1770 = vmatpush1.bf16.msra.mxu0 0
  %1771 = vmatprep.subr.bf16.mxu0 0
  %1772 = vmatpush1.bf16.msra.mxu0 0
  %1773 = vmatprep.subr.bf16.mxu0 0
  %1774 = vmatpush1.bf16.msra.mxu0 0
  %1775 = vmatprep.subr.bf16.mxu0 0
  %1776 = vmatpush1.bf16.msra.mxu0 0
  %1777 = vmatprep.mubr.bf16.mxu0 0
  %1778 = vmatmul.mubr.bf16.gmra.mrb[0].mxu0 %v1743
  %v1779 = vpop.f32.mrb[0].mxu0
  %v1780 = vadd.f32 0.0, %v1779
  %v1781 = vpop.f32.mrb[0].mxu0
  %v1782 = vpop.f32.mrb[0].mxu0
  %v1783 = vadd.f32 0.0, %v1782
  %v1784 = vpop.f32.mrb[0].mxu0
  %1785 = vdwg.mxu0
  %s1786 = scalar_lea.vmem %s6, 16
  %v1787 = vld [vmem:[%s1786] sm:$0xf]
  %v1788 = vld [vmem:[%s1786 + $0x4] sm:$0xf]
  %v1789 = vld [vmem:[%s1786 + $0x8] sm:$0xf]
  %v1790 = vld [vmem:[%s1786 + $0xc] sm:$0xf]
  %v1791 = vpack.c.bf16 %v1780, %v1780
  %v1792 = vpack.c.bf16 %v1783, %v1783
  %1794 = vrot.lane.b32.xlu0 %v1791, 96
  %v1795 = vpop.permute.xlu0 %1794
  %v1797 = vsel %vm357, %v1791, 0
  %v1800 = vsel %vm357, %v1795, 0
  %1802 = vmatprep.subr.bf16.mxu0 0
  %1803 = vmatpush1.bf16.xpose.msra.mxu0 %v1800
  %1804 = vmatprep.subr.bf16.mxu0 0
  %1805 = vmatpush1.bf16.xpose.msra.mxu0 0
  %1806 = vmatprep.subr.bf16.mxu0 0
  %1807 = vmatpush1.bf16.xpose.msra.mxu0 0
  %1808 = vmatprep.subr.bf16.mxu0 0
  %1809 = vmatpush1.bf16.xpose.msra.mxu0 0
  %1810 = vmatprep.subr.bf16.mxu0 0
  %1811 = vmatpush1.bf16.xpose.msra.mxu0 0
  %1812 = vmatprep.subr.bf16.mxu0 0
  %1813 = vmatpush1.bf16.xpose.msra.mxu0 0
  %1814 = vmatprep.subr.bf16.mxu0 0
  %1815 = vmatpush1.bf16.xpose.msra.mxu0 0
  %1816 = vmatprep.subr.bf16.mxu0 0
  %1817 = vmatpush1.bf16.xpose.msra.mxu0 0
  %1818 = vmatprep.subr.bf16.mxu0 0
  %1819 = vmatpush1.bf16.xpose.msra.mxu0 0
  %1820 = vmatprep.subr.bf16.mxu0 0
  %1821 = vmatpush1.bf16.xpose.msra.mxu0 0
  %1822 = vmatprep.subr.bf16.mxu0 0
  %1823 = vmatpush1.bf16.xpose.msra.mxu0 0
  %1824 = vmatprep.subr.bf16.mxu0 0
  %1825 = vmatpush1.bf16.xpose.msra.mxu0 0
  %1826 = vmatprep.subr.bf16.mxu0 0
  %1827 = vmatpush1.bf16.xpose.msra.mxu0 0
  %1828 = vmatprep.subr.bf16.mxu0 0
  %1829 = vmatpush1.bf16.xpose.msra.mxu0 0
  %1830 = vmatprep.subr.bf16.mxu0 0
  %1831 = vmatpush1.bf16.xpose.msra.mxu0 0
  %1832 = vmatprep.subr.bf16.mxu0 0
  %1833 = vmatpush1.bf16.xpose.msra.mxu0 0
  %1834 = vmatprep.mubr.bf16.mxu0 0
  %1835 = vmatmul.mubr.bf16.gmra.mrb[0].mxu0 %v1797
  %v1836 = vpop.f32.mrb[0].mxu0
  %v1837 = vadd.f32 %v240, %v1836
  %v1838 = vpop.f32.mrb[0].mxu0
  %v1839 = vpop.f32.mrb[0].mxu0
  %v1840 = vpop.f32.mrb[0].mxu0
  %1841 = vdwg.mxu0
  %1843 = vrot.lane.b32.xlu0 %v1792, 96
  %v1844 = vpop.permute.xlu0 %1843
  %v1846 = vsel %vm357, %v1792, 0
  %v1849 = vsel %vm357, %v1844, 0
  %1851 = vmatprep.subr.bf16.mxu0 0
  %1852 = vmatpush1.bf16.xpose.msra.mxu0 %v1849
  %1853 = vmatprep.subr.bf16.mxu0 0
  %1854 = vmatpush1.bf16.xpose.msra.mxu0 0
  %1855 = vmatprep.subr.bf16.mxu0 0
  %1856 = vmatpush1.bf16.xpose.msra.mxu0 0
  %1857 = vmatprep.subr.bf16.mxu0 0
  %1858 = vmatpush1.bf16.xpose.msra.mxu0 0
  %1859 = vmatprep.subr.bf16.mxu0 0
  %1860 = vmatpush1.bf16.xpose.msra.mxu0 0
  %1861 = vmatprep.subr.bf16.mxu0 0
  %1862 = vmatpush1.bf16.xpose.msra.mxu0 0
  %1863 = vmatprep.subr.bf16.mxu0 0
  %1864 = vmatpush1.bf16.xpose.msra.mxu0 0
  %1865 = vmatprep.subr.bf16.mxu0 0
  %1866 = vmatpush1.bf16.xpose.msra.mxu0 0
  %1867 = vmatprep.subr.bf16.mxu0 0
  %1868 = vmatpush1.bf16.xpose.msra.mxu0 0
  %1869 = vmatprep.subr.bf16.mxu0 0
  %1870 = vmatpush1.bf16.xpose.msra.mxu0 0
  %1871 = vmatprep.subr.bf16.mxu0 0
  %1872 = vmatpush1.bf16.xpose.msra.mxu0 0
  %1873 = vmatprep.subr.bf16.mxu0 0
  %1874 = vmatpush1.bf16.xpose.msra.mxu0 0
  %1875 = vmatprep.subr.bf16.mxu0 0
  %1876 = vmatpush1.bf16.xpose.msra.mxu0 0
  %1877 = vmatprep.subr.bf16.mxu0 0
  %1878 = vmatpush1.bf16.xpose.msra.mxu0 0
  %1879 = vmatprep.subr.bf16.mxu0 0
  %1880 = vmatpush1.bf16.xpose.msra.mxu0 0
  %1881 = vmatprep.subr.bf16.mxu0 0
  %1882 = vmatpush1.bf16.xpose.msra.mxu0 0
  %1883 = vmatprep.mubr.bf16.mxu0 0
  %1884 = vmatmul.mubr.bf16.gmra.mrb[0].mxu0 %v1846
  %v1885 = vpop.f32.mrb[0].mxu0
  %v1886 = vadd.f32 %v240, %v1885
  %v1887 = vpop.f32.mrb[0].mxu0
  %v1888 = vpop.f32.mrb[0].mxu0
  %v1889 = vpop.f32.mrb[0].mxu0
  %1890 = vdwg.mxu0
  %v1891 = vsel %vm357, %v1837, -inf
  %1892 = vmax.xlane.f32.xlu0 %v1891
  %v1893 = vpop.xlane.xlu0 %1892
  %v1894 = vsel %vm357, %v1886, -inf
  %1895 = vmax.xlane.f32.xlu0 %v1894
  %v1896 = vpop.xlane.xlu0 %1895
  %v1897 = vsub.f32 %v1837, %v1893
  %v1898 = vsub.f32 %v1886, %v1896
  %v1899 = vmul.f32 %v1897, 1.442695
  %v1900 = vpow.pop %v1899
  %v1901 = vmul.f32 %v1898, 1.442695
  %v1902 = vpow.pop %v1901
  %v1903 = vsel %vm357, %v1900, 0.0
  %1904 = vadd.xlane.f32.xlu0 %v1903
  %v1905 = vpop.xlane.xlu0 %1904
  %v1906 = vsel %vm357, %v1902, 0.0
  %1907 = vadd.xlane.f32.xlu0 %v1906
  %v1908 = vpop.xlane.xlu0 %1907
  %v1909 = vrcp.pop %v1905
  %v1910 = vrcp.pop %v1908
  %v1911 = vmul.f32 %v1900, %v1909
  %v1912 = vmul.f32 %v1902, %v1910
  %v1913 = vpack.c.bf16 %v1911, %v1911
  %v1914 = vpack.c.bf16 %v1912, %v1912
  %1915 = vrot.lane.b32.xlu0 %v1791, 64
  %v1916 = vpop.permute.xlu0 %1915
  %v1918 = vsel %vm357, %v1913, 0
  %v1921 = vsel %vm482, %v1916, 0
  %1923 = vmatprep.subr.bf16.mxu0 0
  %1924 = vmatpush1.bf16.msra.mxu0 %v1921
  %1925 = vmatprep.subr.bf16.mxu0 0
  %1926 = vmatpush1.bf16.msra.mxu0 0
  %1927 = vmatprep.subr.bf16.mxu0 0
  %1928 = vmatpush1.bf16.msra.mxu0 0
  %1929 = vmatprep.subr.bf16.mxu0 0
  %1930 = vmatpush1.bf16.msra.mxu0 0
  %1931 = vmatprep.subr.bf16.mxu0 0
  %1932 = vmatpush1.bf16.msra.mxu0 0
  %1933 = vmatprep.subr.bf16.mxu0 0
  %1934 = vmatpush1.bf16.msra.mxu0 0
  %1935 = vmatprep.subr.bf16.mxu0 0
  %1936 = vmatpush1.bf16.msra.mxu0 0
  %1937 = vmatprep.subr.bf16.mxu0 0
  %1938 = vmatpush1.bf16.msra.mxu0 0
  %1939 = vmatprep.subr.bf16.mxu0 0
  %1940 = vmatpush1.bf16.msra.mxu0 0
  %1941 = vmatprep.subr.bf16.mxu0 0
  %1942 = vmatpush1.bf16.msra.mxu0 0
  %1943 = vmatprep.subr.bf16.mxu0 0
  %1944 = vmatpush1.bf16.msra.mxu0 0
  %1945 = vmatprep.subr.bf16.mxu0 0
  %1946 = vmatpush1.bf16.msra.mxu0 0
  %1947 = vmatprep.subr.bf16.mxu0 0
  %1948 = vmatpush1.bf16.msra.mxu0 0
  %1949 = vmatprep.subr.bf16.mxu0 0
  %1950 = vmatpush1.bf16.msra.mxu0 0
  %1951 = vmatprep.subr.bf16.mxu0 0
  %1952 = vmatpush1.bf16.msra.mxu0 0
  %1953 = vmatprep.subr.bf16.mxu0 0
  %1954 = vmatpush1.bf16.msra.mxu0 0
  %1955 = vmatprep.mubr.bf16.mxu0 0
  %1956 = vmatmul.mubr.bf16.gmra.mrb[0].mxu0 %v1918
  %v1957 = vpop.f32.mrb[0].mxu0
  %v1958 = vadd.f32 0.0, %v1957
  %v1959 = vpop.f32.mrb[0].mxu0
  %v1960 = vpop.f32.mrb[0].mxu0
  %v1961 = vpop.f32.mrb[0].mxu0
  %1962 = vdwg.mxu0
  %1963 = vrot.lane.b32.xlu0 %v1792, 64
  %v1964 = vpop.permute.xlu0 %1963
  %v1966 = vsel %vm357, %v1914, 0
  %v1969 = vsel %vm482, %v1964, 0
  %1971 = vmatprep.subr.bf16.mxu0 0
  %1972 = vmatpush1.bf16.msra.mxu0 %v1969
  %1973 = vmatprep.subr.bf16.mxu0 0
  %1974 = vmatpush1.bf16.msra.mxu0 0
  %1975 = vmatprep.subr.bf16.mxu0 0
  %1976 = vmatpush1.bf16.msra.mxu0 0
  %1977 = vmatprep.subr.bf16.mxu0 0
  %1978 = vmatpush1.bf16.msra.mxu0 0
  %1979 = vmatprep.subr.bf16.mxu0 0
  %1980 = vmatpush1.bf16.msra.mxu0 0
  %1981 = vmatprep.subr.bf16.mxu0 0
  %1982 = vmatpush1.bf16.msra.mxu0 0
  %1983 = vmatprep.subr.bf16.mxu0 0
  %1984 = vmatpush1.bf16.msra.mxu0 0
  %1985 = vmatprep.subr.bf16.mxu0 0
  %1986 = vmatpush1.bf16.msra.mxu0 0
  %1987 = vmatprep.subr.bf16.mxu0 0
  %1988 = vmatpush1.bf16.msra.mxu0 0
  %1989 = vmatprep.subr.bf16.mxu0 0
  %1990 = vmatpush1.bf16.msra.mxu0 0
  %1991 = vmatprep.subr.bf16.mxu0 0
  %1992 = vmatpush1.bf16.msra.mxu0 0
  %1993 = vmatprep.subr.bf16.mxu0 0
  %1994 = vmatpush1.bf16.msra.mxu0 0
  %1995 = vmatprep.subr.bf16.mxu0 0
  %1996 = vmatpush1.bf16.msra.mxu0 0
  %1997 = vmatprep.subr.bf16.mxu0 0
  %1998 = vmatpush1.bf16.msra.mxu0 0
  %1999 = vmatprep.subr.bf16.mxu0 0
  %2000 = vmatpush1.bf16.msra.mxu0 0
  %2001 = vmatprep.subr.bf16.mxu0 0
  %2002 = vmatpush1.bf16.msra.mxu0 0
  %2003 = vmatprep.mubr.bf16.mxu0 0
  %2004 = vmatmul.mubr.bf16.gmra.mrb[0].mxu0 %v1966
  %v2005 = vpop.f32.mrb[0].mxu0
  %v2006 = vadd.f32 0.0, %v2005
  %v2007 = vpop.f32.mrb[0].mxu0
  %v2008 = vpop.f32.mrb[0].mxu0
  %v2009 = vpop.f32.mrb[0].mxu0
  %2010 = vdwg.mxu0
  %v2011 = vpack.c.bf16 %v2006, %v1958
  %2012 = vrot.lane.b32.xlu0 %v1791, 120
  %v2013 = vpop.permute.xlu0 %2012
  %2014 = vrot.lane.b32.xlu0 %v1791, 88
  %v2015 = vpop.permute.xlu0 %2014
  %v2017 = vsel %vm357, %v2013, 0
  %v2020 = vsel %vm357, %v2015, 0
  %2022 = vmatprep.subr.bf16.mxu0 0
  %2023 = vmatpush1.bf16.xpose.msra.mxu0 %v2020
  %2024 = vmatprep.subr.bf16.mxu0 0
  %2025 = vmatpush1.bf16.xpose.msra.mxu0 0
  %2026 = vmatprep.subr.bf16.mxu0 0
  %2027 = vmatpush1.bf16.xpose.msra.mxu0 0
  %2028 = vmatprep.subr.bf16.mxu0 0
  %2029 = vmatpush1.bf16.xpose.msra.mxu0 0
  %2030 = vmatprep.subr.bf16.mxu0 0
  %2031 = vmatpush1.bf16.xpose.msra.mxu0 0
  %2032 = vmatprep.subr.bf16.mxu0 0
  %2033 = vmatpush1.bf16.xpose.msra.mxu0 0
  %2034 = vmatprep.subr.bf16.mxu0 0
  %2035 = vmatpush1.bf16.xpose.msra.mxu0 0
  %2036 = vmatprep.subr.bf16.mxu0 0
  %2037 = vmatpush1.bf16.xpose.msra.mxu0 0
  %2038 = vmatprep.subr.bf16.mxu0 0
  %2039 = vmatpush1.bf16.xpose.msra.mxu0 0
  %2040 = vmatprep.subr.bf16.mxu0 0
  %2041 = vmatpush1.bf16.xpose.msra.mxu0 0
  %2042 = vmatprep.subr.bf16.mxu0 0
  %2043 = vmatpush1.bf16.xpose.msra.mxu0 0
  %2044 = vmatprep.subr.bf16.mxu0 0
  %2045 = vmatpush1.bf16.xpose.msra.mxu0 0
  %2046 = vmatprep.subr.bf16.mxu0 0
  %2047 = vmatpush1.bf16.xpose.msra.mxu0 0
  %2048 = vmatprep.subr.bf16.mxu0 0
  %2049 = vmatpush1.bf16.xpose.msra.mxu0 0
  %2050 = vmatprep.subr.bf16.mxu0 0
  %2051 = vmatpush1.bf16.xpose.msra.mxu0 0
  %2052 = vmatprep.subr.bf16.mxu0 0
  %2053 = vmatpush1.bf16.xpose.msra.mxu0 0
  %2054 = vmatprep.mubr.bf16.mxu0 0
  %2055 = vmatmul.mubr.bf16.gmra.mrb[0].mxu0 %v2017
  %v2056 = vpop.f32.mrb[0].mxu0
  %v2057 = vadd.f32 %v240, %v2056
  %v2058 = vpop.f32.mrb[0].mxu0
  %v2059 = vpop.f32.mrb[0].mxu0
  %v2060 = vpop.f32.mrb[0].mxu0
  %2061 = vdwg.mxu0
  %2062 = vrot.lane.b32.xlu0 %v1792, 120
  %v2063 = vpop.permute.xlu0 %2062
  %2064 = vrot.lane.b32.xlu0 %v1792, 88
  %v2065 = vpop.permute.xlu0 %2064
  %v2067 = vsel %vm357, %v2063, 0
  %v2070 = vsel %vm357, %v2065, 0
  %2072 = vmatprep.subr.bf16.mxu0 0
  %2073 = vmatpush1.bf16.xpose.msra.mxu0 %v2070
  %2074 = vmatprep.subr.bf16.mxu0 0
  %2075 = vmatpush1.bf16.xpose.msra.mxu0 0
  %2076 = vmatprep.subr.bf16.mxu0 0
  %2077 = vmatpush1.bf16.xpose.msra.mxu0 0
  %2078 = vmatprep.subr.bf16.mxu0 0
  %2079 = vmatpush1.bf16.xpose.msra.mxu0 0
  %2080 = vmatprep.subr.bf16.mxu0 0
  %2081 = vmatpush1.bf16.xpose.msra.mxu0 0
  %2082 = vmatprep.subr.bf16.mxu0 0
  %2083 = vmatpush1.bf16.xpose.msra.mxu0 0
  %2084 = vmatprep.subr.bf16.mxu0 0
  %2085 = vmatpush1.bf16.xpose.msra.mxu0 0
  %2086 = vmatprep.subr.bf16.mxu0 0
  %2087 = vmatpush1.bf16.xpose.msra.mxu0 0
  %2088 = vmatprep.subr.bf16.mxu0 0
  %2089 = vmatpush1.bf16.xpose.msra.mxu0 0
  %2090 = vmatprep.subr.bf16.mxu0 0
  %2091 = vmatpush1.bf16.xpose.msra.mxu0 0
  %2092 = vmatprep.subr.bf16.mxu0 0
  %2093 = vmatpush1.bf16.xpose.msra.mxu0 0
  %2094 = vmatprep.subr.bf16.mxu0 0
  %2095 = vmatpush1.bf16.xpose.msra.mxu0 0
  %2096 = vmatprep.subr.bf16.mxu0 0
  %2097 = vmatpush1.bf16.xpose.msra.mxu0 0
  %2098 = vmatprep.subr.bf16.mxu0 0
  %2099 = vmatpush1.bf16.xpose.msra.mxu0 0
  %2100 = vmatprep.subr.bf16.mxu0 0
  %2101 = vmatpush1.bf16.xpose.msra.mxu0 0
  %2102 = vmatprep.subr.bf16.mxu0 0
  %2103 = vmatpush1.bf16.xpose.msra.mxu0 0
  %2104 = vmatprep.mubr.bf16.mxu0 0
  %2105 = vmatmul.mubr.bf16.gmra.mrb[0].mxu0 %v2067
  %v2106 = vpop.f32.mrb[0].mxu0
  %v2107 = vadd.f32 %v240, %v2106
  %v2108 = vpop.f32.mrb[0].mxu0
  %v2109 = vpop.f32.mrb[0].mxu0
  %v2110 = vpop.f32.mrb[0].mxu0
  %2111 = vdwg.mxu0
  %v2112 = vsel %vm357, %v2057, -inf
  %2113 = vmax.xlane.f32.xlu0 %v2112
  %v2114 = vpop.xlane.xlu0 %2113
  %v2115 = vsel %vm357, %v2107, -inf
  %2116 = vmax.xlane.f32.xlu0 %v2115
  %v2117 = vpop.xlane.xlu0 %2116
  %v2118 = vsub.f32 %v2057, %v2114
  %v2119 = vsub.f32 %v2107, %v2117
  %v2120 = vmul.f32 %v2118, 1.442695
  %v2121 = vpow.pop %v2120
  %v2122 = vmul.f32 %v2119, 1.442695
  %v2123 = vpow.pop %v2122
  %v2124 = vsel %vm357, %v2121, 0.0
  %2125 = vadd.xlane.f32.xlu0 %v2124
  %v2126 = vpop.xlane.xlu0 %2125
  %v2127 = vsel %vm357, %v2123, 0.0
  %2128 = vadd.xlane.f32.xlu0 %v2127
  %v2129 = vpop.xlane.xlu0 %2128
  %v2130 = vrcp.pop %v2126
  %v2131 = vrcp.pop %v2129
  %v2132 = vmul.f32 %v2121, %v2130
  %v2133 = vmul.f32 %v2123, %v2131
  %v2134 = vpack.c.bf16 %v2132, %v2132
  %v2135 = vpack.c.bf16 %v2133, %v2133
  %2136 = vrot.lane.b32.xlu0 %v1791, 56
  %v2137 = vpop.permute.xlu0 %2136
  %v2139 = vsel %vm357, %v2134, 0
  %v2142 = vsel %vm482, %v2137, 0
  %2144 = vmatprep.subr.bf16.mxu0 0
  %2145 = vmatpush1.bf16.msra.mxu0 %v2142
  %2146 = vmatprep.subr.bf16.mxu0 0
  %2147 = vmatpush1.bf16.msra.mxu0 0
  %2148 = vmatprep.subr.bf16.mxu0 0
  %2149 = vmatpush1.bf16.msra.mxu0 0
  %2150 = vmatprep.subr.bf16.mxu0 0
  %2151 = vmatpush1.bf16.msra.mxu0 0
  %2152 = vmatprep.subr.bf16.mxu0 0
  %2153 = vmatpush1.bf16.msra.mxu0 0
  %2154 = vmatprep.subr.bf16.mxu0 0
  %2155 = vmatpush1.bf16.msra.mxu0 0
  %2156 = vmatprep.subr.bf16.mxu0 0
  %2157 = vmatpush1.bf16.msra.mxu0 0
  %2158 = vmatprep.subr.bf16.mxu0 0
  %2159 = vmatpush1.bf16.msra.mxu0 0
  %2160 = vmatprep.subr.bf16.mxu0 0
  %2161 = vmatpush1.bf16.msra.mxu0 0
  %2162 = vmatprep.subr.bf16.mxu0 0
  %2163 = vmatpush1.bf16.msra.mxu0 0
  %2164 = vmatprep.subr.bf16.mxu0 0
  %2165 = vmatpush1.bf16.msra.mxu0 0
  %2166 = vmatprep.subr.bf16.mxu0 0
  %2167 = vmatpush1.bf16.msra.mxu0 0
  %2168 = vmatprep.subr.bf16.mxu0 0
  %2169 = vmatpush1.bf16.msra.mxu0 0
  %2170 = vmatprep.subr.bf16.mxu0 0
  %2171 = vmatpush1.bf16.msra.mxu0 0
  %2172 = vmatprep.subr.bf16.mxu0 0
  %2173 = vmatpush1.bf16.msra.mxu0 0
  %2174 = vmatprep.subr.bf16.mxu0 0
  %2175 = vmatpush1.bf16.msra.mxu0 0
  %2176 = vmatprep.mubr.bf16.mxu0 0
  %2177 = vmatmul.mubr.bf16.gmra.mrb[0].mxu0 %v2139
  %v2178 = vpop.f32.mrb[0].mxu0
  %v2179 = vadd.f32 0.0, %v2178
  %v2180 = vpop.f32.mrb[0].mxu0
  %v2181 = vpop.f32.mrb[0].mxu0
  %v2182 = vpop.f32.mrb[0].mxu0
  %2183 = vdwg.mxu0
  %2184 = vrot.lane.b32.xlu0 %v1792, 56
  %v2185 = vpop.permute.xlu0 %2184
  %v2187 = vsel %vm357, %v2135, 0
  %v2190 = vsel %vm482, %v2185, 0
  %2192 = vmatprep.subr.bf16.mxu0 0
  %2193 = vmatpush1.bf16.msra.mxu0 %v2190
  %2194 = vmatprep.subr.bf16.mxu0 0
  %2195 = vmatpush1.bf16.msra.mxu0 0
  %2196 = vmatprep.subr.bf16.mxu0 0
  %2197 = vmatpush1.bf16.msra.mxu0 0
  %2198 = vmatprep.subr.bf16.mxu0 0
  %2199 = vmatpush1.bf16.msra.mxu0 0
  %2200 = vmatprep.subr.bf16.mxu0 0
  %2201 = vmatpush1.bf16.msra.mxu0 0
  %2202 = vmatprep.subr.bf16.mxu0 0
  %2203 = vmatpush1.bf16.msra.mxu0 0
  %2204 = vmatprep.subr.bf16.mxu0 0
  %2205 = vmatpush1.bf16.msra.mxu0 0
  %2206 = vmatprep.subr.bf16.mxu0 0
  %2207 = vmatpush1.bf16.msra.mxu0 0
  %2208 = vmatprep.subr.bf16.mxu0 0
  %2209 = vmatpush1.bf16.msra.mxu0 0
  %2210 = vmatprep.subr.bf16.mxu0 0
  %2211 = vmatpush1.bf16.msra.mxu0 0
  %2212 = vmatprep.subr.bf16.mxu0 0
  %2213 = vmatpush1.bf16.msra.mxu0 0
  %2214 = vmatprep.subr.bf16.mxu0 0
  %2215 = vmatpush1.bf16.msra.mxu0 0
  %2216 = vmatprep.subr.bf16.mxu0 0
  %2217 = vmatpush1.bf16.msra.mxu0 0
  %2218 = vmatprep.subr.bf16.mxu0 0
  %2219 = vmatpush1.bf16.msra.mxu0 0
  %2220 = vmatprep.subr.bf16.mxu0 0
  %2221 = vmatpush1.bf16.msra.mxu0 0
  %2222 = vmatprep.subr.bf16.mxu0 0
  %2223 = vmatpush1.bf16.msra.mxu0 0
  %2224 = vmatprep.mubr.bf16.mxu0 0
  %2225 = vmatmul.mubr.bf16.gmra.mrb[0].mxu0 %v2187
  %v2226 = vpop.f32.mrb[0].mxu0
  %v2227 = vadd.f32 0.0, %v2226
  %v2228 = vpop.f32.mrb[0].mxu0
  %v2229 = vpop.f32.mrb[0].mxu0
  %v2230 = vpop.f32.mrb[0].mxu0
  %2231 = vdwg.mxu0
  %v2232 = vpack.c.bf16 %v2227, %v2179
  %v2234 = vsel %vm357, %v2232, 0
  %v2237 = vsel %vm482, %v1788, 0
  %2239 = vmatprep.subr.bf16.mxu0 0
  %2240 = vmatpush1.bf16.msra.mxu0 %v2237
  %2241 = vmatprep.subr.bf16.mxu0 0
  %2242 = vmatpush1.bf16.msra.mxu0 0
  %2243 = vmatprep.subr.bf16.mxu0 0
  %2244 = vmatpush1.bf16.msra.mxu0 0
  %2245 = vmatprep.subr.bf16.mxu0 0
  %2246 = vmatpush1.bf16.msra.mxu0 0
  %2247 = vmatprep.subr.bf16.mxu0 0
  %2248 = vmatpush1.bf16.msra.mxu0 0
  %2249 = vmatprep.subr.bf16.mxu0 0
  %2250 = vmatpush1.bf16.msra.mxu0 0
  %2251 = vmatprep.subr.bf16.mxu0 0
  %2252 = vmatpush1.bf16.msra.mxu0 0
  %2253 = vmatprep.subr.bf16.mxu0 0
  %2254 = vmatpush1.bf16.msra.mxu0 0
  %2255 = vmatprep.subr.bf16.mxu0 0
  %2256 = vmatpush1.bf16.msra.mxu0 0
  %2257 = vmatprep.subr.bf16.mxu0 0
  %2258 = vmatpush1.bf16.msra.mxu0 0
  %2259 = vmatprep.subr.bf16.mxu0 0
  %2260 = vmatpush1.bf16.msra.mxu0 0
  %2261 = vmatprep.subr.bf16.mxu0 0
  %2262 = vmatpush1.bf16.msra.mxu0 0
  %2263 = vmatprep.subr.bf16.mxu0 0
  %2264 = vmatpush1.bf16.msra.mxu0 0
  %2265 = vmatprep.subr.bf16.mxu0 0
  %2266 = vmatpush1.bf16.msra.mxu0 0
  %2267 = vmatprep.subr.bf16.mxu0 0
  %2268 = vmatpush1.bf16.msra.mxu0 0
  %2269 = vmatprep.subr.bf16.mxu0 0
  %2270 = vmatpush1.bf16.msra.mxu0 0
  %2271 = vmatprep.mubr.bf16.mxu0 0
  %2272 = vmatmul.mubr.bf16.gmra.mrb[0].mxu0 %v2234
  %v2273 = vpop.f32.mrb[0].mxu0
  %v2274 = vadd.f32 0.0, %v2273
  %v2275 = vpop.f32.mrb[0].mxu0
  %v2276 = vpop.f32.mrb[0].mxu0
  %v2277 = vadd.f32 0.0, %v2276
  %v2278 = vpop.f32.mrb[0].mxu0
  %2279 = vdwg.mxu0
  %v2281 = vsel %vm357, %v2011, 0
  %v2284 = vsel %vm482, %v1787, 0
  %2286 = vmatprep.subr.bf16.mxu0 0
  %2287 = vmatpush1.bf16.msra.mxu0 %v2284
  %2288 = vmatprep.subr.bf16.mxu0 0
  %2289 = vmatpush1.bf16.msra.mxu0 0
  %2290 = vmatprep.subr.bf16.mxu0 0
  %2291 = vmatpush1.bf16.msra.mxu0 0
  %2292 = vmatprep.subr.bf16.mxu0 0
  %2293 = vmatpush1.bf16.msra.mxu0 0
  %2294 = vmatprep.subr.bf16.mxu0 0
  %2295 = vmatpush1.bf16.msra.mxu0 0
  %2296 = vmatprep.subr.bf16.mxu0 0
  %2297 = vmatpush1.bf16.msra.mxu0 0
  %2298 = vmatprep.subr.bf16.mxu0 0
  %2299 = vmatpush1.bf16.msra.mxu0 0
  %2300 = vmatprep.subr.bf16.mxu0 0
  %2301 = vmatpush1.bf16.msra.mxu0 0
  %2302 = vmatprep.subr.bf16.mxu0 0
  %2303 = vmatpush1.bf16.msra.mxu0 0
  %2304 = vmatprep.subr.bf16.mxu0 0
  %2305 = vmatpush1.bf16.msra.mxu0 0
  %2306 = vmatprep.subr.bf16.mxu0 0
  %2307 = vmatpush1.bf16.msra.mxu0 0
  %2308 = vmatprep.subr.bf16.mxu0 0
  %2309 = vmatpush1.bf16.msra.mxu0 0
  %2310 = vmatprep.subr.bf16.mxu0 0
  %2311 = vmatpush1.bf16.msra.mxu0 0
  %2312 = vmatprep.subr.bf16.mxu0 0
  %2313 = vmatpush1.bf16.msra.mxu0 0
  %2314 = vmatprep.subr.bf16.mxu0 0
  %2315 = vmatpush1.bf16.msra.mxu0 0
  %2316 = vmatprep.subr.bf16.mxu0 0
  %2317 = vmatpush1.bf16.msra.mxu0 0
  %2318 = vmatprep.mubr.bf16.mxu0 0
  %2319 = vmatmul.mubr.bf16.gmra.mrb[0].mxu0 %v2281
  %v2320 = vpop.f32.mrb[0].mxu0
  %v2321 = vadd.f32 %v2274, %v2320
  %v2322 = vpop.f32.mrb[0].mxu0
  %v2323 = vpop.f32.mrb[0].mxu0
  %v2324 = vadd.f32 %v2277, %v2323
  %v2325 = vpop.f32.mrb[0].mxu0
  %2326 = vdwg.mxu0
  %2327 = vrot.lane.b32.xlu0 %v1791, 112
  %v2328 = vpop.permute.xlu0 %2327
  %2329 = vrot.lane.b32.xlu0 %v1791, 80
  %v2330 = vpop.permute.xlu0 %2329
  %v2332 = vsel %vm357, %v2328, 0
  %v2335 = vsel %vm357, %v2330, 0
  %2337 = vmatprep.subr.bf16.mxu0 0
  %2338 = vmatpush1.bf16.xpose.msra.mxu0 %v2335
  %2339 = vmatprep.subr.bf16.mxu0 0
  %2340 = vmatpush1.bf16.xpose.msra.mxu0 0
  %2341 = vmatprep.subr.bf16.mxu0 0
  %2342 = vmatpush1.bf16.xpose.msra.mxu0 0
  %2343 = vmatprep.subr.bf16.mxu0 0
  %2344 = vmatpush1.bf16.xpose.msra.mxu0 0
  %2345 = vmatprep.subr.bf16.mxu0 0
  %2346 = vmatpush1.bf16.xpose.msra.mxu0 0
  %2347 = vmatprep.subr.bf16.mxu0 0
  %2348 = vmatpush1.bf16.xpose.msra.mxu0 0
  %2349 = vmatprep.subr.bf16.mxu0 0
  %2350 = vmatpush1.bf16.xpose.msra.mxu0 0
  %2351 = vmatprep.subr.bf16.mxu0 0
  %2352 = vmatpush1.bf16.xpose.msra.mxu0 0
  %2353 = vmatprep.subr.bf16.mxu0 0
  %2354 = vmatpush1.bf16.xpose.msra.mxu0 0
  %2355 = vmatprep.subr.bf16.mxu0 0
  %2356 = vmatpush1.bf16.xpose.msra.mxu0 0
  %2357 = vmatprep.subr.bf16.mxu0 0
  %2358 = vmatpush1.bf16.xpose.msra.mxu0 0
  %2359 = vmatprep.subr.bf16.mxu0 0
  %2360 = vmatpush1.bf16.xpose.msra.mxu0 0
  %2361 = vmatprep.subr.bf16.mxu0 0
  %2362 = vmatpush1.bf16.xpose.msra.mxu0 0
  %2363 = vmatprep.subr.bf16.mxu0 0
  %2364 = vmatpush1.bf16.xpose.msra.mxu0 0
  %2365 = vmatprep.subr.bf16.mxu0 0
  %2366 = vmatpush1.bf16.xpose.msra.mxu0 0
  %2367 = vmatprep.subr.bf16.mxu0 0
  %2368 = vmatpush1.bf16.xpose.msra.mxu0 0
  %2369 = vmatprep.mubr.bf16.mxu0 0
  %2370 = vmatmul.mubr.bf16.gmra.mrb[0].mxu0 %v2332
  %v2371 = vpop.f32.mrb[0].mxu0
  %v2372 = vadd.f32 %v240, %v2371
  %v2373 = vpop.f32.mrb[0].mxu0
  %v2374 = vpop.f32.mrb[0].mxu0
  %v2375 = vpop.f32.mrb[0].mxu0
  %2376 = vdwg.mxu0
  %2377 = vrot.lane.b32.xlu0 %v1792, 112
  %v2378 = vpop.permute.xlu0 %2377
  %2379 = vrot.lane.b32.xlu0 %v1792, 80
  %v2380 = vpop.permute.xlu0 %2379
  %v2382 = vsel %vm357, %v2378, 0
  %v2385 = vsel %vm357, %v2380, 0
  %2387 = vmatprep.subr.bf16.mxu0 0
  %2388 = vmatpush1.bf16.xpose.msra.mxu0 %v2385
  %2389 = vmatprep.subr.bf16.mxu0 0
  %2390 = vmatpush1.bf16.xpose.msra.mxu0 0
  %2391 = vmatprep.subr.bf16.mxu0 0
  %2392 = vmatpush1.bf16.xpose.msra.mxu0 0
  %2393 = vmatprep.subr.bf16.mxu0 0
  %2394 = vmatpush1.bf16.xpose.msra.mxu0 0
  %2395 = vmatprep.subr.bf16.mxu0 0
  %2396 = vmatpush1.bf16.xpose.msra.mxu0 0
  %2397 = vmatprep.subr.bf16.mxu0 0
  %2398 = vmatpush1.bf16.xpose.msra.mxu0 0
  %2399 = vmatprep.subr.bf16.mxu0 0
  %2400 = vmatpush1.bf16.xpose.msra.mxu0 0
  %2401 = vmatprep.subr.bf16.mxu0 0
  %2402 = vmatpush1.bf16.xpose.msra.mxu0 0
  %2403 = vmatprep.subr.bf16.mxu0 0
  %2404 = vmatpush1.bf16.xpose.msra.mxu0 0
  %2405 = vmatprep.subr.bf16.mxu0 0
  %2406 = vmatpush1.bf16.xpose.msra.mxu0 0
  %2407 = vmatprep.subr.bf16.mxu0 0
  %2408 = vmatpush1.bf16.xpose.msra.mxu0 0
  %2409 = vmatprep.subr.bf16.mxu0 0
  %2410 = vmatpush1.bf16.xpose.msra.mxu0 0
  %2411 = vmatprep.subr.bf16.mxu0 0
  %2412 = vmatpush1.bf16.xpose.msra.mxu0 0
  %2413 = vmatprep.subr.bf16.mxu0 0
  %2414 = vmatpush1.bf16.xpose.msra.mxu0 0
  %2415 = vmatprep.subr.bf16.mxu0 0
  %2416 = vmatpush1.bf16.xpose.msra.mxu0 0
  %2417 = vmatprep.subr.bf16.mxu0 0
  %2418 = vmatpush1.bf16.xpose.msra.mxu0 0
  %2419 = vmatprep.mubr.bf16.mxu0 0
  %2420 = vmatmul.mubr.bf16.gmra.mrb[0].mxu0 %v2382
  %v2421 = vpop.f32.mrb[0].mxu0
  %v2422 = vadd.f32 %v240, %v2421
  %v2423 = vpop.f32.mrb[0].mxu0
  %v2424 = vpop.f32.mrb[0].mxu0
  %v2425 = vpop.f32.mrb[0].mxu0
  %2426 = vdwg.mxu0
  %v2427 = vsel %vm357, %v2372, -inf
  %2428 = vmax.xlane.f32.xlu0 %v2427
  %v2429 = vpop.xlane.xlu0 %2428
  %v2430 = vsel %vm357, %v2422, -inf
  %2431 = vmax.xlane.f32.xlu0 %v2430
  %v2432 = vpop.xlane.xlu0 %2431
  %v2433 = vsub.f32 %v2372, %v2429
  %v2434 = vsub.f32 %v2422, %v2432
  %v2435 = vmul.f32 %v2433, 1.442695
  %v2436 = vpow.pop %v2435
  %v2437 = vmul.f32 %v2434, 1.442695
  %v2438 = vpow.pop %v2437
  %v2439 = vsel %vm357, %v2436, 0.0
  %2440 = vadd.xlane.f32.xlu0 %v2439
  %v2441 = vpop.xlane.xlu0 %2440
  %v2442 = vsel %vm357, %v2438, 0.0
  %2443 = vadd.xlane.f32.xlu0 %v2442
  %v2444 = vpop.xlane.xlu0 %2443
  %v2445 = vrcp.pop %v2441
  %v2446 = vrcp.pop %v2444
  %v2447 = vmul.f32 %v2436, %v2445
  %v2448 = vmul.f32 %v2438, %v2446
  %v2449 = vpack.c.bf16 %v2447, %v2447
  %v2450 = vpack.c.bf16 %v2448, %v2448
  %2451 = vrot.lane.b32.xlu0 %v1791, 48
  %v2452 = vpop.permute.xlu0 %2451
  %v2454 = vsel %vm357, %v2449, 0
  %v2457 = vsel %vm482, %v2452, 0
  %2459 = vmatprep.subr.bf16.mxu0 0
  %2460 = vmatpush1.bf16.msra.mxu0 %v2457
  %2461 = vmatprep.subr.bf16.mxu0 0
  %2462 = vmatpush1.bf16.msra.mxu0 0
  %2463 = vmatprep.subr.bf16.mxu0 0
  %2464 = vmatpush1.bf16.msra.mxu0 0
  %2465 = vmatprep.subr.bf16.mxu0 0
  %2466 = vmatpush1.bf16.msra.mxu0 0
  %2467 = vmatprep.subr.bf16.mxu0 0
  %2468 = vmatpush1.bf16.msra.mxu0 0
  %2469 = vmatprep.subr.bf16.mxu0 0
  %2470 = vmatpush1.bf16.msra.mxu0 0
  %2471 = vmatprep.subr.bf16.mxu0 0
  %2472 = vmatpush1.bf16.msra.mxu0 0
  %2473 = vmatprep.subr.bf16.mxu0 0
  %2474 = vmatpush1.bf16.msra.mxu0 0
  %2475 = vmatprep.subr.bf16.mxu0 0
  %2476 = vmatpush1.bf16.msra.mxu0 0
  %2477 = vmatprep.subr.bf16.mxu0 0
  %2478 = vmatpush1.bf16.msra.mxu0 0
  %2479 = vmatprep.subr.bf16.mxu0 0
  %2480 = vmatpush1.bf16.msra.mxu0 0
  %2481 = vmatprep.subr.bf16.mxu0 0
  %2482 = vmatpush1.bf16.msra.mxu0 0
  %2483 = vmatprep.subr.bf16.mxu0 0
  %2484 = vmatpush1.bf16.msra.mxu0 0
  %2485 = vmatprep.subr.bf16.mxu0 0
  %2486 = vmatpush1.bf16.msra.mxu0 0
  %2487 = vmatprep.subr.bf16.mxu0 0
  %2488 = vmatpush1.bf16.msra.mxu0 0
  %2489 = vmatprep.subr.bf16.mxu0 0
  %2490 = vmatpush1.bf16.msra.mxu0 0
  %2491 = vmatprep.mubr.bf16.mxu0 0
  %2492 = vmatmul.mubr.bf16.gmra.mrb[0].mxu0 %v2454
  %v2493 = vpop.f32.mrb[0].mxu0
  %v2494 = vadd.f32 0.0, %v2493
  %v2495 = vpop.f32.mrb[0].mxu0
  %v2496 = vpop.f32.mrb[0].mxu0
  %v2497 = vpop.f32.mrb[0].mxu0
  %2498 = vdwg.mxu0
  %2499 = vrot.lane.b32.xlu0 %v1792, 48
  %v2500 = vpop.permute.xlu0 %2499
  %v2502 = vsel %vm357, %v2450, 0
  %v2505 = vsel %vm482, %v2500, 0
  %2507 = vmatprep.subr.bf16.mxu0 0
  %2508 = vmatpush1.bf16.msra.mxu0 %v2505
  %2509 = vmatprep.subr.bf16.mxu0 0
  %2510 = vmatpush1.bf16.msra.mxu0 0
  %2511 = vmatprep.subr.bf16.mxu0 0
  %2512 = vmatpush1.bf16.msra.mxu0 0
  %2513 = vmatprep.subr.bf16.mxu0 0
  %2514 = vmatpush1.bf16.msra.mxu0 0
  %2515 = vmatprep.subr.bf16.mxu0 0
  %2516 = vmatpush1.bf16.msra.mxu0 0
  %2517 = vmatprep.subr.bf16.mxu0 0
  %2518 = vmatpush1.bf16.msra.mxu0 0
  %2519 = vmatprep.subr.bf16.mxu0 0
  %2520 = vmatpush1.bf16.msra.mxu0 0
  %2521 = vmatprep.subr.bf16.mxu0 0
  %2522 = vmatpush1.bf16.msra.mxu0 0
  %2523 = vmatprep.subr.bf16.mxu0 0
  %2524 = vmatpush1.bf16.msra.mxu0 0
  %2525 = vmatprep.subr.bf16.mxu0 0
  %2526 = vmatpush1.bf16.msra.mxu0 0
  %2527 = vmatprep.subr.bf16.mxu0 0
  %2528 = vmatpush1.bf16.msra.mxu0 0
  %2529 = vmatprep.subr.bf16.mxu0 0
  %2530 = vmatpush1.bf16.msra.mxu0 0
  %2531 = vmatprep.subr.bf16.mxu0 0
  %2532 = vmatpush1.bf16.msra.mxu0 0
  %2533 = vmatprep.subr.bf16.mxu0 0
  %2534 = vmatpush1.bf16.msra.mxu0 0
  %2535 = vmatprep.subr.bf16.mxu0 0
  %2536 = vmatpush1.bf16.msra.mxu0 0
  %2537 = vmatprep.subr.bf16.mxu0 0
  %2538 = vmatpush1.bf16.msra.mxu0 0
  %2539 = vmatprep.mubr.bf16.mxu0 0
  %2540 = vmatmul.mubr.bf16.gmra.mrb[0].mxu0 %v2502
  %v2541 = vpop.f32.mrb[0].mxu0
  %v2542 = vadd.f32 0.0, %v2541
  %v2543 = vpop.f32.mrb[0].mxu0
  %v2544 = vpop.f32.mrb[0].mxu0
  %v2545 = vpop.f32.mrb[0].mxu0
  %2546 = vdwg.mxu0
  %v2547 = vpack.c.bf16 %v2542, %v2494
  %v2549 = vsel %vm357, %v2547, 0
  %v2552 = vsel %vm482, %v1789, 0
  %2554 = vmatprep.subr.bf16.mxu0 0
  %2555 = vmatpush1.bf16.msra.mxu0 %v2552
  %2556 = vmatprep.subr.bf16.mxu0 0
  %2557 = vmatpush1.bf16.msra.mxu0 0
  %2558 = vmatprep.subr.bf16.mxu0 0
  %2559 = vmatpush1.bf16.msra.mxu0 0
  %2560 = vmatprep.subr.bf16.mxu0 0
  %2561 = vmatpush1.bf16.msra.mxu0 0
  %2562 = vmatprep.subr.bf16.mxu0 0
  %2563 = vmatpush1.bf16.msra.mxu0 0
  %2564 = vmatprep.subr.bf16.mxu0 0
  %2565 = vmatpush1.bf16.msra.mxu0 0
  %2566 = vmatprep.subr.bf16.mxu0 0
  %2567 = vmatpush1.bf16.msra.mxu0 0
  %2568 = vmatprep.subr.bf16.mxu0 0
  %2569 = vmatpush1.bf16.msra.mxu0 0
  %2570 = vmatprep.subr.bf16.mxu0 0
  %2571 = vmatpush1.bf16.msra.mxu0 0
  %2572 = vmatprep.subr.bf16.mxu0 0
  %2573 = vmatpush1.bf16.msra.mxu0 0
  %2574 = vmatprep.subr.bf16.mxu0 0
  %2575 = vmatpush1.bf16.msra.mxu0 0
  %2576 = vmatprep.subr.bf16.mxu0 0
  %2577 = vmatpush1.bf16.msra.mxu0 0
  %2578 = vmatprep.subr.bf16.mxu0 0
  %2579 = vmatpush1.bf16.msra.mxu0 0
  %2580 = vmatprep.subr.bf16.mxu0 0
  %2581 = vmatpush1.bf16.msra.mxu0 0
  %2582 = vmatprep.subr.bf16.mxu0 0
  %2583 = vmatpush1.bf16.msra.mxu0 0
  %2584 = vmatprep.subr.bf16.mxu0 0
  %2585 = vmatpush1.bf16.msra.mxu0 0
  %2586 = vmatprep.mubr.bf16.mxu0 0
  %2587 = vmatmul.mubr.bf16.gmra.mrb[0].mxu0 %v2549
  %v2588 = vpop.f32.mrb[0].mxu0
  %v2589 = vadd.f32 0.0, %v2588
  %v2590 = vpop.f32.mrb[0].mxu0
  %v2591 = vpop.f32.mrb[0].mxu0
  %v2592 = vadd.f32 0.0, %v2591
  %v2593 = vpop.f32.mrb[0].mxu0
  %2594 = vdwg.mxu0
  %v2595 = vadd.f32 %v2321, %v2589
  %v2596 = vadd.f32 %v2324, %v2592
  %2597 = vrot.lane.b32.xlu0 %v1791, 104
  %v2598 = vpop.permute.xlu0 %2597
  %2599 = vrot.lane.b32.xlu0 %v1791, 72
  %v2600 = vpop.permute.xlu0 %2599
  %v2602 = vsel %vm357, %v2598, 0
  %v2605 = vsel %vm357, %v2600, 0
  %2607 = vmatprep.subr.bf16.mxu0 0
  %2608 = vmatpush1.bf16.xpose.msra.mxu0 %v2605
  %2609 = vmatprep.subr.bf16.mxu0 0
  %2610 = vmatpush1.bf16.xpose.msra.mxu0 0
  %2611 = vmatprep.subr.bf16.mxu0 0
  %2612 = vmatpush1.bf16.xpose.msra.mxu0 0
  %2613 = vmatprep.subr.bf16.mxu0 0
  %2614 = vmatpush1.bf16.xpose.msra.mxu0 0
  %2615 = vmatprep.subr.bf16.mxu0 0
  %2616 = vmatpush1.bf16.xpose.msra.mxu0 0
  %2617 = vmatprep.subr.bf16.mxu0 0
  %2618 = vmatpush1.bf16.xpose.msra.mxu0 0
  %2619 = vmatprep.subr.bf16.mxu0 0
  %2620 = vmatpush1.bf16.xpose.msra.mxu0 0
  %2621 = vmatprep.subr.bf16.mxu0 0
  %2622 = vmatpush1.bf16.xpose.msra.mxu0 0
  %2623 = vmatprep.subr.bf16.mxu0 0
  %2624 = vmatpush1.bf16.xpose.msra.mxu0 0
  %2625 = vmatprep.subr.bf16.mxu0 0
  %2626 = vmatpush1.bf16.xpose.msra.mxu0 0
  %2627 = vmatprep.subr.bf16.mxu0 0
  %2628 = vmatpush1.bf16.xpose.msra.mxu0 0
  %2629 = vmatprep.subr.bf16.mxu0 0
  %2630 = vmatpush1.bf16.xpose.msra.mxu0 0
  %2631 = vmatprep.subr.bf16.mxu0 0
  %2632 = vmatpush1.bf16.xpose.msra.mxu0 0
  %2633 = vmatprep.subr.bf16.mxu0 0
  %2634 = vmatpush1.bf16.xpose.msra.mxu0 0
  %2635 = vmatprep.subr.bf16.mxu0 0
  %2636 = vmatpush1.bf16.xpose.msra.mxu0 0
  %2637 = vmatprep.subr.bf16.mxu0 0
  %2638 = vmatpush1.bf16.xpose.msra.mxu0 0
  %2639 = vmatprep.mubr.bf16.mxu0 0
  %2640 = vmatmul.mubr.bf16.gmra.mrb[0].mxu0 %v2602
  %v2641 = vpop.f32.mrb[0].mxu0
  %v2642 = vadd.f32 %v240, %v2641
  %v2643 = vpop.f32.mrb[0].mxu0
  %v2644 = vpop.f32.mrb[0].mxu0
  %v2645 = vpop.f32.mrb[0].mxu0
  %2646 = vdwg.mxu0
  %2647 = vrot.lane.b32.xlu0 %v1792, 104
  %v2648 = vpop.permute.xlu0 %2647
  %2649 = vrot.lane.b32.xlu0 %v1792, 72
  %v2650 = vpop.permute.xlu0 %2649
  %v2652 = vsel %vm357, %v2648, 0
  %v2655 = vsel %vm357, %v2650, 0
  %2657 = vmatprep.subr.bf16.mxu0 0
  %2658 = vmatpush1.bf16.xpose.msra.mxu0 %v2655
  %2659 = vmatprep.subr.bf16.mxu0 0
  %2660 = vmatpush1.bf16.xpose.msra.mxu0 0
  %2661 = vmatprep.subr.bf16.mxu0 0
  %2662 = vmatpush1.bf16.xpose.msra.mxu0 0
  %2663 = vmatprep.subr.bf16.mxu0 0
  %2664 = vmatpush1.bf16.xpose.msra.mxu0 0
  %2665 = vmatprep.subr.bf16.mxu0 0
  %2666 = vmatpush1.bf16.xpose.msra.mxu0 0
  %2667 = vmatprep.subr.bf16.mxu0 0
  %2668 = vmatpush1.bf16.xpose.msra.mxu0 0
  %2669 = vmatprep.subr.bf16.mxu0 0
  %2670 = vmatpush1.bf16.xpose.msra.mxu0 0
  %2671 = vmatprep.subr.bf16.mxu0 0
  %2672 = vmatpush1.bf16.xpose.msra.mxu0 0
  %2673 = vmatprep.subr.bf16.mxu0 0
  %2674 = vmatpush1.bf16.xpose.msra.mxu0 0
  %2675 = vmatprep.subr.bf16.mxu0 0
  %2676 = vmatpush1.bf16.xpose.msra.mxu0 0
  %2677 = vmatprep.subr.bf16.mxu0 0
  %2678 = vmatpush1.bf16.xpose.msra.mxu0 0
  %2679 = vmatprep.subr.bf16.mxu0 0
  %2680 = vmatpush1.bf16.xpose.msra.mxu0 0
  %2681 = vmatprep.subr.bf16.mxu0 0
  %2682 = vmatpush1.bf16.xpose.msra.mxu0 0
  %2683 = vmatprep.subr.bf16.mxu0 0
  %2684 = vmatpush1.bf16.xpose.msra.mxu0 0
  %2685 = vmatprep.subr.bf16.mxu0 0
  %2686 = vmatpush1.bf16.xpose.msra.mxu0 0
  %2687 = vmatprep.subr.bf16.mxu0 0
  %2688 = vmatpush1.bf16.xpose.msra.mxu0 0
  %2689 = vmatprep.mubr.bf16.mxu0 0
  %2690 = vmatmul.mubr.bf16.gmra.mrb[0].mxu0 %v2652
  %v2691 = vpop.f32.mrb[0].mxu0
  %v2692 = vadd.f32 %v240, %v2691
  %v2693 = vpop.f32.mrb[0].mxu0
  %v2694 = vpop.f32.mrb[0].mxu0
  %v2695 = vpop.f32.mrb[0].mxu0
  %2696 = vdwg.mxu0
  %v2697 = vsel %vm357, %v2642, -inf
  %2698 = vmax.xlane.f32.xlu0 %v2697
  %v2699 = vpop.xlane.xlu0 %2698
  %v2700 = vsel %vm357, %v2692, -inf
  %2701 = vmax.xlane.f32.xlu0 %v2700
  %v2702 = vpop.xlane.xlu0 %2701
  %v2703 = vsub.f32 %v2642, %v2699
  %v2704 = vsub.f32 %v2692, %v2702
  %v2705 = vmul.f32 %v2703, 1.442695
  %v2706 = vpow.pop %v2705
  %v2707 = vmul.f32 %v2704, 1.442695
  %v2708 = vpow.pop %v2707
  %v2709 = vsel %vm357, %v2706, 0.0
  %2710 = vadd.xlane.f32.xlu0 %v2709
  %v2711 = vpop.xlane.xlu0 %2710
  %v2712 = vsel %vm357, %v2708, 0.0
  %2713 = vadd.xlane.f32.xlu0 %v2712
  %v2714 = vpop.xlane.xlu0 %2713
  %v2715 = vrcp.pop %v2711
  %v2716 = vrcp.pop %v2714
  %v2717 = vmul.f32 %v2706, %v2715
  %v2718 = vmul.f32 %v2708, %v2716
  %v2719 = vpack.c.bf16 %v2717, %v2717
  %v2720 = vpack.c.bf16 %v2718, %v2718
  %2721 = vrot.lane.b32.xlu0 %v1791, 40
  %v2722 = vpop.permute.xlu0 %2721
  %v2724 = vsel %vm357, %v2719, 0
  %v2727 = vsel %vm482, %v2722, 0
  %2729 = vmatprep.subr.bf16.mxu0 0
  %2730 = vmatpush1.bf16.msra.mxu0 %v2727
  %2731 = vmatprep.subr.bf16.mxu0 0
  %2732 = vmatpush1.bf16.msra.mxu0 0
  %2733 = vmatprep.subr.bf16.mxu0 0
  %2734 = vmatpush1.bf16.msra.mxu0 0
  %2735 = vmatprep.subr.bf16.mxu0 0
  %2736 = vmatpush1.bf16.msra.mxu0 0
  %2737 = vmatprep.subr.bf16.mxu0 0
  %2738 = vmatpush1.bf16.msra.mxu0 0
  %2739 = vmatprep.subr.bf16.mxu0 0
  %2740 = vmatpush1.bf16.msra.mxu0 0
  %2741 = vmatprep.subr.bf16.mxu0 0
  %2742 = vmatpush1.bf16.msra.mxu0 0
  %2743 = vmatprep.subr.bf16.mxu0 0
  %2744 = vmatpush1.bf16.msra.mxu0 0
  %2745 = vmatprep.subr.bf16.mxu0 0
  %2746 = vmatpush1.bf16.msra.mxu0 0
  %2747 = vmatprep.subr.bf16.mxu0 0
  %2748 = vmatpush1.bf16.msra.mxu0 0
  %2749 = vmatprep.subr.bf16.mxu0 0
  %2750 = vmatpush1.bf16.msra.mxu0 0
  %2751 = vmatprep.subr.bf16.mxu0 0
  %2752 = vmatpush1.bf16.msra.mxu0 0
  %2753 = vmatprep.subr.bf16.mxu0 0
  %2754 = vmatpush1.bf16.msra.mxu0 0
  %2755 = vmatprep.subr.bf16.mxu0 0
  %2756 = vmatpush1.bf16.msra.mxu0 0
  %2757 = vmatprep.subr.bf16.mxu0 0
  %2758 = vmatpush1.bf16.msra.mxu0 0
  %2759 = vmatprep.subr.bf16.mxu0 0
  %2760 = vmatpush1.bf16.msra.mxu0 0
  %2761 = vmatprep.mubr.bf16.mxu0 0
  %2762 = vmatmul.mubr.bf16.gmra.mrb[0].mxu0 %v2724
  %v2763 = vpop.f32.mrb[0].mxu0
  %v2764 = vadd.f32 0.0, %v2763
  %v2765 = vpop.f32.mrb[0].mxu0
  %v2766 = vpop.f32.mrb[0].mxu0
  %v2767 = vpop.f32.mrb[0].mxu0
  %2768 = vdwg.mxu0
  %2769 = vrot.lane.b32.xlu0 %v1792, 40
  %v2770 = vpop.permute.xlu0 %2769
  %v2772 = vsel %vm357, %v2720, 0
  %v2775 = vsel %vm482, %v2770, 0
  %2777 = vmatprep.subr.bf16.mxu0 0
  %2778 = vmatpush1.bf16.msra.mxu0 %v2775
  %2779 = vmatprep.subr.bf16.mxu0 0
  %2780 = vmatpush1.bf16.msra.mxu0 0
  %2781 = vmatprep.subr.bf16.mxu0 0
  %2782 = vmatpush1.bf16.msra.mxu0 0
  %2783 = vmatprep.subr.bf16.mxu0 0
  %2784 = vmatpush1.bf16.msra.mxu0 0
  %2785 = vmatprep.subr.bf16.mxu0 0
  %2786 = vmatpush1.bf16.msra.mxu0 0
  %2787 = vmatprep.subr.bf16.mxu0 0
  %2788 = vmatpush1.bf16.msra.mxu0 0
  %2789 = vmatprep.subr.bf16.mxu0 0
  %2790 = vmatpush1.bf16.msra.mxu0 0
  %2791 = vmatprep.subr.bf16.mxu0 0
  %2792 = vmatpush1.bf16.msra.mxu0 0
  %2793 = vmatprep.subr.bf16.mxu0 0
  %2794 = vmatpush1.bf16.msra.mxu0 0
  %2795 = vmatprep.subr.bf16.mxu0 0
  %2796 = vmatpush1.bf16.msra.mxu0 0
  %2797 = vmatprep.subr.bf16.mxu0 0
  %2798 = vmatpush1.bf16.msra.mxu0 0
  %2799 = vmatprep.subr.bf16.mxu0 0
  %2800 = vmatpush1.bf16.msra.mxu0 0
  %2801 = vmatprep.subr.bf16.mxu0 0
  %2802 = vmatpush1.bf16.msra.mxu0 0
  %2803 = vmatprep.subr.bf16.mxu0 0
  %2804 = vmatpush1.bf16.msra.mxu0 0
  %2805 = vmatprep.subr.bf16.mxu0 0
  %2806 = vmatpush1.bf16.msra.mxu0 0
  %2807 = vmatprep.subr.bf16.mxu0 0
  %2808 = vmatpush1.bf16.msra.mxu0 0
  %2809 = vmatprep.mubr.bf16.mxu0 0
  %2810 = vmatmul.mubr.bf16.gmra.mrb[0].mxu0 %v2772
  %v2811 = vpop.f32.mrb[0].mxu0
  %v2812 = vadd.f32 0.0, %v2811
  %v2813 = vpop.f32.mrb[0].mxu0
  %v2814 = vpop.f32.mrb[0].mxu0
  %v2815 = vpop.f32.mrb[0].mxu0
  %2816 = vdwg.mxu0
  %v2817 = vpack.c.bf16 %v2812, %v2764
  %v2819 = vsel %vm357, %v2817, 0
  %v2822 = vsel %vm482, %v1790, 0
  %2824 = vmatprep.subr.bf16.mxu0 0
  %2825 = vmatpush1.bf16.msra.mxu0 %v2822
  %2826 = vmatprep.subr.bf16.mxu0 0
  %2827 = vmatpush1.bf16.msra.mxu0 0
  %2828 = vmatprep.subr.bf16.mxu0 0
  %2829 = vmatpush1.bf16.msra.mxu0 0
  %2830 = vmatprep.subr.bf16.mxu0 0
  %2831 = vmatpush1.bf16.msra.mxu0 0
  %2832 = vmatprep.subr.bf16.mxu0 0
  %2833 = vmatpush1.bf16.msra.mxu0 0
  %2834 = vmatprep.subr.bf16.mxu0 0
  %2835 = vmatpush1.bf16.msra.mxu0 0
  %2836 = vmatprep.subr.bf16.mxu0 0
  %2837 = vmatpush1.bf16.msra.mxu0 0
  %2838 = vmatprep.subr.bf16.mxu0 0
  %2839 = vmatpush1.bf16.msra.mxu0 0
  %2840 = vmatprep.subr.bf16.mxu0 0
  %2841 = vmatpush1.bf16.msra.mxu0 0
  %2842 = vmatprep.subr.bf16.mxu0 0
  %2843 = vmatpush1.bf16.msra.mxu0 0
  %2844 = vmatprep.subr.bf16.mxu0 0
  %2845 = vmatpush1.bf16.msra.mxu0 0
  %2846 = vmatprep.subr.bf16.mxu0 0
  %2847 = vmatpush1.bf16.msra.mxu0 0
  %2848 = vmatprep.subr.bf16.mxu0 0
  %2849 = vmatpush1.bf16.msra.mxu0 0
  %2850 = vmatprep.subr.bf16.mxu0 0
  %2851 = vmatpush1.bf16.msra.mxu0 0
  %2852 = vmatprep.subr.bf16.mxu0 0
  %2853 = vmatpush1.bf16.msra.mxu0 0
  %2854 = vmatprep.subr.bf16.mxu0 0
  %2855 = vmatpush1.bf16.msra.mxu0 0
  %2856 = vmatprep.mubr.bf16.mxu0 0
  %2857 = vmatmul.mubr.bf16.gmra.mrb[0].mxu0 %v2819
  %v2858 = vpop.f32.mrb[0].mxu0
  %v2859 = vadd.f32 0.0, %v2858
  %v2860 = vpop.f32.mrb[0].mxu0
  %v2861 = vpop.f32.mrb[0].mxu0
  %v2862 = vadd.f32 0.0, %v2861
  %v2863 = vpop.f32.mrb[0].mxu0
  %2864 = vdwg.mxu0
  %v2865 = vadd.f32 %v2595, %v2859
  %v2866 = vadd.f32 %v2596, %v2862
  %v2867 = vadd.f32 %v1676, %v2865
  %v2868 = vadd.f32 %v1677, %v2866
  %s2869 = scalar_lea.vmem %s7, 1
  %v2870 = vld [vmem:[%s2869] sm:$0x1]
  %v2872 = vlaneseq
  %v2873 = vshrl.u32 %v2872, 7
  %v2874 = vsub.s32 0, %v2873
  %v2875 = vrot.slane %v2870, %v2874
  %v2877 = vadd.f32 %v2867, %v2875
  %v2878 = vadd.f32 %v2868, %v2875
  %s2879 = scalar_lea.vmem %s8, 1
  %v2880 = vld [vmem:[%s2879] sm:$0x1]
  %s2881 = scalar_lea.vmem %s9, 1
  %v2882 = vld [vmem:[%s2881] sm:$0x1]
  %v2883 = vsel %vm243, %v2877, 0.0
  %2884 = vadd.xlane.f32.xlu0 %v2883
  %v2885 = vpop.xlane.xlu0 %2884
  %v2886 = vsel %vm243, %v2878, 0.0
  %2887 = vadd.xlane.f32.xlu0 %v2886
  %v2888 = vpop.xlane.xlu0 %2887
  %v2889 = vmul.f32 %v2885, %v250
  %v2890 = vmul.f32 %v2888, %v250
  %v2891 = vsub.f32 %v2877, %v2889
  %v2892 = vsub.f32 %v2878, %v2890
  %v2893 = vmul.f32 %v2891, %v2891
  %v2894 = vmul.f32 %v2892, %v2892
  %v2895 = vsel %vm243, %v2893, 0.0
  %2896 = vadd.xlane.f32.xlu0 %v2895
  %v2897 = vpop.xlane.xlu0 %2896
  %v2898 = vsel %vm243, %v2894, 0.0
  %2899 = vadd.xlane.f32.xlu0 %v2898
  %v2900 = vpop.xlane.xlu0 %2899
  %v2901 = vmul.f32 %v2897, %v250
  %v2902 = vmul.f32 %v2900, %v250
  %v2903 = vadd.f32 %v2901, 1e-05
  %v2904 = vadd.f32 %v2902, 1e-05
  %v2905 = vrsqrt.pop %v2903
  %v2906 = vrsqrt.pop %v2904
  %v2907 = vmul.f32 %v2891, %v2905
  %v2908 = vmul.f32 %v2892, %v2906
  %v2910 = vlaneseq
  %v2911 = vshrl.u32 %v2910, 7
  %v2912 = vsub.s32 0, %v2911
  %v2913 = vrot.slane %v2880, %v2912
  %v2915 = vmul.f32 %v2907, %v2913
  %v2916 = vmul.f32 %v2908, %v2913
  %v2918 = vlaneseq
  %v2919 = vshrl.u32 %v2918, 7
  %v2920 = vsub.s32 0, %v2919
  %v2921 = vrot.slane %v2882, %v2920
  %v2923 = vadd.f32 %v2915, %v2921
  %v2924 = vadd.f32 %v2916, %v2921
  %v2925 = vpack.c.bf16 %v2924, %v2923
  %s2926 = scalar_lea.vmem %s10, 16
  %v2927 = vld [vmem:[%s2926] sm:$0xf]
  %v2928 = vld [vmem:[%s2926 + $0x4] sm:$0xf]
  %v2929 = vld [vmem:[%s2926 + $0x8] sm:$0xf]
  %v2930 = vld [vmem:[%s2926 + $0xc] sm:$0xf]
  %s2931 = scalar_lea.vmem %s11, 1
  %v2932 = vld [vmem:[%s2931] sm:$0x1]
  %v2934 = vlaneseq
  %v2935 = vshrl.u32 %v2934, 7
  %v2936 = vsub.s32 0, %v2935
  %v2937 = vrot.slane %v2932, %v2936
  %v2943 = vunpack.c.l.b16 %v2927
  %v2944 = vunpack.c.l.b16 %v2928
  %v2945 = vunpack.c.l.b16 %v2929
  %v2946 = vunpack.c.l.b16 %v2930
  %v2947 = vpack.c.b16 %v2944, %v2943
  %v2948 = vpack.c.b16 %v2946, %v2945
  %v2952 = vsel %vm243, %v2925, 0
  %2954 = vmatprep.subr.bf16.mxu0 0
  %2955 = vmatpush1.bf16.msra.mxu0 %v2947
  %2956 = vmatprep.subr.bf16.mxu0 0
  %2957 = vmatpush1.bf16.msra.mxu0 %v2948
  %2958 = vmatprep.subr.bf16.mxu0 0
  %2959 = vmatpush1.bf16.msra.mxu0 0
  %2960 = vmatprep.subr.bf16.mxu0 0
  %2961 = vmatpush1.bf16.msra.mxu0 0
  %2962 = vmatprep.subr.bf16.mxu0 0
  %2963 = vmatpush1.bf16.msra.mxu0 0
  %2964 = vmatprep.subr.bf16.mxu0 0
  %2965 = vmatpush1.bf16.msra.mxu0 0
  %2966 = vmatprep.subr.bf16.mxu0 0
  %2967 = vmatpush1.bf16.msra.mxu0 0
  %2968 = vmatprep.subr.bf16.mxu0 0
  %2969 = vmatpush1.bf16.msra.mxu0 0
  %2970 = vmatprep.subr.bf16.mxu0 0
  %2971 = vmatpush1.bf16.msra.mxu0 0
  %2972 = vmatprep.subr.bf16.mxu0 0
  %2973 = vmatpush1.bf16.msra.mxu0 0
  %2974 = vmatprep.subr.bf16.mxu0 0
  %2975 = vmatpush1.bf16.msra.mxu0 0
  %2976 = vmatprep.subr.bf16.mxu0 0
  %2977 = vmatpush1.bf16.msra.mxu0 0
  %2978 = vmatprep.subr.bf16.mxu0 0
  %2979 = vmatpush1.bf16.msra.mxu0 0
  %2980 = vmatprep.subr.bf16.mxu0 0
  %2981 = vmatpush1.bf16.msra.mxu0 0
  %2982 = vmatprep.subr.bf16.mxu0 0
  %2983 = vmatpush1.bf16.msra.mxu0 0
  %2984 = vmatprep.subr.bf16.mxu0 0
  %2985 = vmatpush1.bf16.msra.mxu0 0
  %2986 = vmatprep.mubr.bf16.mxu0 0
  %2987 = vmatmul.mubr.bf16.gmra.mrb[0].mxu0 %v2952
  %v2988 = vpop.f32.mrb[0].mxu0
  %v2989 = vadd.f32 %v2937, %v2988
  %v2990 = vpop.f32.mrb[0].mxu0
  %v2991 = vpop.f32.mrb[0].mxu0
  %v2992 = vadd.f32 %v2937, %v2991
  %v2993 = vpop.f32.mrb[0].mxu0
  %2994 = vdwg.mxu0
  %v2995 = vmul.f32 %v2989, 0.5
  %v2996 = vmul.f32 %v2992, 0.5
  %v2997 = vmul.f32 %v2989, 0.70710677
  %v2998 = vmul.f32 %v2992, 0.70710677
  %v2999 = verf.f32.pop %v2997
  %v3000 = verf.f32.pop %v2998
  %v3001 = vadd.f32 %v2999, 1.0
  %v3002 = vadd.f32 %v3000, 1.0
  %v3003 = vmul.f32 %v2995, %v3001
  %v3004 = vmul.f32 %v2996, %v3002
  %v3005 = vpack.c.bf16 %v3004, %v3003
  %s3006 = scalar_lea.vmem %s12, 64
  %v3007 = vld [vmem:[%s3006] sm:$0xf]
  %v3008 = vld [vmem:[%s3006 + $0x4] sm:$0xf]
  %v3009 = vld [vmem:[%s3006 + $0x8] sm:$0xf]
  %v3010 = vld [vmem:[%s3006 + $0xc] sm:$0xf]
  %v3011 = vld [vmem:[%s3006 + $0x10] sm:$0xf]
  %v3012 = vld [vmem:[%s3006 + $0x14] sm:$0xf]
  %v3013 = vld [vmem:[%s3006 + $0x18] sm:$0xf]
  %v3014 = vld [vmem:[%s3006 + $0x1c] sm:$0xf]
  %v3015 = vld [vmem:[%s3006 + $0x20] sm:$0xf]
  %v3016 = vld [vmem:[%s3006 + $0x24] sm:$0xf]
  %v3017 = vld [vmem:[%s3006 + $0x28] sm:$0xf]
  %v3018 = vld [vmem:[%s3006 + $0x2c] sm:$0xf]
  %v3019 = vld [vmem:[%s3006 + $0x30] sm:$0xf]
  %v3020 = vld [vmem:[%s3006 + $0x34] sm:$0xf]
  %v3021 = vld [vmem:[%s3006 + $0x38] sm:$0xf]
  %v3022 = vld [vmem:[%s3006 + $0x3c] sm:$0xf]
  %s3023 = scalar_lea.vmem %s13, 1
  %v3024 = vld [vmem:[%s3023] sm:$0x1]
  %v3026 = vlaneseq
  %v3027 = vshrl.u32 %v3026, 7
  %v3028 = vsub.s32 0, %v3027
  %v3029 = vrot.slane %v3024, %v3028
  %v3047 = vunpack.c.l.b16 %v3007
  %v3048 = vunpack.c.l.b16 %v3008
  %v3049 = vunpack.c.l.b16 %v3009
  %v3050 = vunpack.c.l.b16 %v3010
  %v3051 = vunpack.c.l.b16 %v3011
  %v3052 = vunpack.c.l.b16 %v3012
  %v3053 = vunpack.c.l.b16 %v3013
  %v3054 = vunpack.c.l.b16 %v3014
  %v3055 = vunpack.c.l.b16 %v3015
  %v3056 = vunpack.c.l.b16 %v3016
  %v3057 = vunpack.c.l.b16 %v3017
  %v3058 = vunpack.c.l.b16 %v3018
  %v3059 = vunpack.c.l.b16 %v3019
  %v3060 = vunpack.c.l.b16 %v3020
  %v3061 = vunpack.c.l.b16 %v3021
  %v3062 = vunpack.c.l.b16 %v3022
  %v3063 = vpack.c.b16 %v3048, %v3047
  %v3064 = vpack.c.b16 %v3050, %v3049
  %v3065 = vpack.c.b16 %v3052, %v3051
  %v3066 = vpack.c.b16 %v3054, %v3053
  %v3067 = vpack.c.b16 %v3056, %v3055
  %v3068 = vpack.c.b16 %v3058, %v3057
  %v3069 = vpack.c.b16 %v3060, %v3059
  %v3070 = vpack.c.b16 %v3062, %v3061
  %3079 = vmatprep.subr.bf16.mxu0 0
  %3080 = vmatpush1.bf16.msra.mxu0 %v3063
  %3081 = vmatprep.subr.bf16.mxu0 0
  %3082 = vmatpush1.bf16.msra.mxu0 %v3064
  %3083 = vmatprep.subr.bf16.mxu0 0
  %3084 = vmatpush1.bf16.msra.mxu0 %v3065
  %3085 = vmatprep.subr.bf16.mxu0 0
  %3086 = vmatpush1.bf16.msra.mxu0 %v3066
  %3087 = vmatprep.subr.bf16.mxu0 0
  %3088 = vmatpush1.bf16.msra.mxu0 %v3067
  %3089 = vmatprep.subr.bf16.mxu0 0
  %3090 = vmatpush1.bf16.msra.mxu0 %v3068
  %3091 = vmatprep.subr.bf16.mxu0 0
  %3092 = vmatpush1.bf16.msra.mxu0 %v3069
  %3093 = vmatprep.subr.bf16.mxu0 0
  %3094 = vmatpush1.bf16.msra.mxu0 %v3070
  %3095 = vmatprep.subr.bf16.mxu0 0
  %3096 = vmatpush1.bf16.msra.mxu0 0
  %3097 = vmatprep.subr.bf16.mxu0 0
  %3098 = vmatpush1.bf16.msra.mxu0 0
  %3099 = vmatprep.subr.bf16.mxu0 0
  %3100 = vmatpush1.bf16.msra.mxu0 0
  %3101 = vmatprep.subr.bf16.mxu0 0
  %3102 = vmatpush1.bf16.msra.mxu0 0
  %3103 = vmatprep.subr.bf16.mxu0 0
  %3104 = vmatpush1.bf16.msra.mxu0 0
  %3105 = vmatprep.subr.bf16.mxu0 0
  %3106 = vmatpush1.bf16.msra.mxu0 0
  %3107 = vmatprep.subr.bf16.mxu0 0
  %3108 = vmatpush1.bf16.msra.mxu0 0
  %3109 = vmatprep.subr.bf16.mxu0 0
  %3110 = vmatpush1.bf16.msra.mxu0 0
  %3111 = vmatprep.mubr.bf16.mxu0 0
  %3112 = vmatmul.mubr.bf16.gmra.mrb[0].mxu0 %v3005
  %v3113 = vpop.f32.mrb[0].mxu0
  %v3114 = vadd.f32 %v3029, %v3113
  %v3115 = vpop.f32.mrb[0].mxu0
  %v3116 = vpop.f32.mrb[0].mxu0
  %v3117 = vadd.f32 %v3029, %v3116
  %v3118 = vpop.f32.mrb[0].mxu0
  %3119 = vdwg.mxu0
  %v3120 = vadd.f32 %v2877, %v3114
  %v3121 = vadd.f32 %v2878, %v3117
  %v3122 = vld [vmem:[%s14] sm:$0x1]
  %v3123 = vld [vmem:[%s15] sm:$0x1]
  %v3124 = vsel %vm243, %v3120, 0.0
  %3125 = vadd.xlane.f32.xlu0 %v3124
  %v3126 = vpop.xlane.xlu0 %3125
  %v3127 = vsel %vm243, %v3121, 0.0
  %3128 = vadd.xlane.f32.xlu0 %v3127
  %v3129 = vpop.xlane.xlu0 %3128
  %v3130 = vmul.f32 %v3126, %v250
  %v3131 = vmul.f32 %v3129, %v250
  %v3132 = vsub.f32 %v3120, %v3130
  %v3133 = vsub.f32 %v3121, %v3131
  %v3134 = vmul.f32 %v3132, %v3132
  %v3135 = vmul.f32 %v3133, %v3133
  %v3136 = vsel %vm243, %v3134, 0.0
  %3137 = vadd.xlane.f32.xlu0 %v3136
  %v3138 = vpop.xlane.xlu0 %3137
  %v3139 = vsel %vm243, %v3135, 0.0
  %3140 = vadd.xlane.f32.xlu0 %v3139
  %v3141 = vpop.xlane.xlu0 %3140
  %v3142 = vmul.f32 %v3138, %v250
  %v3143 = vmul.f32 %v3141, %v250
  %v3144 = vadd.f32 %v3142, 1e-05
  %v3145 = vadd.f32 %v3143, 1e-05
  %v3146 = vrsqrt.pop %v3144
  %v3147 = vrsqrt.pop %v3145
  %v3148 = vmul.f32 %v3132, %v3146
  %v3149 = vmul.f32 %v3133, %v3147
  %v3151 = vlaneseq
  %v3152 = vshrl.u32 %v3151, 7
  %v3153 = vsub.s32 0, %v3152
  %v3154 = vrot.slane %v3122, %v3153
  %v3156 = vmul.f32 %v3148, %v3154
  %v3157 = vmul.f32 %v3149, %v3154
  %v3159 = vlaneseq
  %v3160 = vshrl.u32 %v3159, 7
  %v3161 = vsub.s32 0, %v3160
  %v3162 = vrot.slane %v3123, %v3161
  %v3164 = vadd.f32 %v3156, %v3162
  %v3165 = vadd.f32 %v3157, %v3162
  %3166 = vst.msk [vmem:[%s16] sm:$0xff] %vm243, %v3164
  %3167 = vst.msk [vmem:[%s16 + $0x8] sm:$0xff] %vm243, %v3165
  // Predicated region
  $region66: #{transreid_forward.1} parent=0 // pred_check
    _
  $region67: #{transreid_forward.1} parent=0 // pred_check_branch
    %3169 = sbr.rel (0) target = $region69
  $region68: #{transreid_forward.1} parent=0 // pred_region
    _
  $region69: #{transreid_forward.1} parent=0 // pred_fallthru
    _
  // Predicated region
  $region70: #{transreid_forward.1} parent=0 // pred_check
    _
  $region71: #{transreid_forward.1} parent=0 // pred_check_branch
    %3171 = sbr.rel (0) target = $region73
  $region72: #{transreid_forward.1} parent=0 // pred_region
    _
  $region73: #{transreid_forward.1} parent=0 // pred_fallthru
    _

</llo_original>
